<compile_context>
chip_gen: v6e
topology: v6e:2x2x1
jax: 0.10.0
libtpu: 0.0.40
codegen_flags: <defaults>
</compile_context>

<pallas_src>
import functools

import jax
import jax.numpy as jnp
from jax import lax
from jax.experimental import pallas as pl
from jax.experimental.pallas import tpu as pltpu

F32 = jnp.float32
BF16 = jnp.bfloat16
LN_EPS = 1e-5          # torch.nn.LayerNorm default
OUT_PAD = 128          # lane-dense logit slab width (sliced back to 1)
NEG_BIG = -1e30        # additive softmax mask for off-block scores


# ----------------------------- in-kernel math -------------------------------
def _gelu(x):
    # tanh-form GELU: the tanh executes on the EUP slot, which is idle while
    # the VALU is the binding unit (deviation from exact erf-GELU ~3e-4).
    c = 0.7978845608028654      # sqrt(2/pi)
    return 0.5 * x * (1.0 + jnp.tanh(c * (x + 0.044715 * x * x * x)))


def _layernorm(h, gamma, beta):
    # single pass: var = E[x^2] - E[x]^2 (one lane reduction pair, no (h-mu)^2
    # full-tensor subtract); clamp guards the tiny cancellation error.
    mu = jnp.mean(h, axis=-1, keepdims=True)
    ms = jnp.mean(h * h, axis=-1, keepdims=True)
    var = jnp.maximum(ms - mu * mu, 0.0)
    return (h - mu) * lax.rsqrt(var + LN_EPS) * gamma + beta


# ------------------------------ fused kernel ---------------------------------
def _fused_kernel(s_ref, p_ref, x_ref, poolw_ref, abias_ref,
                  watt_ref, batt_ref,
                  w1_ref, b1_ref, g1_ref, be1_ref, w2_ref, b2_ref,
                  hwp_ref, hwq_ref, hws_ref, hb1_ref, hg_ref, hbe_ref,
                  hw2_ref, hb2_ref,
                  out_ref):
    s = s_ref[...]                                    # (tb, sent_dim)  f32
    p = p_ref[...]                                    # (tb*nc, dgpt)   bf16

    # ---- Path_Encoder: alpha = softmax_ctx(<s, tanh(p@W+b)>); agg = alpha @ p
    att = jnp.tanh(jnp.dot(p, watt_ref[...], preferred_element_type=F32)
                   + batt_ref[...])                   # (tb*nc, sent_dim) f32
    # scores[b, r] = <s[b], att[r]>  (contract lane dims on the MXU).
    # TODO(synk): if the MLIR shows a vxpose of `att` here, feed p pre-
    # transposed and build att already transposed instead.
    scores = lax.dot_general(s, att, (((1,), (1,)), ((), ())),
                             preferred_element_type=F32)      # (tb, tb*nc)
    scores = scores + abias_ref[...]      # resident 0 / -1e30 block-diag bias
    m = jnp.max(scores, axis=-1, keepdims=True)                # lane reduction
    e = jnp.exp(scores - m)               # off-block lanes underflow to 0.0
    alpha = e / jnp.sum(e, axis=-1, keepdims=True)
    agg = jnp.dot(alpha.astype(BF16), p, preferred_element_type=F32)  # (tb,dgpt)

    # ---- RelationNet: Linear -> LN -> GELU -> Linear -> GELU -> masked mean
    x = x_ref[...]                                    # (tb*sl, enc_in) bf16
    h = jnp.dot(x, w1_ref[...], preferred_element_type=F32) + b1_ref[...]
    h = _gelu(_layernorm(h, g1_ref[...], be1_ref[...]))
    q = _gelu(jnp.dot(h.astype(BF16), w2_ref[...],
                      preferred_element_type=F32) + b2_ref[...])
    # mean pool: the (tb, tb*sl) weight matrix (valid-mask / count folded in)
    # comes precomputed from the wrapper -> one small MXU matmul, no VALU pass.
    pooled = jnp.dot(poolw_ref[...], q, preferred_element_type=F32)   # (tb, hid)

    # ---- hid2out: Linear -> LN -> GELU -> Linear(., 1)
    # concat([agg, pooled, s], -1) @ W1 done as 3 matmuls on the split weight.
    h2 = (jnp.dot(agg.astype(BF16), hwp_ref[...], preferred_element_type=F32)
          + jnp.dot(pooled.astype(BF16), hwq_ref[...], preferred_element_type=F32)
          + jnp.dot(s.astype(BF16), hws_ref[...], preferred_element_type=F32)
          + hb1_ref[...])
    h2 = _gelu(_layernorm(h2, hg_ref[...], hbe_ref[...]))
    # Linear(fc, 1) as elementwise mul + lane reduction (no 1-wide MXU pass).
    logit = jnp.sum(h2 * hw2_ref[...], axis=-1, keepdims=True) + hb2_ref[...]
    # Lane-dense store: unmasked vst over the 128-wide slab; wrapper slices.
    out_ref[...] = jnp.broadcast_to(logit, out_ref.shape)


# ----------------------------- pallas wrapper --------------------------------
def _pick_batch_tile(bs, sl, *, target_rows=512):
    """Pick the batch tile tb (a divisor of bs).

    Preference order:
      1. sublane-aligned blocks (tb % 8 == 0) or full batch,
      2. >=2 grid steps so v7x's two TensorCores both get work,
      3. ~target_rows MLP rows (tb*sl) per step (v6e/v5e roofline sweet spot);
         this also caps the tb**2-sized scores/pool intermediates,
      4. then the largest tile (or smallest if all are over target).
    """
    divs = [d for d in range(1, bs + 1) if bs % d == 0]

    def score(d):
        rows = d * sl
        fits = rows <= target_rows
        return (d % 8 == 0 or d == bs, bs // d >= 2, fits,
                rows if fits else -rows)

    return max(divs, key=score)


def fused_relation_net(sent_vecs, p_flat, x_flat, valid, count, params, *,
                       nc, sl, single_buffer_weights=True):
    bs, sent_dim = sent_vecs.shape
    dgpt = p_flat.shape[1]
    enc_in = x_flat.shape[1]
    hid2 = params["mlp_w1"].shape[1]
    hid = params["mlp_w2"].shape[1]
    fc = params["h2o_w1"].shape[1]

    tb = _pick_batch_tile(bs, sl)
    grid = (bs // tb,)

    # Big streamed operands + big weights in bf16 (half the HBM/VMEM bytes,
    # 2x MXU rate on v6e/v7x); biases/LN params/sent_vecs stay f32.
    # TODO(synk): at production dims also zero-pad the weight N dims
    # (2*hidden, hidden, fc, sent_dim) to multiples of 128 lanes.
    p_bf = p_flat.astype(BF16)
    x_bf = x_flat.astype(BF16)
    w_att = params["w_att"].astype(BF16)
    mlp_w1 = params["mlp_w1"].astype(BF16)
    mlp_w2 = params["mlp_w2"].astype(BF16)
    # Split hid2out's first Linear so the kernel never concatenates along lanes.
    wp, wq, ws = jnp.split(params["h2o_w1"], [dgpt, dgpt + hid], axis=0)
    wp, wq, ws = wp.astype(BF16), wq.astype(BF16), ws.astype(BF16)
    w2row = params["h2o_w2"].reshape(1, fc)

    # Static block-diagonal softmax bias (0 / -1e30), identical for every tile
    # -> resident input; built once here, not rebuilt with iotas per grid step.
    row = jnp.arange(tb, dtype=jnp.int32)[:, None]
    col = jnp.arange(tb * nc, dtype=jnp.int32)[None, :]
    abias = jnp.where(col // nc == row, 0.0, NEG_BIG).astype(F32)   # (tb, tb*nc)

    # Pooling matrix with valid-mask / (1/count) folded in:
    #   poolw[b, (b % tb)*sl + j] = valid[b, j] / count[b]
    w = (valid / count).reshape(bs // tb, tb, 1, sl).astype(F32)
    eye = jnp.eye(tb, dtype=F32).reshape(1, tb, tb, 1)
    poolw = (w * eye).reshape(bs, tb * sl)                          # (bs, tb*sl)

    _const = lambda i: (0, 0)

    def wspec(shape):
        # Resident operands: constant block index; single-buffered so they are
        # not double-buffered (halves weight VMEM at production dims, critical
        # on v7x's 64 MiB VMEM).
        if single_buffer_weights:
            return pl.BlockSpec(shape, _const, pipeline_mode=pl.Buffered(1))
        return pl.BlockSpec(shape, _const)

    out = pl.pallas_call(
        _fused_kernel,
        out_shape=jax.ShapeDtypeStruct((bs, OUT_PAD), F32),
        grid=grid,
        in_specs=[
            pl.BlockSpec((tb, sent_dim), lambda i: (i, 0)),        # sent_vecs
            pl.BlockSpec((tb * nc, dgpt), lambda i: (i, 0)),       # path ctx (bf16)
            pl.BlockSpec((tb * sl, enc_in), lambda i: (i, 0)),     # concat feats (bf16)
            pl.BlockSpec((tb, tb * sl), lambda i: (i, 0)),         # pool weights
            wspec((tb, tb * nc)),                                  # softmax bias
            wspec((dgpt, sent_dim)), wspec((1, sent_dim)),         # path attn
            wspec((enc_in, hid2)), wspec((1, hid2)), wspec((1, hid2)),
            wspec((1, hid2)),                                      # mlp lin1+LN
            wspec((hid2, hid)), wspec((1, hid)),                   # mlp lin2
            wspec((dgpt, fc)), wspec((hid, fc)), wspec((sent_dim, fc)),
            wspec((1, fc)), wspec((1, fc)), wspec((1, fc)),        # h2o lin1+LN
            wspec((1, fc)), wspec((1, 1)),                         # h2o lin2
        ],
        out_specs=pl.BlockSpec((tb, OUT_PAD), lambda i: (i, 0)),
        compiler_params=pltpu.CompilerParams(
            dimension_semantics=("parallel",),
            # 48 MiB: above the 16/32 MiB scoped defaults (v5e / v6e,v7x) yet
            # below v7x's 64 MiB physical VMEM.
            vmem_limit_bytes=48 * 1024 * 1024),
    )(sent_vecs, p_bf, x_bf, poolw, abias,
      w_att, params["b_att"],
      mlp_w1, params["mlp_b1"], params["mlp_g1"], params["mlp_be1"],
      mlp_w2, params["mlp_b2"],
      wp, wq, ws, params["h2o_b1"], params["h2o_g"], params["h2o_be"],
      w2row, params["h2o_b2"])
    return out[:, :1]


# ----------------------------- parameter setup --------------------------------
def init_params(key, *, sent_dim, dgpt, concept_num, concept_dim,
                relation_num, relation_dim, hidden, fc):
    ks = jax.random.split(key, 8)
    std = 0.02
    enc_in = 2 * concept_dim + relation_dim          # concat(qa_emb, rel_embed)
    h2o_in = dgpt + hidden + sent_dim                # path_emb + pooled + sent
    return dict(
        # Path_Encoder.attention = Linear(dgpt, sent_dim) [stored (in, out)] + Tanh
        w_att=std * jax.random.normal(ks[0], (dgpt, sent_dim), F32),
        b_att=jnp.zeros((1, sent_dim), F32),
        concept_emb=std * jax.random.normal(ks[1], (concept_num, concept_dim), F32),
        rel_emb=std * jax.random.normal(ks[2], (relation_num, relation_dim), F32),
        # RelationNet.mlp = MLP(enc_in, 2*hidden, hidden, 1 layer, layer_norm)
        mlp_w1=std * jax.random.normal(ks[3], (enc_in, 2 * hidden), F32),
        mlp_b1=jnp.zeros((1, 2 * hidden), F32),
        mlp_g1=jnp.ones((1, 2 * hidden), F32),
        mlp_be1=jnp.zeros((1, 2 * hidden), F32),
        mlp_w2=std * jax.random.normal(ks[4], (2 * hidden, hidden), F32),
        mlp_b2=jnp.zeros((1, hidden), F32),
        # RelationNet.hid2out = MLP(h2o_in, fc, 1, 1 layer, layer_norm)
        h2o_w1=std * jax.random.normal(ks[5], (h2o_in, fc), F32),
        h2o_b1=jnp.zeros((1, fc), F32),
        h2o_g=jnp.ones((1, fc), F32),
        h2o_be=jnp.zeros((1, fc), F32),
        h2o_w2=std * jax.random.normal(ks[6], (fc, 1), F32),
        h2o_b2=jnp.zeros((1, 1), F32),
    )


# ------------------------------ full forward ----------------------------------
def lm_relation_net_forward(params, path_emb, sent_vecs, qa_ids, rel_ids,
                            num_tuples, n_1hop_rel, single_buffer_weights=True):
    # ---- Path_Encoder input: path_emb (b0, b1, nc, dgpt) -> flat (bs*nc, dgpt)
    b0, b1, nc, dgpt = path_emb.shape
    bs = b0 * b1
    p_flat = path_emb.reshape(bs * nc, dgpt)

    # ---- RelationNet masks (default path: no ablation, eval mode) ----
    _, sl, _ = qa_ids.shape
    mask = jnp.arange(sl, dtype=jnp.int32)[None, :] >= num_tuples[:, None]
    all_masked = jnp.all(mask, axis=1)
    mask = mask.at[:, 0].set(jnp.where(all_masked, False, mask[:, 0]))
    valid = (~mask).astype(F32)                                  # (bs, sl)
    count = jnp.sum(valid, axis=1, keepdims=True)                # (bs, 1)

    # Embedding lookups (data-dependent gathers) kept as JAX glue.
    # TODO(synk): move gathers + concat into the kernel via scalar-prefetch DMA
    # gather to avoid materializing (bs, sl, enc_in) in HBM at production scale.
    qa_emb = params["concept_emb"][qa_ids.reshape(bs, sl * 2)].reshape(bs, sl, -1)
    rel_flat = rel_ids.reshape(bs * sl)
    rel_base = params["rel_emb"][rel_flat]
    twohop = rel_flat >= n_1hop_rel                              # 2-hop factor mul
    twohop_rel = jnp.where(twohop, rel_flat - n_1hop_rel, 0)
    r1, r2 = twohop_rel // n_1hop_rel, twohop_rel % n_1hop_rel
    rel_two = params["rel_emb"][r1] * params["rel_emb"][r2]
    rel_embed = jnp.where(twohop[:, None], rel_two, rel_base).reshape(bs, sl, -1)
    x_flat = jnp.concatenate([qa_emb, rel_embed], axis=-1).reshape(bs * sl, -1)

    logits = fused_relation_net(sent_vecs, p_flat, x_flat, valid, count, params,
                                nc=nc, sl=sl,
                                single_buffer_weights=single_buffer_weights)
    # matches `return (logits, att_scores, None)` with att_scores=None
    return logits, None, None


# ------------------------- pure-JAX reference (check) --------------------------
def _reference_forward(params, path_emb, sent_vecs, qa_ids, rel_ids,
                       num_tuples, n_1hop_rel):
    b0, b1, nc, dgpt = path_emb.shape
    bs = b0 * b1
    p = path_emb.reshape(bs, nc, dgpt)
    att = jnp.tanh(p @ params["w_att"] + params["b_att"])
    alpha = jnp.sum(att * sent_vecs[:, None, :], axis=-1, keepdims=True)
    alpha = jax.nn.softmax(alpha, axis=-2)
    agg = jnp.sum(alpha * p, axis=-2)

    _, sl, _ = qa_ids.shape
    mask = jnp.arange(sl, dtype=jnp.int32)[None, :] >= num_tuples[:, None]
    all_masked = jnp.all(mask, axis=1)
    mask = mask.at[:, 0].set(jnp.where(all_masked, False, mask[:, 0]))
    qa_emb = params["concept_emb"][qa_ids.reshape(bs, sl * 2)].reshape(bs, sl, -1)
    rel_flat = rel_ids.reshape(bs * sl)
    rel_base = params["rel_emb"][rel_flat]
    twohop = rel_flat >= n_1hop_rel
    twohop_rel = jnp.where(twohop, rel_flat - n_1hop_rel, 0)
    r1, r2 = twohop_rel // n_1hop_rel, twohop_rel % n_1hop_rel
    rel_two = params["rel_emb"][r1] * params["rel_emb"][r2]
    rel_embed = jnp.where(twohop[:, None], rel_two, rel_base).reshape(bs, sl, -1)
    concat = jnp.concatenate([qa_emb, rel_embed], axis=-1)
    h = concat @ params["mlp_w1"] + params["mlp_b1"]
    h = jax.nn.gelu(_layernorm(h, params["mlp_g1"], params["mlp_be1"]),
                    approximate=False)
    q = jax.nn.gelu(h @ params["mlp_w2"] + params["mlp_b2"], approximate=False)
    valid = (~mask).astype(F32)
    pooled = jnp.sum(q * valid[:, :, None], axis=1) / jnp.sum(
        valid, axis=1, keepdims=True)
    x = jnp.concatenate([agg, pooled, sent_vecs], axis=1)
    h2 = x @ params["h2o_w1"] + params["h2o_b1"]
    h2 = jax.nn.gelu(_layernorm(h2, params["h2o_g"], params["h2o_be"]),
                     approximate=False)
    return h2 @ params["h2o_w2"] + params["h2o_b2"]


# ---------------------------------- main ---------------------------------------
if __name__ == "__main__":
    B0, B1 = 2, 8            # batch['path_emb'] leading dims; bs = B0*B1 = 16
    BS = B0 * B1
    NC = 4                   # number of path contexts
    DGPT = 32                # path embedding dim (input_dim_gpt)
    SENT_DIM = 32            # sent_dim (input_dim_bert)
    SL = 8                   # max_tuple_num
    CONCEPT_NUM, CONCEPT_DIM = 20, 16
    N_1HOP = 5
    RELATION_NUM = N_1HOP * (N_1HOP + 1)   # 30, satisfies n*(n+1) == relation_num
    RELATION_DIM = 16
    HIDDEN = 32              # graph_mlp_dim
    FC = 32                  # graph_fc_dim

    root = jax.random.PRNGKey(0)
    kp, k1, k2, k3, k4, k5 = jax.random.split(root, 6)

    params = init_params(kp, sent_dim=SENT_DIM, dgpt=DGPT,
                         concept_num=CONCEPT_NUM, concept_dim=CONCEPT_DIM,
                         relation_num=RELATION_NUM, relation_dim=RELATION_DIM,
                         hidden=HIDDEN, fc=FC)

    path_emb = jax.random.normal(k1, (B0, B1, NC, DGPT), F32)
    sent_vecs = jax.random.normal(k2, (BS, SENT_DIM), F32)
    qa_ids = jax.random.randint(k3, (BS, SL, 2), 0, CONCEPT_NUM, dtype=jnp.int32)
    rel_ids = jax.random.randint(k4, (BS, SL), 0, RELATION_NUM, dtype=jnp.int32)
    num_tuples = jax.random.randint(k5, (BS,), 1, SL + 1, dtype=jnp.int32)

    def _run(single_buffer_weights):
        fwd = jax.jit(functools.partial(
            lm_relation_net_forward, n_1hop_rel=N_1HOP,
            single_buffer_weights=single_buffer_weights))
        out = fwd(params, path_emb, sent_vecs, qa_ids, rel_ids, num_tuples)
        jax.block_until_ready(out[0])
        return out

    try:
        logits, att_scores, sal_units = _run(True)
    except Exception:
        # pl.Buffered(1) single-buffering unavailable on this jax build:
        # fall back to the default double-buffered resident weights.
        logits, att_scores, sal_units = _run(False)

    assert logits.shape == (BS, 1) and logits.dtype == F32
    assert att_scores is None and sal_units is None

    ref = _reference_forward(params, path_emb, sent_vecs, qa_ids, rel_ids,
                             num_tuples, N_1HOP)
    # bf16 MXU operands + tanh-GELU vs. the exact-GELU f32 reference introduce
    # ~1e-3-scale deviations at these activation scales; 1e-2 keeps a wide
    # margin while still catching any structural bug.
    assert jnp.allclose(logits, ref, rtol=1e-2, atol=1e-2), float(
        jnp.max(jnp.abs(logits - ref)))
    print("KERNEL_OK")
</pallas_src>

<mosaic_0001>
module attributes {stable_mosaic.version = 11 : i64} {
  func.func @_fused_kernel(%arg0: i32, %arg1: memref<8x32xf32, #tpu.memory_space<vmem>>, %arg2: memref<32x32xbf16, #tpu.memory_space<vmem>>, %arg3: memref<64x48xbf16, #tpu.memory_space<vmem>>, %arg4: memref<8x64xf32, #tpu.memory_space<vmem>>, %arg5: memref<8x32xf32, #tpu.memory_space<vmem>>, %arg6: memref<32x32xbf16, #tpu.memory_space<vmem>>, %arg7: memref<1x32xf32, #tpu.memory_space<vmem>>, %arg8: memref<48x64xbf16, #tpu.memory_space<vmem>>, %arg9: memref<1x64xf32, #tpu.memory_space<vmem>>, %arg10: memref<1x64xf32, #tpu.memory_space<vmem>>, %arg11: memref<1x64xf32, #tpu.memory_space<vmem>>, %arg12: memref<64x32xbf16, #tpu.memory_space<vmem>>, %arg13: memref<1x32xf32, #tpu.memory_space<vmem>>, %arg14: memref<32x32xbf16, #tpu.memory_space<vmem>>, %arg15: memref<32x32xbf16, #tpu.memory_space<vmem>>, %arg16: memref<32x32xbf16, #tpu.memory_space<vmem>>, %arg17: memref<1x32xf32, #tpu.memory_space<vmem>>, %arg18: memref<1x32xf32, #tpu.memory_space<vmem>>, %arg19: memref<1x32xf32, #tpu.memory_space<vmem>>, %arg20: memref<1x32xf32, #tpu.memory_space<vmem>>, %arg21: memref<1x1xf32, #tpu.memory_space<vmem>>, %arg22: memref<8x128xf32, #tpu.memory_space<vmem>>) attributes {dimension_semantics = [#tpu.dimension_semantics<parallel>], iteration_bounds = array<i64: 2>, scalar_prefetch = 0 : i64, scratch_operands = 0 : i64, tpu.core_type = #tpu.core_type<tc>, window_params = [{transform_indices = @transform_0, window_bounds = array<i64: 8, 32>}, {transform_indices = @transform_1, window_bounds = array<i64: 32, 32>}, {transform_indices = @transform_2, window_bounds = array<i64: 64, 48>}, {transform_indices = @transform_3, window_bounds = array<i64: 8, 64>}, {pipeline_mode = #tpu.pipeline_mode<synchronous>, transform_indices = @transform_4, window_bounds = array<i64: 8, 32>}, {pipeline_mode = #tpu.pipeline_mode<synchronous>, transform_indices = @transform_5, window_bounds = array<i64: 32, 32>}, {pipeline_mode = #tpu.pipeline_mode<synchronous>, transform_indices = @transform_6, window_bounds = array<i64: 1, 32>}, {pipeline_mode = #tpu.pipeline_mode<synchronous>, transform_indices = @transform_7, window_bounds = array<i64: 48, 64>}, {pipeline_mode = #tpu.pipeline_mode<synchronous>, transform_indices = @transform_8, window_bounds = array<i64: 1, 64>}, {pipeline_mode = #tpu.pipeline_mode<synchronous>, transform_indices = @transform_9, window_bounds = array<i64: 1, 64>}, {pipeline_mode = #tpu.pipeline_mode<synchronous>, transform_indices = @transform_10, window_bounds = array<i64: 1, 64>}, {pipeline_mode = #tpu.pipeline_mode<synchronous>, transform_indices = @transform_11, window_bounds = array<i64: 64, 32>}, {pipeline_mode = #tpu.pipeline_mode<synchronous>, transform_indices = @transform_12, window_bounds = array<i64: 1, 32>}, {pipeline_mode = #tpu.pipeline_mode<synchronous>, transform_indices = @transform_13, window_bounds = array<i64: 32, 32>}, {pipeline_mode = #tpu.pipeline_mode<synchronous>, transform_indices = @transform_14, window_bounds = array<i64: 32, 32>}, {pipeline_mode = #tpu.pipeline_mode<synchronous>, transform_indices = @transform_15, window_bounds = array<i64: 32, 32>}, {pipeline_mode = #tpu.pipeline_mode<synchronous>, transform_indices = @transform_16, window_bounds = array<i64: 1, 32>}, {pipeline_mode = #tpu.pipeline_mode<synchronous>, transform_indices = @transform_17, window_bounds = array<i64: 1, 32>}, {pipeline_mode = #tpu.pipeline_mode<synchronous>, transform_indices = @transform_18, window_bounds = array<i64: 1, 32>}, {pipeline_mode = #tpu.pipeline_mode<synchronous>, transform_indices = @transform_19, window_bounds = array<i64: 1, 32>}, {pipeline_mode = #tpu.pipeline_mode<synchronous>, transform_indices = @transform_20, window_bounds = array<i64: 1, 1>}, {transform_indices = @transform_21, window_bounds = array<i64: 8, 128>}]} {
    %c0 = arith.constant 0 : index
    %c0_0 = arith.constant 0 : index
    %0 = vector.load %arg1[%c0, %c0_0] : memref<8x32xf32, #tpu.memory_space<vmem>>, vector<8x32xf32>
    %c0_1 = arith.constant 0 : index
    %c0_2 = arith.constant 0 : index
    %1 = vector.load %arg2[%c0_1, %c0_2] : memref<32x32xbf16, #tpu.memory_space<vmem>>, vector<32x32xbf16>
    %c0_3 = arith.constant 0 : index
    %c0_4 = arith.constant 0 : index
    %2 = vector.load %arg6[%c0_3, %c0_4] : memref<32x32xbf16, #tpu.memory_space<vmem>>, vector<32x32xbf16>
    %cst = arith.constant dense<0.000000e+00> : vector<32x32xf32>
    %3 = tpu.matmul %1, %2, %cst {dimension_numbers = #tpu.dot_dimension_numbers<[1], [0], [0], [1], [0, 0, 1, 1], [], []>} : vector<32x32xbf16>, vector<32x32xbf16>, vector<32x32xf32> -> vector<32x32xf32>
    %c0_5 = arith.constant 0 : index
    %c0_6 = arith.constant 0 : index
    %4 = vector.load %arg7[%c0_5, %c0_6] : memref<1x32xf32, #tpu.memory_space<vmem>>, vector<1x32xf32>
    %5 = vector.broadcast %4 : vector<1x32xf32> to vector<32x32xf32>
    %6 = arith.addf %3, %5 : vector<32x32xf32>
    %7 = math.tanh %6 : vector<32x32xf32>
    %cst_7 = arith.constant dense<0.000000e+00> : vector<8x32xf32>
    %8 = tpu.matmul %0, %7, %cst_7 {dimension_numbers = #tpu.dot_dimension_numbers<[1], [1], [0], [0], [0, 0, 1, 0], [], []>} : vector<8x32xf32>, vector<32x32xf32>, vector<8x32xf32> -> vector<8x32xf32>
    %c0_8 = arith.constant 0 : index
    %c0_9 = arith.constant 0 : index
    %9 = vector.load %arg5[%c0_8, %c0_9] : memref<8x32xf32, #tpu.memory_space<vmem>>, vector<8x32xf32>
    %10 = arith.addf %8, %9 : vector<8x32xf32>
    %cst_10 = arith.constant dense<0xFF800000> : vector<8xf32>
    %11 = vector.multi_reduction <maximumf>, %10, %cst_10 [1] : vector<8x32xf32> to vector<8xf32>
    %12 = vector.shape_cast %11 : vector<8xf32> to vector<8x1xf32>
    %13 = vector.broadcast %12 : vector<8x1xf32> to vector<8x32xf32>
    %14 = arith.subf %10, %13 : vector<8x32xf32>
    %15 = math.exp %14 : vector<8x32xf32>
    %cst_11 = arith.constant dense<0.000000e+00> : vector<8xf32>
    %16 = vector.multi_reduction <add>, %15, %cst_11 [1] : vector<8x32xf32> to vector<8xf32>
    %17 = vector.shape_cast %16 : vector<8xf32> to vector<8x1xf32>
    %18 = vector.broadcast %17 : vector<8x1xf32> to vector<8x32xf32>
    %19 = arith.divf %15, %18 : vector<8x32xf32>
    %20 = arith.truncf %19 : vector<8x32xf32> to vector<8x32xbf16>
    %cst_12 = arith.constant dense<0.000000e+00> : vector<8x32xf32>
    %21 = tpu.matmul %20, %1, %cst_12 {dimension_numbers = #tpu.dot_dimension_numbers<[1], [0], [0], [1], [0, 0, 1, 1], [], []>} : vector<8x32xbf16>, vector<32x32xbf16>, vector<8x32xf32> -> vector<8x32xf32>
    %c0_13 = arith.constant 0 : index
    %c0_14 = arith.constant 0 : index
    %22 = vector.load %arg3[%c0_13, %c0_14] : memref<64x48xbf16, #tpu.memory_space<vmem>>, vector<64x48xbf16>
    %c0_15 = arith.constant 0 : index
    %c0_16 = arith.constant 0 : index
    %23 = vector.load %arg8[%c0_15, %c0_16] : memref<48x64xbf16, #tpu.memory_space<vmem>>, vector<48x64xbf16>
    %cst_17 = arith.constant dense<0.000000e+00> : vector<64x64xf32>
    %24 = tpu.matmul %22, %23, %cst_17 {dimension_numbers = #tpu.dot_dimension_numbers<[1], [0], [0], [1], [0, 0, 1, 1], [], []>} : vector<64x48xbf16>, vector<48x64xbf16>, vector<64x64xf32> -> vector<64x64xf32>
    %c0_18 = arith.constant 0 : index
    %c0_19 = arith.constant 0 : index
    %25 = vector.load %arg9[%c0_18, %c0_19] : memref<1x64xf32, #tpu.memory_space<vmem>>, vector<1x64xf32>
    %26 = vector.broadcast %25 : vector<1x64xf32> to vector<64x64xf32>
    %27 = arith.addf %24, %26 : vector<64x64xf32>
    %c0_20 = arith.constant 0 : index
    %c0_21 = arith.constant 0 : index
    %28 = vector.load %arg10[%c0_20, %c0_21] : memref<1x64xf32, #tpu.memory_space<vmem>>, vector<1x64xf32>
    %c0_22 = arith.constant 0 : index
    %c0_23 = arith.constant 0 : index
    %29 = vector.load %arg11[%c0_22, %c0_23] : memref<1x64xf32, #tpu.memory_space<vmem>>, vector<1x64xf32>
    %cst_24 = arith.constant dense<0.000000e+00> : vector<64xf32>
    %30 = vector.multi_reduction <add>, %27, %cst_24 [1] : vector<64x64xf32> to vector<64xf32>
    %31 = vector.shape_cast %30 : vector<64xf32> to vector<64x1xf32>
    %cst_25 = arith.constant 6.400000e+01 : f32
    %32 = vector.broadcast %cst_25 : f32 to vector<64x1xf32>
    %33 = arith.divf %31, %32 : vector<64x1xf32>
    %34 = arith.mulf %27, %27 : vector<64x64xf32>
    %cst_26 = arith.constant dense<0.000000e+00> : vector<64xf32>
    %35 = vector.multi_reduction <add>, %34, %cst_26 [1] : vector<64x64xf32> to vector<64xf32>
    %36 = vector.shape_cast %35 : vector<64xf32> to vector<64x1xf32>
    %cst_27 = arith.constant 6.400000e+01 : f32
    %37 = vector.broadcast %cst_27 : f32 to vector<64x1xf32>
    %38 = arith.divf %36, %37 : vector<64x1xf32>
    %39 = arith.mulf %33, %33 : vector<64x1xf32>
    %40 = arith.subf %38, %39 : vector<64x1xf32>
    %cst_28 = arith.constant 0.000000e+00 : f32
    %41 = vector.broadcast %cst_28 : f32 to vector<64x1xf32>
    %42 = arith.maximumf %40, %41 : vector<64x1xf32>
    %43 = vector.broadcast %33 : vector<64x1xf32> to vector<64x64xf32>
    %44 = arith.subf %27, %43 : vector<64x64xf32>
    %cst_29 = arith.constant 9.99999974E-6 : f32
    %45 = vector.broadcast %cst_29 : f32 to vector<64x1xf32>
    %46 = arith.addf %42, %45 : vector<64x1xf32>
    %47 = math.rsqrt %46 : vector<64x1xf32>
    %48 = vector.broadcast %47 : vector<64x1xf32> to vector<64x64xf32>
    %49 = arith.mulf %44, %48 : vector<64x64xf32>
    %50 = vector.broadcast %28 : vector<1x64xf32> to vector<64x64xf32>
    %51 = arith.mulf %49, %50 : vector<64x64xf32>
    %52 = vector.broadcast %29 : vector<1x64xf32> to vector<64x64xf32>
    %53 = arith.addf %51, %52 : vector<64x64xf32>
    %cst_30 = arith.constant 5.000000e-01 : f32
    %54 = vector.broadcast %cst_30 : f32 to vector<64x64xf32>
    %55 = arith.mulf %54, %53 : vector<64x64xf32>
    %cst_31 = arith.constant 4.471500e-02 : f32
    %56 = vector.broadcast %cst_31 : f32 to vector<64x64xf32>
    %57 = arith.mulf %56, %53 : vector<64x64xf32>
    %58 = arith.mulf %57, %53 : vector<64x64xf32>
    %59 = arith.mulf %58, %53 : vector<64x64xf32>
    %60 = arith.addf %53, %59 : vector<64x64xf32>
    %cst_32 = arith.constant 0.797884583 : f32
    %61 = vector.broadcast %cst_32 : f32 to vector<64x64xf32>
    %62 = arith.mulf %61, %60 : vector<64x64xf32>
    %63 = math.tanh %62 : vector<64x64xf32>
    %cst_33 = arith.constant 1.000000e+00 : f32
    %64 = vector.broadcast %cst_33 : f32 to vector<64x64xf32>
    %65 = arith.addf %64, %63 : vector<64x64xf32>
    %66 = arith.mulf %55, %65 : vector<64x64xf32>
    %67 = arith.truncf %66 : vector<64x64xf32> to vector<64x64xbf16>
    %c0_34 = arith.constant 0 : index
    %c0_35 = arith.constant 0 : index
    %68 = vector.load %arg12[%c0_34, %c0_35] : memref<64x32xbf16, #tpu.memory_space<vmem>>, vector<64x32xbf16>
    %cst_36 = arith.constant dense<0.000000e+00> : vector<64x32xf32>
    %69 = tpu.matmul %67, %68, %cst_36 {dimension_numbers = #tpu.dot_dimension_numbers<[1], [0], [0], [1], [0, 0, 1, 1], [], []>} : vector<64x64xbf16>, vector<64x32xbf16>, vector<64x32xf32> -> vector<64x32xf32>
    %c0_37 = arith.constant 0 : index
    %c0_38 = arith.constant 0 : index
    %70 = vector.load %arg13[%c0_37, %c0_38] : memref<1x32xf32, #tpu.memory_space<vmem>>, vector<1x32xf32>
    %71 = vector.broadcast %70 : vector<1x32xf32> to vector<64x32xf32>
    %72 = arith.addf %69, %71 : vector<64x32xf32>
    %cst_39 = arith.constant 5.000000e-01 : f32
    %73 = vector.broadcast %cst_39 : f32 to vector<64x32xf32>
    %74 = arith.mulf %73, %72 : vector<64x32xf32>
    %cst_40 = arith.constant 4.471500e-02 : f32
    %75 = vector.broadcast %cst_40 : f32 to vector<64x32xf32>
    %76 = arith.mulf %75, %72 : vector<64x32xf32>
    %77 = arith.mulf %76, %72 : vector<64x32xf32>
    %78 = arith.mulf %77, %72 : vector<64x32xf32>
    %79 = arith.addf %72, %78 : vector<64x32xf32>
    %cst_41 = arith.constant 0.797884583 : f32
    %80 = vector.broadcast %cst_41 : f32 to vector<64x32xf32>
    %81 = arith.mulf %80, %79 : vector<64x32xf32>
    %82 = math.tanh %81 : vector<64x32xf32>
    %cst_42 = arith.constant 1.000000e+00 : f32
    %83 = vector.broadcast %cst_42 : f32 to vector<64x32xf32>
    %84 = arith.addf %83, %82 : vector<64x32xf32>
    %85 = arith.mulf %74, %84 : vector<64x32xf32>
    %c0_43 = arith.constant 0 : index
    %c0_44 = arith.constant 0 : index
    %86 = vector.load %arg4[%c0_43, %c0_44] : memref<8x64xf32, #tpu.memory_space<vmem>>, vector<8x64xf32>
    %cst_45 = arith.constant dense<0.000000e+00> : vector<8x32xf32>
    %87 = tpu.matmul %86, %85, %cst_45 {dimension_numbers = #tpu.dot_dimension_numbers<[1], [0], [0], [1], [0, 0, 1, 1], [], []>} : vector<8x64xf32>, vector<64x32xf32>, vector<8x32xf32> -> vector<8x32xf32>
    %88 = arith.truncf %21 : vector<8x32xf32> to vector<8x32xbf16>
    %c0_46 = arith.constant 0 : index
    %c0_47 = arith.constant 0 : index
    %89 = vector.load %arg14[%c0_46, %c0_47] : memref<32x32xbf16, #tpu.memory_space<vmem>>, vector<32x32xbf16>
    %cst_48 = arith.constant dense<0.000000e+00> : vector<8x32xf32>
    %90 = tpu.matmul %88, %89, %cst_48 {dimension_numbers = #tpu.dot_dimension_numbers<[1], [0], [0], [1], [0, 0, 1, 1], [], []>} : vector<8x32xbf16>, vector<32x32xbf16>, vector<8x32xf32> -> vector<8x32xf32>
    %91 = arith.truncf %87 : vector<8x32xf32> to vector<8x32xbf16>
    %c0_49 = arith.constant 0 : index
    %c0_50 = arith.constant 0 : index
    %92 = vector.load %arg15[%c0_49, %c0_50] : memref<32x32xbf16, #tpu.memory_space<vmem>>, vector<32x32xbf16>
    %cst_51 = arith.constant dense<0.000000e+00> : vector<8x32xf32>
    %93 = tpu.matmul %91, %92, %cst_51 {dimension_numbers = #tpu.dot_dimension_numbers<[1], [0], [0], [1], [0, 0, 1, 1], [], []>} : vector<8x32xbf16>, vector<32x32xbf16>, vector<8x32xf32> -> vector<8x32xf32>
    %94 = arith.addf %90, %93 : vector<8x32xf32>
    %95 = arith.truncf %0 : vector<8x32xf32> to vector<8x32xbf16>
    %c0_52 = arith.constant 0 : index
    %c0_53 = arith.constant 0 : index
    %96 = vector.load %arg16[%c0_52, %c0_53] : memref<32x32xbf16, #tpu.memory_space<vmem>>, vector<32x32xbf16>
    %cst_54 = arith.constant dense<0.000000e+00> : vector<8x32xf32>
    %97 = tpu.matmul %95, %96, %cst_54 {dimension_numbers = #tpu.dot_dimension_numbers<[1], [0], [0], [1], [0, 0, 1, 1], [], []>} : vector<8x32xbf16>, vector<32x32xbf16>, vector<8x32xf32> -> vector<8x32xf32>
    %98 = arith.addf %94, %97 : vector<8x32xf32>
    %c0_55 = arith.constant 0 : index
    %c0_56 = arith.constant 0 : index
    %99 = vector.load %arg17[%c0_55, %c0_56] : memref<1x32xf32, #tpu.memory_space<vmem>>, vector<1x32xf32>
    %100 = vector.broadcast %99 : vector<1x32xf32> to vector<8x32xf32>
    %101 = arith.addf %98, %100 : vector<8x32xf32>
    %c0_57 = arith.constant 0 : index
    %c0_58 = arith.constant 0 : index
    %102 = vector.load %arg18[%c0_57, %c0_58] : memref<1x32xf32, #tpu.memory_space<vmem>>, vector<1x32xf32>
    %c0_59 = arith.constant 0 : index
    %c0_60 = arith.constant 0 : index
    %103 = vector.load %arg19[%c0_59, %c0_60] : memref<1x32xf32, #tpu.memory_space<vmem>>, vector<1x32xf32>
    %cst_61 = arith.constant dense<0.000000e+00> : vector<8xf32>
    %104 = vector.multi_reduction <add>, %101, %cst_61 [1] : vector<8x32xf32> to vector<8xf32>
    %105 = vector.shape_cast %104 : vector<8xf32> to vector<8x1xf32>
    %cst_62 = arith.constant 3.200000e+01 : f32
    %106 = vector.broadcast %cst_62 : f32 to vector<8x1xf32>
    %107 = arith.divf %105, %106 : vector<8x1xf32>
    %108 = arith.mulf %101, %101 : vector<8x32xf32>
    %cst_63 = arith.constant dense<0.000000e+00> : vector<8xf32>
    %109 = vector.multi_reduction <add>, %108, %cst_63 [1] : vector<8x32xf32> to vector<8xf32>
    %110 = vector.shape_cast %109 : vector<8xf32> to vector<8x1xf32>
    %cst_64 = arith.constant 3.200000e+01 : f32
    %111 = vector.broadcast %cst_64 : f32 to vector<8x1xf32>
    %112 = arith.divf %110, %111 : vector<8x1xf32>
    %113 = arith.mulf %107, %107 : vector<8x1xf32>
    %114 = arith.subf %112, %113 : vector<8x1xf32>
    %cst_65 = arith.constant 0.000000e+00 : f32
    %115 = vector.broadcast %cst_65 : f32 to vector<8x1xf32>
    %116 = arith.maximumf %114, %115 : vector<8x1xf32>
    %117 = vector.broadcast %107 : vector<8x1xf32> to vector<8x32xf32>
    %118 = arith.subf %101, %117 : vector<8x32xf32>
    %cst_66 = arith.constant 9.99999974E-6 : f32
    %119 = vector.broadcast %cst_66 : f32 to vector<8x1xf32>
    %120 = arith.addf %116, %119 : vector<8x1xf32>
    %121 = math.rsqrt %120 : vector<8x1xf32>
    %122 = vector.broadcast %121 : vector<8x1xf32> to vector<8x32xf32>
    %123 = arith.mulf %118, %122 : vector<8x32xf32>
    %124 = vector.broadcast %102 : vector<1x32xf32> to vector<8x32xf32>
    %125 = arith.mulf %123, %124 : vector<8x32xf32>
    %126 = vector.broadcast %103 : vector<1x32xf32> to vector<8x32xf32>
    %127 = arith.addf %125, %126 : vector<8x32xf32>
    %cst_67 = arith.constant 5.000000e-01 : f32
    %128 = vector.broadcast %cst_67 : f32 to vector<8x32xf32>
    %129 = arith.mulf %128, %127 : vector<8x32xf32>
    %cst_68 = arith.constant 4.471500e-02 : f32
    %130 = vector.broadcast %cst_68 : f32 to vector<8x32xf32>
    %131 = arith.mulf %130, %127 : vector<8x32xf32>
    %132 = arith.mulf %131, %127 : vector<8x32xf32>
    %133 = arith.mulf %132, %127 : vector<8x32xf32>
    %134 = arith.addf %127, %133 : vector<8x32xf32>
    %cst_69 = arith.constant 0.797884583 : f32
    %135 = vector.broadcast %cst_69 : f32 to vector<8x32xf32>
    %136 = arith.mulf %135, %134 : vector<8x32xf32>
    %137 = math.tanh %136 : vector<8x32xf32>
    %cst_70 = arith.constant 1.000000e+00 : f32
    %138 = vector.broadcast %cst_70 : f32 to vector<8x32xf32>
    %139 = arith.addf %138, %137 : vector<8x32xf32>
    %140 = arith.mulf %129, %139 : vector<8x32xf32>
    %c0_71 = arith.constant 0 : index
    %c0_72 = arith.constant 0 : index
    %141 = vector.load %arg20[%c0_71, %c0_72] : memref<1x32xf32, #tpu.memory_space<vmem>>, vector<1x32xf32>
    %142 = vector.broadcast %141 : vector<1x32xf32> to vector<8x32xf32>
    %143 = arith.mulf %140, %142 : vector<8x32xf32>
    %cst_73 = arith.constant dense<0.000000e+00> : vector<8xf32>
    %144 = vector.multi_reduction <add>, %143, %cst_73 [1] : vector<8x32xf32> to vector<8xf32>
    %145 = vector.shape_cast %144 : vector<8xf32> to vector<8x1xf32>
    %c0_74 = arith.constant 0 : index
    %c0_75 = arith.constant 0 : index
    %146 = vector.load %arg21[%c0_74, %c0_75] : memref<1x1xf32, #tpu.memory_space<vmem>>, vector<1x1xf32>
    %147 = vector.broadcast %146 : vector<1x1xf32> to vector<8x1xf32>
    %148 = arith.addf %145, %147 : vector<8x1xf32>
    %149 = vector.shape_cast %148 : vector<8x1xf32> to vector<8x1xf32>
    %150 = vector.broadcast %149 : vector<8x1xf32> to vector<8x128xf32>
    %c0_76 = arith.constant 0 : index
    %c0_77 = arith.constant 0 : index
    %151 = vector.load %arg22[%c0_76, %c0_77] : memref<8x128xf32, #tpu.memory_space<vmem>>, vector<8x128xf32>
    tpu.vector_store %arg22[%c0_76, %c0_77], %150 {strides = array<i32>} : memref<8x128xf32, #tpu.memory_space<vmem>>, vector<8x128xf32>,
    return
  }
  func.func @transform_0(%arg0: i32) -> (i32, i32) {
    %c0_i32 = arith.constant 0 : i32
    %c0_i32_0 = arith.constant 0 : i32
    return %arg0, %c0_i32 : i32, i32
  }
  func.func @transform_1(%arg0: i32) -> (i32, i32) {
    %c0_i32 = arith.constant 0 : i32
    %c0_i32_0 = arith.constant 0 : i32
    return %arg0, %c0_i32 : i32, i32
  }
  func.func @transform_2(%arg0: i32) -> (i32, i32) {
    %c0_i32 = arith.constant 0 : i32
    %c0_i32_0 = arith.constant 0 : i32
    return %arg0, %c0_i32 : i32, i32
  }
  func.func @transform_3(%arg0: i32) -> (i32, i32) {
    %c0_i32 = arith.constant 0 : i32
    %c0_i32_0 = arith.constant 0 : i32
    return %arg0, %c0_i32 : i32, i32
  }
  func.func @transform_4(%arg0: i32) -> (i32, i32) {
    %c0_i32 = arith.constant 0 : i32
    %c0_i32_0 = arith.constant 0 : i32
    %c0_i32_1 = arith.constant 0 : i32
    return %c0_i32, %c0_i32_0 : i32, i32
  }
  func.func @transform_5(%arg0: i32) -> (i32, i32) {
    %c0_i32 = arith.constant 0 : i32
    %c0_i32_0 = arith.constant 0 : i32
    %c0_i32_1 = arith.constant 0 : i32
    return %c0_i32, %c0_i32_0 : i32, i32
  }
  func.func @transform_6(%arg0: i32) -> (i32, i32) {
    %c0_i32 = arith.constant 0 : i32
    %c0_i32_0 = arith.constant 0 : i32
    %c0_i32_1 = arith.constant 0 : i32
    return %c0_i32, %c0_i32_0 : i32, i32
  }
  func.func @transform_7(%arg0: i32) -> (i32, i32) {
    %c0_i32 = arith.constant 0 : i32
    %c0_i32_0 = arith.constant 0 : i32
    %c0_i32_1 = arith.constant 0 : i32
    return %c0_i32, %c0_i32_0 : i32, i32
  }
  func.func @transform_8(%arg0: i32) -> (i32, i32) {
    %c0_i32 = arith.constant 0 : i32
    %c0_i32_0 = arith.constant 0 : i32
    %c0_i32_1 = arith.constant 0 : i32
    return %c0_i32, %c0_i32_0 : i32, i32
  }
  func.func @transform_9(%arg0: i32) -> (i32, i32) {
    %c0_i32 = arith.constant 0 : i32
    %c0_i32_0 = arith.constant 0 : i32
    %c0_i32_1 = arith.constant 0 : i32
    return %c0_i32, %c0_i32_0 : i32, i32
  }
  func.func @transform_10(%arg0: i32) -> (i32, i32) {
    %c0_i32 = arith.constant 0 : i32
    %c0_i32_0 = arith.constant 0 : i32
    %c0_i32_1 = arith.constant 0 : i32
    return %c0_i32, %c0_i32_0 : i32, i32
  }
  func.func @transform_11(%arg0: i32) -> (i32, i32) {
    %c0_i32 = arith.constant 0 : i32
    %c0_i32_0 = arith.constant 0 : i32
    %c0_i32_1 = arith.constant 0 : i32
    return %c0_i32, %c0_i32_0 : i32, i32
  }
  func.func @transform_12(%arg0: i32) -> (i32, i32) {
    %c0_i32 = arith.constant 0 : i32
    %c0_i32_0 = arith.constant 0 : i32
    %c0_i32_1 = arith.constant 0 : i32
    return %c0_i32, %c0_i32_0 : i32, i32
  }
  func.func @transform_13(%arg0: i32) -> (i32, i32) {
    %c0_i32 = arith.constant 0 : i32
    %c0_i32_0 = arith.constant 0 : i32
    %c0_i32_1 = arith.constant 0 : i32
    return %c0_i32, %c0_i32_0 : i32, i32
  }
  func.func @transform_14(%arg0: i32) -> (i32, i32) {
    %c0_i32 = arith.constant 0 : i32
    %c0_i32_0 = arith.constant 0 : i32
    %c0_i32_1 = arith.constant 0 : i32
    return %c0_i32, %c0_i32_0 : i32, i32
  }
  func.func @transform_15(%arg0: i32) -> (i32, i32) {
    %c0_i32 = arith.constant 0 : i32
    %c0_i32_0 = arith.constant 0 : i32
    %c0_i32_1 = arith.constant 0 : i32
    return %c0_i32, %c0_i32_0 : i32, i32
  }
  func.func @transform_16(%arg0: i32) -> (i32, i32) {
    %c0_i32 = arith.constant 0 : i32
    %c0_i32_0 = arith.constant 0 : i32
    %c0_i32_1 = arith.constant 0 : i32
    return %c0_i32, %c0_i32_0 : i32, i32
  }
  func.func @transform_17(%arg0: i32) -> (i32, i32) {
    %c0_i32 = arith.constant 0 : i32
    %c0_i32_0 = arith.constant 0 : i32
    %c0_i32_1 = arith.constant 0 : i32
    return %c0_i32, %c0_i32_0 : i32, i32
  }
  func.func @transform_18(%arg0: i32) -> (i32, i32) {
    %c0_i32 = arith.constant 0 : i32
    %c0_i32_0 = arith.constant 0 : i32
    %c0_i32_1 = arith.constant 0 : i32
    return %c0_i32, %c0_i32_0 : i32, i32
  }
  func.func @transform_19(%arg0: i32) -> (i32, i32) {
    %c0_i32 = arith.constant 0 : i32
    %c0_i32_0 = arith.constant 0 : i32
    %c0_i32_1 = arith.constant 0 : i32
    return %c0_i32, %c0_i32_0 : i32, i32
  }
  func.func @transform_20(%arg0: i32) -> (i32, i32) {
    %c0_i32 = arith.constant 0 : i32
    %c0_i32_0 = arith.constant 0 : i32
    %c0_i32_1 = arith.constant 0 : i32
    return %c0_i32, %c0_i32_0 : i32, i32
  }
  func.func @transform_21(%arg0: i32) -> (i32, i32) {
    %c0_i32 = arith.constant 0 : i32
    %c0_i32_0 = arith.constant 0 : i32
    return %arg0, %c0_i32 : i32, i32
  }
}

module attributes {stable_mosaic.version = 11 : i64} {
  func.func @_fused_kernel(%arg0: i32, %arg1: memref<8x32xf32, #tpu.memory_space<vmem>>, %arg2: memref<32x32xbf16, #tpu.memory_space<vmem>>, %arg3: memref<64x48xbf16, #tpu.memory_space<vmem>>, %arg4: memref<8x64xf32, #tpu.memory_space<vmem>>, %arg5: memref<8x32xf32, #tpu.memory_space<vmem>>, %arg6: memref<32x32xbf16, #tpu.memory_space<vmem>>, %arg7: memref<1x32xf32, #tpu.memory_space<vmem>>, %arg8: memref<48x64xbf16, #tpu.memory_space<vmem>>, %arg9: memref<1x64xf32, #tpu.memory_space<vmem>>, %arg10: memref<1x64xf32, #tpu.memory_space<vmem>>, %arg11: memref<1x64xf32, #tpu.memory_space<vmem>>, %arg12: memref<64x32xbf16, #tpu.memory_space<vmem>>, %arg13: memref<1x32xf32, #tpu.memory_space<vmem>>, %arg14: memref<32x32xbf16, #tpu.memory_space<vmem>>, %arg15: memref<32x32xbf16, #tpu.memory_space<vmem>>, %arg16: memref<32x32xbf16, #tpu.memory_space<vmem>>, %arg17: memref<1x32xf32, #tpu.memory_space<vmem>>, %arg18: memref<1x32xf32, #tpu.memory_space<vmem>>, %arg19: memref<1x32xf32, #tpu.memory_space<vmem>>, %arg20: memref<1x32xf32, #tpu.memory_space<vmem>>, %arg21: memref<1x1xf32, #tpu.memory_space<vmem>>, %arg22: memref<8x128xf32, #tpu.memory_space<vmem>>) attributes {dimension_semantics = [#tpu.dimension_semantics<parallel>], iteration_bounds = array<i64: 2>, scalar_prefetch = 0 : i64, scratch_operands = 0 : i64, tpu.core_type = #tpu.core_type<tc>, window_params = [{transform_indices = @transform_0, window_bounds = array<i64: 8, 32>}, {transform_indices = @transform_1, window_bounds = array<i64: 32, 32>}, {transform_indices = @transform_2, window_bounds = array<i64: 64, 48>}, {transform_indices = @transform_3, window_bounds = array<i64: 8, 64>}, {pipeline_mode = #tpu.pipeline_mode<synchronous>, transform_indices = @transform_4, window_bounds = array<i64: 8, 32>}, {pipeline_mode = #tpu.pipeline_mode<synchronous>, transform_indices = @transform_5, window_bounds = array<i64: 32, 32>}, {pipeline_mode = #tpu.pipeline_mode<synchronous>, transform_indices = @transform_6, window_bounds = array<i64: 1, 32>}, {pipeline_mode = #tpu.pipeline_mode<synchronous>, transform_indices = @transform_7, window_bounds = array<i64: 48, 64>}, {pipeline_mode = #tpu.pipeline_mode<synchronous>, transform_indices = @transform_8, window_bounds = array<i64: 1, 64>}, {pipeline_mode = #tpu.pipeline_mode<synchronous>, transform_indices = @transform_9, window_bounds = array<i64: 1, 64>}, {pipeline_mode = #tpu.pipeline_mode<synchronous>, transform_indices = @transform_10, window_bounds = array<i64: 1, 64>}, {pipeline_mode = #tpu.pipeline_mode<synchronous>, transform_indices = @transform_11, window_bounds = array<i64: 64, 32>}, {pipeline_mode = #tpu.pipeline_mode<synchronous>, transform_indices = @transform_12, window_bounds = array<i64: 1, 32>}, {pipeline_mode = #tpu.pipeline_mode<synchronous>, transform_indices = @transform_13, window_bounds = array<i64: 32, 32>}, {pipeline_mode = #tpu.pipeline_mode<synchronous>, transform_indices = @transform_14, window_bounds = array<i64: 32, 32>}, {pipeline_mode = #tpu.pipeline_mode<synchronous>, transform_indices = @transform_15, window_bounds = array<i64: 32, 32>}, {pipeline_mode = #tpu.pipeline_mode<synchronous>, transform_indices = @transform_16, window_bounds = array<i64: 1, 32>}, {pipeline_mode = #tpu.pipeline_mode<synchronous>, transform_indices = @transform_17, window_bounds = array<i64: 1, 32>}, {pipeline_mode = #tpu.pipeline_mode<synchronous>, transform_indices = @transform_18, window_bounds = array<i64: 1, 32>}, {pipeline_mode = #tpu.pipeline_mode<synchronous>, transform_indices = @transform_19, window_bounds = array<i64: 1, 32>}, {pipeline_mode = #tpu.pipeline_mode<synchronous>, transform_indices = @transform_20, window_bounds = array<i64: 1, 1>}, {transform_indices = @transform_21, window_bounds = array<i64: 8, 128>}]} {
    %c0 = arith.constant 0 : index
    %c0_0 = arith.constant 0 : index
    %0 = vector.load %arg1[%c0, %c0_0] : memref<8x32xf32, #tpu.memory_space<vmem>>, vector<8x32xf32>
    %c0_1 = arith.constant 0 : index
    %c0_2 = arith.constant 0 : index
    %1 = vector.load %arg2[%c0_1, %c0_2] : memref<32x32xbf16, #tpu.memory_space<vmem>>, vector<32x32xbf16>
    %c0_3 = arith.constant 0 : index
    %c0_4 = arith.constant 0 : index
    %2 = vector.load %arg6[%c0_3, %c0_4] : memref<32x32xbf16, #tpu.memory_space<vmem>>, vector<32x32xbf16>
    %cst = arith.constant dense<0.000000e+00> : vector<32x32xf32>
    %3 = tpu.matmul %1, %2, %cst {dimension_numbers = #tpu.dot_dimension_numbers<[1], [0], [0], [1], [0, 0, 1, 1], [], []>} : vector<32x32xbf16>, vector<32x32xbf16>, vector<32x32xf32> -> vector<32x32xf32>
    %c0_5 = arith.constant 0 : index
    %c0_6 = arith.constant 0 : index
    %4 = vector.load %arg7[%c0_5, %c0_6] : memref<1x32xf32, #tpu.memory_space<vmem>>, vector<1x32xf32>
    %5 = vector.broadcast %4 : vector<1x32xf32> to vector<32x32xf32>
    %6 = arith.addf %3, %5 : vector<32x32xf32>
    %7 = math.tanh %6 : vector<32x32xf32>
    %cst_7 = arith.constant dense<0.000000e+00> : vector<8x32xf32>
    %8 = tpu.matmul %0, %7, %cst_7 {dimension_numbers = #tpu.dot_dimension_numbers<[1], [1], [0], [0], [0, 0, 1, 0], [], []>} : vector<8x32xf32>, vector<32x32xf32>, vector<8x32xf32> -> vector<8x32xf32>
    %c0_8 = arith.constant 0 : index
    %c0_9 = arith.constant 0 : index
    %9 = vector.load %arg5[%c0_8, %c0_9] : memref<8x32xf32, #tpu.memory_space<vmem>>, vector<8x32xf32>
    %10 = arith.addf %8, %9 : vector<8x32xf32>
    %cst_10 = arith.constant dense<0xFF800000> : vector<8xf32>
    %11 = vector.multi_reduction <maximumf>, %10, %cst_10 [1] : vector<8x32xf32> to vector<8xf32>
    %12 = vector.shape_cast %11 : vector<8xf32> to vector<8x1xf32>
    %13 = vector.broadcast %12 : vector<8x1xf32> to vector<8x32xf32>
    %14 = arith.subf %10, %13 : vector<8x32xf32>
    %15 = math.exp %14 : vector<8x32xf32>
    %cst_11 = arith.constant dense<0.000000e+00> : vector<8xf32>
    %16 = vector.multi_reduction <add>, %15, %cst_11 [1] : vector<8x32xf32> to vector<8xf32>
    %17 = vector.shape_cast %16 : vector<8xf32> to vector<8x1xf32>
    %18 = vector.broadcast %17 : vector<8x1xf32> to vector<8x32xf32>
    %19 = arith.divf %15, %18 : vector<8x32xf32>
    %20 = arith.truncf %19 : vector<8x32xf32> to vector<8x32xbf16>
    %cst_12 = arith.constant dense<0.000000e+00> : vector<8x32xf32>
    %21 = tpu.matmul %20, %1, %cst_12 {dimension_numbers = #tpu.dot_dimension_numbers<[1], [0], [0], [1], [0, 0, 1, 1], [], []>} : vector<8x32xbf16>, vector<32x32xbf16>, vector<8x32xf32> -> vector<8x32xf32>
    %c0_13 = arith.constant 0 : index
    %c0_14 = arith.constant 0 : index
    %22 = vector.load %arg3[%c0_13, %c0_14] : memref<64x48xbf16, #tpu.memory_space<vmem>>, vector<64x48xbf16>
    %c0_15 = arith.constant 0 : index
    %c0_16 = arith.constant 0 : index
    %23 = vector.load %arg8[%c0_15, %c0_16] : memref<48x64xbf16, #tpu.memory_space<vmem>>, vector<48x64xbf16>
    %cst_17 = arith.constant dense<0.000000e+00> : vector<64x64xf32>
    %24 = tpu.matmul %22, %23, %cst_17 {dimension_numbers = #tpu.dot_dimension_numbers<[1], [0], [0], [1], [0, 0, 1, 1], [], []>} : vector<64x48xbf16>, vector<48x64xbf16>, vector<64x64xf32> -> vector<64x64xf32>
    %c0_18 = arith.constant 0 : index
    %c0_19 = arith.constant 0 : index
    %25 = vector.load %arg9[%c0_18, %c0_19] : memref<1x64xf32, #tpu.memory_space<vmem>>, vector<1x64xf32>
    %26 = vector.broadcast %25 : vector<1x64xf32> to vector<64x64xf32>
    %27 = arith.addf %24, %26 : vector<64x64xf32>
    %c0_20 = arith.constant 0 : index
    %c0_21 = arith.constant 0 : index
    %28 = vector.load %arg10[%c0_20, %c0_21] : memref<1x64xf32, #tpu.memory_space<vmem>>, vector<1x64xf32>
    %c0_22 = arith.constant 0 : index
    %c0_23 = arith.constant 0 : index
    %29 = vector.load %arg11[%c0_22, %c0_23] : memref<1x64xf32, #tpu.memory_space<vmem>>, vector<1x64xf32>
    %cst_24 = arith.constant dense<0.000000e+00> : vector<64xf32>
    %30 = vector.multi_reduction <add>, %27, %cst_24 [1] : vector<64x64xf32> to vector<64xf32>
    %31 = vector.shape_cast %30 : vector<64xf32> to vector<64x1xf32>
    %cst_25 = arith.constant 6.400000e+01 : f32
    %32 = vector.broadcast %cst_25 : f32 to vector<64x1xf32>
    %33 = arith.divf %31, %32 : vector<64x1xf32>
    %34 = arith.mulf %27, %27 : vector<64x64xf32>
    %cst_26 = arith.constant dense<0.000000e+00> : vector<64xf32>
    %35 = vector.multi_reduction <add>, %34, %cst_26 [1] : vector<64x64xf32> to vector<64xf32>
    %36 = vector.shape_cast %35 : vector<64xf32> to vector<64x1xf32>
    %cst_27 = arith.constant 6.400000e+01 : f32
    %37 = vector.broadcast %cst_27 : f32 to vector<64x1xf32>
    %38 = arith.divf %36, %37 : vector<64x1xf32>
    %39 = arith.mulf %33, %33 : vector<64x1xf32>
    %40 = arith.subf %38, %39 : vector<64x1xf32>
    %cst_28 = arith.constant 0.000000e+00 : f32
    %41 = vector.broadcast %cst_28 : f32 to vector<64x1xf32>
    %42 = arith.maximumf %40, %41 : vector<64x1xf32>
    %43 = vector.broadcast %33 : vector<64x1xf32> to vector<64x64xf32>
    %44 = arith.subf %27, %43 : vector<64x64xf32>
    %cst_29 = arith.constant 9.99999974E-6 : f32
    %45 = vector.broadcast %cst_29 : f32 to vector<64x1xf32>
    %46 = arith.addf %42, %45 : vector<64x1xf32>
    %47 = math.rsqrt %46 : vector<64x1xf32>
    %48 = vector.broadcast %47 : vector<64x1xf32> to vector<64x64xf32>
    %49 = arith.mulf %44, %48 : vector<64x64xf32>
    %50 = vector.broadcast %28 : vector<1x64xf32> to vector<64x64xf32>
    %51 = arith.mulf %49, %50 : vector<64x64xf32>
    %52 = vector.broadcast %29 : vector<1x64xf32> to vector<64x64xf32>
    %53 = arith.addf %51, %52 : vector<64x64xf32>
    %cst_30 = arith.constant 5.000000e-01 : f32
    %54 = vector.broadcast %cst_30 : f32 to vector<64x64xf32>
    %55 = arith.mulf %54, %53 : vector<64x64xf32>
    %cst_31 = arith.constant 4.471500e-02 : f32
    %56 = vector.broadcast %cst_31 : f32 to vector<64x64xf32>
    %57 = arith.mulf %56, %53 : vector<64x64xf32>
    %58 = arith.mulf %57, %53 : vector<64x64xf32>
    %59 = arith.mulf %58, %53 : vector<64x64xf32>
    %60 = arith.addf %53, %59 : vector<64x64xf32>
    %cst_32 = arith.constant 0.797884583 : f32
    %61 = vector.broadcast %cst_32 : f32 to vector<64x64xf32>
    %62 = arith.mulf %61, %60 : vector<64x64xf32>
    %63 = math.tanh %62 : vector<64x64xf32>
    %cst_33 = arith.constant 1.000000e+00 : f32
    %64 = vector.broadcast %cst_33 : f32 to vector<64x64xf32>
    %65 = arith.addf %64, %63 : vector<64x64xf32>
    %66 = arith.mulf %55, %65 : vector<64x64xf32>
    %67 = arith.truncf %66 : vector<64x64xf32> to vector<64x64xbf16>
    %c0_34 = arith.constant 0 : index
    %c0_35 = arith.constant 0 : index
    %68 = vector.load %arg12[%c0_34, %c0_35] : memref<64x32xbf16, #tpu.memory_space<vmem>>, vector<64x32xbf16>
    %cst_36 = arith.constant dense<0.000000e+00> : vector<64x32xf32>
    %69 = tpu.matmul %67, %68, %cst_36 {dimension_numbers = #tpu.dot_dimension_numbers<[1], [0], [0], [1], [0, 0, 1, 1], [], []>} : vector<64x64xbf16>, vector<64x32xbf16>, vector<64x32xf32> -> vector<64x32xf32>
    %c0_37 = arith.constant 0 : index
    %c0_38 = arith.constant 0 : index
    %70 = vector.load %arg13[%c0_37, %c0_38] : memref<1x32xf32, #tpu.memory_space<vmem>>, vector<1x32xf32>
    %71 = vector.broadcast %70 : vector<1x32xf32> to vector<64x32xf32>
    %72 = arith.addf %69, %71 : vector<64x32xf32>
    %cst_39 = arith.constant 5.000000e-01 : f32
    %73 = vector.broadcast %cst_39 : f32 to vector<64x32xf32>
    %74 = arith.mulf %73, %72 : vector<64x32xf32>
    %cst_40 = arith.constant 4.471500e-02 : f32
    %75 = vector.broadcast %cst_40 : f32 to vector<64x32xf32>
    %76 = arith.mulf %75, %72 : vector<64x32xf32>
    %77 = arith.mulf %76, %72 : vector<64x32xf32>
    %78 = arith.mulf %77, %72 : vector<64x32xf32>
    %79 = arith.addf %72, %78 : vector<64x32xf32>
    %cst_41 = arith.constant 0.797884583 : f32
    %80 = vector.broadcast %cst_41 : f32 to vector<64x32xf32>
    %81 = arith.mulf %80, %79 : vector<64x32xf32>
    %82 = math.tanh %81 : vector<64x32xf32>
    %cst_42 = arith.constant 1.000000e+00 : f32
    %83 = vector.broadcast %cst_42 : f32 to vector<64x32xf32>
    %84 = arith.addf %83, %82 : vector<64x32xf32>
    %85 = arith.mulf %74, %84 : vector<64x32xf32>
    %c0_43 = arith.constant 0 : index
    %c0_44 = arith.constant 0 : index
    %86 = vector.load %arg4[%c0_43, %c0_44] : memref<8x64xf32, #tpu.memory_space<vmem>>, vector<8x64xf32>
    %cst_45 = arith.constant dense<0.000000e+00> : vector<8x32xf32>
    %87 = tpu.matmul %86, %85, %cst_45 {dimension_numbers = #tpu.dot_dimension_numbers<[1], [0], [0], [1], [0, 0, 1, 1], [], []>} : vector<8x64xf32>, vector<64x32xf32>, vector<8x32xf32> -> vector<8x32xf32>
    %88 = arith.truncf %21 : vector<8x32xf32> to vector<8x32xbf16>
    %c0_46 = arith.constant 0 : index
    %c0_47 = arith.constant 0 : index
    %89 = vector.load %arg14[%c0_46, %c0_47] : memref<32x32xbf16, #tpu.memory_space<vmem>>, vector<32x32xbf16>
    %cst_48 = arith.constant dense<0.000000e+00> : vector<8x32xf32>
    %90 = tpu.matmul %88, %89, %cst_48 {dimension_numbers = #tpu.dot_dimension_numbers<[1], [0], [0], [1], [0, 0, 1, 1], [], []>} : vector<8x32xbf16>, vector<32x32xbf16>, vector<8x32xf32> -> vector<8x32xf32>
    %91 = arith.truncf %87 : vector<8x32xf32> to vector<8x32xbf16>
    %c0_49 = arith.constant 0 : index
    %c0_50 = arith.constant 0 : index
    %92 = vector.load %arg15[%c0_49, %c0_50] : memref<32x32xbf16, #tpu.memory_space<vmem>>, vector<32x32xbf16>
    %cst_51 = arith.constant dense<0.000000e+00> : vector<8x32xf32>
    %93 = tpu.matmul %91, %92, %cst_51 {dimension_numbers = #tpu.dot_dimension_numbers<[1], [0], [0], [1], [0, 0, 1, 1], [], []>} : vector<8x32xbf16>, vector<32x32xbf16>, vector<8x32xf32> -> vector<8x32xf32>
    %94 = arith.addf %90, %93 : vector<8x32xf32>
    %95 = arith.truncf %0 : vector<8x32xf32> to vector<8x32xbf16>
    %c0_52 = arith.constant 0 : index
    %c0_53 = arith.constant 0 : index
    %96 = vector.load %arg16[%c0_52, %c0_53] : memref<32x32xbf16, #tpu.memory_space<vmem>>, vector<32x32xbf16>
    %cst_54 = arith.constant dense<0.000000e+00> : vector<8x32xf32>
    %97 = tpu.matmul %95, %96, %cst_54 {dimension_numbers = #tpu.dot_dimension_numbers<[1], [0], [0], [1], [0, 0, 1, 1], [], []>} : vector<8x32xbf16>, vector<32x32xbf16>, vector<8x32xf32> -> vector<8x32xf32>
    %98 = arith.addf %94, %97 : vector<8x32xf32>
    %c0_55 = arith.constant 0 : index
    %c0_56 = arith.constant 0 : index
    %99 = vector.load %arg17[%c0_55, %c0_56] : memref<1x32xf32, #tpu.memory_space<vmem>>, vector<1x32xf32>
    %100 = vector.broadcast %99 : vector<1x32xf32> to vector<8x32xf32>
    %101 = arith.addf %98, %100 : vector<8x32xf32>
    %c0_57 = arith.constant 0 : index
    %c0_58 = arith.constant 0 : index
    %102 = vector.load %arg18[%c0_57, %c0_58] : memref<1x32xf32, #tpu.memory_space<vmem>>, vector<1x32xf32>
    %c0_59 = arith.constant 0 : index
    %c0_60 = arith.constant 0 : index
    %103 = vector.load %arg19[%c0_59, %c0_60] : memref<1x32xf32, #tpu.memory_space<vmem>>, vector<1x32xf32>
    %cst_61 = arith.constant dense<0.000000e+00> : vector<8xf32>
    %104 = vector.multi_reduction <add>, %101, %cst_61 [1] : vector<8x32xf32> to vector<8xf32>
    %105 = vector.shape_cast %104 : vector<8xf32> to vector<8x1xf32>
    %cst_62 = arith.constant 3.200000e+01 : f32
    %106 = vector.broadcast %cst_62 : f32 to vector<8x1xf32>
    %107 = arith.divf %105, %106 : vector<8x1xf32>
    %108 = arith.mulf %101, %101 : vector<8x32xf32>
    %cst_63 = arith.constant dense<0.000000e+00> : vector<8xf32>
    %109 = vector.multi_reduction <add>, %108, %cst_63 [1] : vector<8x32xf32> to vector<8xf32>
    %110 = vector.shape_cast %109 : vector<8xf32> to vector<8x1xf32>
    %cst_64 = arith.constant 3.200000e+01 : f32
    %111 = vector.broadcast %cst_64 : f32 to vector<8x1xf32>
    %112 = arith.divf %110, %111 : vector<8x1xf32>
    %113 = arith.mulf %107, %107 : vector<8x1xf32>
    %114 = arith.subf %112, %113 : vector<8x1xf32>
    %cst_65 = arith.constant 0.000000e+00 : f32
    %115 = vector.broadcast %cst_65 : f32 to vector<8x1xf32>
    %116 = arith.maximumf %114, %115 : vector<8x1xf32>
    %117 = vector.broadcast %107 : vector<8x1xf32> to vector<8x32xf32>
    %118 = arith.subf %101, %117 : vector<8x32xf32>
    %cst_66 = arith.constant 9.99999974E-6 : f32
    %119 = vector.broadcast %cst_66 : f32 to vector<8x1xf32>
    %120 = arith.addf %116, %119 : vector<8x1xf32>
    %121 = math.rsqrt %120 : vector<8x1xf32>
    %122 = vector.broadcast %121 : vector<8x1xf32> to vector<8x32xf32>
    %123 = arith.mulf %118, %122 : vector<8x32xf32>
    %124 = vector.broadcast %102 : vector<1x32xf32> to vector<8x32xf32>
    %125 = arith.mulf %123, %124 : vector<8x32xf32>
    %126 = vector.broadcast %103 : vector<1x32xf32> to vector<8x32xf32>
    %127 = arith.addf %125, %126 : vector<8x32xf32>
    %cst_67 = arith.constant 5.000000e-01 : f32
    %128 = vector.broadcast %cst_67 : f32 to vector<8x32xf32>
    %129 = arith.mulf %128, %127 : vector<8x32xf32>
    %cst_68 = arith.constant 4.471500e-02 : f32
    %130 = vector.broadcast %cst_68 : f32 to vector<8x32xf32>
    %131 = arith.mulf %130, %127 : vector<8x32xf32>
    %132 = arith.mulf %131, %127 : vector<8x32xf32>
    %133 = arith.mulf %132, %127 : vector<8x32xf32>
    %134 = arith.addf %127, %133 : vector<8x32xf32>
    %cst_69 = arith.constant 0.797884583 : f32
    %135 = vector.broadcast %cst_69 : f32 to vector<8x32xf32>
    %136 = arith.mulf %135, %134 : vector<8x32xf32>
    %137 = math.tanh %136 : vector<8x32xf32>
    %cst_70 = arith.constant 1.000000e+00 : f32
    %138 = vector.broadcast %cst_70 : f32 to vector<8x32xf32>
    %139 = arith.addf %138, %137 : vector<8x32xf32>
    %140 = arith.mulf %129, %139 : vector<8x32xf32>
    %c0_71 = arith.constant 0 : index
    %c0_72 = arith.constant 0 : index
    %141 = vector.load %arg20[%c0_71, %c0_72] : memref<1x32xf32, #tpu.memory_space<vmem>>, vector<1x32xf32>
    %142 = vector.broadcast %141 : vector<1x32xf32> to vector<8x32xf32>
    %143 = arith.mulf %140, %142 : vector<8x32xf32>
    %cst_73 = arith.constant dense<0.000000e+00> : vector<8xf32>
    %144 = vector.multi_reduction <add>, %143, %cst_73 [1] : vector<8x32xf32> to vector<8xf32>
    %145 = vector.shape_cast %144 : vector<8xf32> to vector<8x1xf32>
    %c0_74 = arith.constant 0 : index
    %c0_75 = arith.constant 0 : index
    %146 = vector.load %arg21[%c0_74, %c0_75] : memref<1x1xf32, #tpu.memory_space<vmem>>, vector<1x1xf32>
    %147 = vector.broadcast %146 : vector<1x1xf32> to vector<8x1xf32>
    %148 = arith.addf %145, %147 : vector<8x1xf32>
    %149 = vector.shape_cast %148 : vector<8x1xf32> to vector<8x1xf32>
    %150 = vector.broadcast %149 : vector<8x1xf32> to vector<8x128xf32>
    %c0_76 = arith.constant 0 : index
    %c0_77 = arith.constant 0 : index
    %151 = vector.load %arg22[%c0_76, %c0_77] : memref<8x128xf32, #tpu.memory_space<vmem>>, vector<8x128xf32>
    tpu.vector_store %arg22[%c0_76, %c0_77], %150 {strides = array<i32>} : memref<8x128xf32, #tpu.memory_space<vmem>>, vector<8x128xf32>,
    return
  }
  func.func @transform_0(%arg0: i32) -> (i32, i32) {
    %c0_i32 = arith.constant 0 : i32
    %c0_i32_0 = arith.constant 0 : i32
    return %arg0, %c0_i32 : i32, i32
  }
  func.func @transform_1(%arg0: i32) -> (i32, i32) {
    %c0_i32 = arith.constant 0 : i32
    %c0_i32_0 = arith.constant 0 : i32
    return %arg0, %c0_i32 : i32, i32
  }
  func.func @transform_2(%arg0: i32) -> (i32, i32) {
    %c0_i32 = arith.constant 0 : i32
    %c0_i32_0 = arith.constant 0 : i32
    return %arg0, %c0_i32 : i32, i32
  }
  func.func @transform_3(%arg0: i32) -> (i32, i32) {
    %c0_i32 = arith.constant 0 : i32
    %c0_i32_0 = arith.constant 0 : i32
    return %arg0, %c0_i32 : i32, i32
  }
  func.func @transform_4(%arg0: i32) -> (i32, i32) {
    %c0_i32 = arith.constant 0 : i32
    %c0_i32_0 = arith.constant 0 : i32
    %c0_i32_1 = arith.constant 0 : i32
    return %c0_i32, %c0_i32_0 : i32, i32
  }
  func.func @transform_5(%arg0: i32) -> (i32, i32) {
    %c0_i32 = arith.constant 0 : i32
    %c0_i32_0 = arith.constant 0 : i32
    %c0_i32_1 = arith.constant 0 : i32
    return %c0_i32, %c0_i32_0 : i32, i32
  }
  func.func @transform_6(%arg0: i32) -> (i32, i32) {
    %c0_i32 = arith.constant 0 : i32
    %c0_i32_0 = arith.constant 0 : i32
    %c0_i32_1 = arith.constant 0 : i32
    return %c0_i32, %c0_i32_0 : i32, i32
  }
  func.func @transform_7(%arg0: i32) -> (i32, i32) {
    %c0_i32 = arith.constant 0 : i32
    %c0_i32_0 = arith.constant 0 : i32
    %c0_i32_1 = arith.constant 0 : i32
    return %c0_i32, %c0_i32_0 : i32, i32
  }
  func.func @transform_8(%arg0: i32) -> (i32, i32) {
    %c0_i32 = arith.constant 0 : i32
    %c0_i32_0 = arith.constant 0 : i32
    %c0_i32_1 = arith.constant 0 : i32
    return %c0_i32, %c0_i32_0 : i32, i32
  }
  func.func @transform_9(%arg0: i32) -> (i32, i32) {
    %c0_i32 = arith.constant 0 : i32
    %c0_i32_0 = arith.constant 0 : i32
    %c0_i32_1 = arith.constant 0 : i32
    return %c0_i32, %c0_i32_0 : i32, i32
  }
  func.func @transform_10(%arg0: i32) -> (i32, i32) {
    %c0_i32 = arith.constant 0 : i32
    %c0_i32_0 = arith.constant 0 : i32
    %c0_i32_1 = arith.constant 0 : i32
    return %c0_i32, %c0_i32_0 : i32, i32
  }
  func.func @transform_11(%arg0: i32) -> (i32, i32) {
    %c0_i32 = arith.constant 0 : i32
    %c0_i32_0 = arith.constant 0 : i32
    %c0_i32_1 = arith.constant 0 : i32
    return %c0_i32, %c0_i32_0 : i32, i32
  }
  func.func @transform_12(%arg0: i32) -> (i32, i32) {
    %c0_i32 = arith.constant 0 : i32
    %c0_i32_0 = arith.constant 0 : i32
    %c0_i32_1 = arith.constant 0 : i32
    return %c0_i32, %c0_i32_0 : i32, i32
  }
  func.func @transform_13(%arg0: i32) -> (i32, i32) {
    %c0_i32 = arith.constant 0 : i32
    %c0_i32_0 = arith.constant 0 : i32
    %c0_i32_1 = arith.constant 0 : i32
    return %c0_i32, %c0_i32_0 : i32, i32
  }
  func.func @transform_14(%arg0: i32) -> (i32, i32) {
    %c0_i32 = arith.constant 0 : i32
    %c0_i32_0 = arith.constant 0 : i32
    %c0_i32_1 = arith.constant 0 : i32
    return %c0_i32, %c0_i32_0 : i32, i32
  }
  func.func @transform_15(%arg0: i32) -> (i32, i32) {
    %c0_i32 = arith.constant 0 : i32
    %c0_i32_0 = arith.constant 0 : i32
    %c0_i32_1 = arith.constant 0 : i32
    return %c0_i32, %c0_i32_0 : i32, i32
  }
  func.func @transform_16(%arg0: i32) -> (i32, i32) {
    %c0_i32 = arith.constant 0 : i32
    %c0_i32_0 = arith.constant 0 : i32
    %c0_i32_1 = arith.constant 0 : i32
    return %c0_i32, %c0_i32_0 : i32, i32
  }
  func.func @transform_17(%arg0: i32) -> (i32, i32) {
    %c0_i32 = arith.constant 0 : i32
    %c0_i32_0 = arith.constant 0 : i32
    %c0_i32_1 = arith.constant 0 : i32
    return %c0_i32, %c0_i32_0 : i32, i32
  }
  func.func @transform_18(%arg0: i32) -> (i32, i32) {
    %c0_i32 = arith.constant 0 : i32
    %c0_i32_0 = arith.constant 0 : i32
    %c0_i32_1 = arith.constant 0 : i32
    return %c0_i32, %c0_i32_0 : i32, i32
  }
  func.func @transform_19(%arg0: i32) -> (i32, i32) {
    %c0_i32 = arith.constant 0 : i32
    %c0_i32_0 = arith.constant 0 : i32
    %c0_i32_1 = arith.constant 0 : i32
    return %c0_i32, %c0_i32_0 : i32, i32
  }
  func.func @transform_20(%arg0: i32) -> (i32, i32) {
    %c0_i32 = arith.constant 0 : i32
    %c0_i32_0 = arith.constant 0 : i32
    %c0_i32_1 = arith.constant 0 : i32
    return %c0_i32, %c0_i32_0 : i32, i32
  }
  func.func @transform_21(%arg0: i32) -> (i32, i32) {
    %c0_i32 = arith.constant 0 : i32
    %c0_i32_0 = arith.constant 0 : i32
    return %arg0, %c0_i32 : i32, i32
  }
}

</mosaic_0001>

<llo_original>
// kernel: lm_relation_net_forward.1
$region0: #{lm_relation_net_forward.1}
  #allocation0 [shape = 'u32[]', space=smem, size = 0x4, offset = 0x4, fixed_abs, tag = 'smem constant byte address 0x4 - core index']
  #allocation1 [shape = 'u32[144,128]{1,0:T(1,128)}', space=vmem, size = 0x12000, scoped, tag = 'internal scratch']
  #allocation2 [shape = 'f32[1,1]{1,0:T(1,128)S(1)}', space=vmem, size = 0x200, scoped, tag = 'scoped memory for lm_relation_net_forward.1']
  %s0 = inlined_call_operand.vmem [shape: f32[16,32], index: 0, kind: input, shape index: {}]
  %s1 = inlined_call_operand.vmem [shape: bf16[64,32], index: 1, kind: input, shape index: {}]
  %s2 = inlined_call_operand.vmem [shape: bf16[128,48], index: 2, kind: input, shape index: {}]
  %s3 = inlined_call_operand.vmem [shape: f32[16,64], index: 3, kind: input, shape index: {}]
  %s4 = inlined_call_operand.vmem [shape: f32[8,32], index: 4, kind: input, shape index: {}]
  %s5 = inlined_call_operand.vmem [shape: bf16[32,32], index: 5, kind: input, shape index: {}]
  %s6 = inlined_call_operand.vmem [shape: f32[1,32], index: 6, kind: input, shape index: {}]
  %s7 = inlined_call_operand.vmem [shape: bf16[48,64], index: 7, kind: input, shape index: {}]
  %s8 = inlined_call_operand.vmem [shape: f32[1,64], index: 8, kind: input, shape index: {}]
  %s9 = inlined_call_operand.vmem [shape: f32[1,64], index: 9, kind: input, shape index: {}]
  %s10 = inlined_call_operand.vmem [shape: f32[1,64], index: 10, kind: input, shape index: {}]
  %s11 = inlined_call_operand.vmem [shape: bf16[64,32], index: 11, kind: input, shape index: {}]
  %s12 = inlined_call_operand.vmem [shape: f32[1,32], index: 12, kind: input, shape index: {}]
  %s13 = inlined_call_operand.vmem [shape: bf16[32,32], index: 13, kind: input, shape index: {}]
  %s14 = inlined_call_operand.vmem [shape: bf16[32,32], index: 14, kind: input, shape index: {}]
  %s15 = inlined_call_operand.vmem [shape: bf16[32,32], index: 15, kind: input, shape index: {}]
  %s16 = inlined_call_operand.vmem [shape: f32[1,32], index: 16, kind: input, shape index: {}]
  %s17 = inlined_call_operand.vmem [shape: f32[1,32], index: 17, kind: input, shape index: {}]
  %s18 = inlined_call_operand.vmem [shape: f32[1,32], index: 18, kind: input, shape index: {}]
  %s19 = inlined_call_operand.vmem [shape: f32[1,32], index: 19, kind: input, shape index: {}]
  %s20 = inlined_call_operand.<no memory space> [shape: f32[1,1], index: 20, kind: input, shape index: {}]
  %s21 = inlined_call_operand.vmem [shape: f32[16,128], index: 21, kind: output, shape index: {}]
  %s22 = sld [smem:[#allocation0]]
  $region117: #{lm_relation_net_forward.1} parent=0
    _
  %s24 = ssub.s32 1, %s22
  %s25 = scalar_select 0, %s24, %s22
  %v26 = vstv %s20
  %27 = vst [vmem:[#allocation2] sm:$0x1] %v26
  loop: start=0, step=1, limit=4
  $region2: #{lm_relation_net_forward.1} parent=0 // loop_pre_header
    _
  $region3: #{lm_relation_net_forward.1} parent=0 // loop_header
    %s29 = sphi 0, %s33
    %p30 = scmp.ge.s32.totalorder %s29, 4
    %s39 = sphi 0, %s41
    %s42 = sphi 0, %s39
    %s43 = sphi 0, %s42
    %s59 = sphi 0, %s43
    %s65 = sphi 0, %s67
    %s68 = sphi 0, %s65
    %s69 = sphi 0, %s68
    %s85 = sphi 0, %s69
    %s91 = sphi 0, %s93
    %s94 = sphi 0, %s91
    %s95 = sphi 0, %s94
    %s111 = sphi 0, %s95
    %s117 = sphi 0, %s119
    %s120 = sphi 0, %s117
    %s121 = sphi 0, %s120
    %s137 = sphi 0, %s121
    %s141 = sphi 0, %s141
    %s143 = sphi 0, %s141
    %s144 = sphi 0, %s143
    %s158 = sphi 0, %s144
    %s162 = sphi 0, %s162
    %s164 = sphi 0, %s162
    %s165 = sphi 0, %s164
    %s179 = sphi 0, %s165
    %s183 = sphi 0, %s183
    %s185 = sphi 0, %s183
    %s186 = sphi 0, %s185
    %s200 = sphi 0, %s186
    %s204 = sphi 0, %s204
    %s206 = sphi 0, %s204
    %s207 = sphi 0, %s206
    %s221 = sphi 0, %s207
    %s225 = sphi 0, %s225
    %s227 = sphi 0, %s225
    %s228 = sphi 0, %s227
    %s242 = sphi 0, %s228
    %s246 = sphi 0, %s246
    %s248 = sphi 0, %s246
    %s249 = sphi 0, %s248
    %s263 = sphi 0, %s249
    %s267 = sphi 0, %s267
    %s269 = sphi 0, %s267
    %s270 = sphi 0, %s269
    %s284 = sphi 0, %s270
    %s288 = sphi 0, %s288
    %s290 = sphi 0, %s288
    %s291 = sphi 0, %s290
    %s305 = sphi 0, %s291
    %s309 = sphi 0, %s309
    %s311 = sphi 0, %s309
    %s312 = sphi 0, %s311
    %s326 = sphi 0, %s312
    %s330 = sphi 0, %s330
    %s332 = sphi 0, %s330
    %s333 = sphi 0, %s332
    %s347 = sphi 0, %s333
    %s351 = sphi 0, %s351
    %s353 = sphi 0, %s351
    %s354 = sphi 0, %s353
    %s368 = sphi 0, %s354
    %s372 = sphi 0, %s372
    %s374 = sphi 0, %s372
    %s375 = sphi 0, %s374
    %s389 = sphi 0, %s375
    %s393 = sphi 0, %s393
    %s395 = sphi 0, %s393
    %s396 = sphi 0, %s395
    %s410 = sphi 0, %s396
    %s414 = sphi 0, %s414
    %s416 = sphi 0, %s414
    %s417 = sphi 0, %s416
    %s431 = sphi 0, %s417
    %s435 = sphi 0, %s435
    %s437 = sphi 0, %s435
    %s438 = sphi 0, %s437
    %s452 = sphi 0, %s438
    %s456 = sphi 0, %s456
    %s458 = sphi 0, %s456
    %s459 = sphi 0, %s458
    %s473 = sphi 0, %s459
    %s477 = sphi 0, %s477
    %s479 = sphi 0, %s477
    %s480 = sphi 0, %s479
    %s494 = sphi 0, %s480
    %s500 = sphi 0, %s502
    %s503 = sphi 0, %s500
    %s504 = sphi 0, %s503
    %s520 = sphi 0, %s504
  $region4: #{lm_relation_net_forward.1} parent=0 // loop_header_branch
    %32 = sbr.rel (%p30) target = $region8
  $region5: #{lm_relation_net_forward.1} parent=0 // loop_body
    %s34 = ssub.s32 %s29, 1
    %s35 = ssub.s32 %s29, 2
    %s36 = sadd.s32 %s29, 1
    %s37 = ssub.s32 %s29, %s36
    %p38 = scmp.eq.s32.totalorder %s37, 0
    %s40 = sadd.s32 %s39, 1
    %s41 = scalar_select %p38, %s39, %s40
    %p44 = pneg %p38
    %p45 = scmp.eq.s32.totalorder %s29, 1
    %p46 = por %p44, %p45
    %p47 = scmp.ne.s32.totalorder %s39, %s42
    %p48 = scmp.eq.s32.totalorder %s29, 0
    %p49 = por %p47, %p48
    %p50 = scmp.ne.s32.totalorder %s39, %s42
    %p51 = scmp.eq.s32.totalorder %s34, 1
    %p52 = por %p50, %p51
    %p53 = scmp.ne.s32.totalorder %s42, %s43
    %p54 = scmp.eq.s32.totalorder %s34, 0
    %p55 = por %p53, %p54
    %p56 = scmp.ne.s32.totalorder %s42, %s43
    %p57 = scmp.eq.s32.totalorder %s35, 1
    %p58 = por %p56, %p57
    %p60 = scmp.ne.s32.totalorder %s43, %s59
    %p61 = scmp.eq.s32.totalorder %s35, 0
    %p62 = por %p60, %p61
    %s63 = ssub.s32 %s29, %s36
    %p64 = scmp.eq.s32.totalorder %s63, 0
    %s66 = sadd.s32 %s65, 1
    %s67 = scalar_select %p64, %s65, %s66
    %p70 = pneg %p64
    %p71 = scmp.eq.s32.totalorder %s29, 1
    %p72 = por %p70, %p71
    %p73 = scmp.ne.s32.totalorder %s65, %s68
    %p74 = scmp.eq.s32.totalorder %s29, 0
    %p75 = por %p73, %p74
    %p76 = scmp.ne.s32.totalorder %s65, %s68
    %p77 = scmp.eq.s32.totalorder %s34, 1
    %p78 = por %p76, %p77
    %p79 = scmp.ne.s32.totalorder %s68, %s69
    %p80 = scmp.eq.s32.totalorder %s34, 0
    %p81 = por %p79, %p80
    %p82 = scmp.ne.s32.totalorder %s68, %s69
    %p83 = scmp.eq.s32.totalorder %s35, 1
    %p84 = por %p82, %p83
    %p86 = scmp.ne.s32.totalorder %s69, %s85
    %p87 = scmp.eq.s32.totalorder %s35, 0
    %p88 = por %p86, %p87
    %s89 = ssub.s32 %s29, %s36
    %p90 = scmp.eq.s32.totalorder %s89, 0
    %s92 = sadd.s32 %s91, 1
    %s93 = scalar_select %p90, %s91, %s92
    %p96 = pneg %p90
    %p97 = scmp.eq.s32.totalorder %s29, 1
    %p98 = por %p96, %p97
    %p99 = scmp.ne.s32.totalorder %s91, %s94
    %p100 = scmp.eq.s32.totalorder %s29, 0
    %p101 = por %p99, %p100
    %p102 = scmp.ne.s32.totalorder %s91, %s94
    %p103 = scmp.eq.s32.totalorder %s34, 1
    %p104 = por %p102, %p103
    %p105 = scmp.ne.s32.totalorder %s94, %s95
    %p106 = scmp.eq.s32.totalorder %s34, 0
    %p107 = por %p105, %p106
    %p108 = scmp.ne.s32.totalorder %s94, %s95
    %p109 = scmp.eq.s32.totalorder %s35, 1
    %p110 = por %p108, %p109
    %p112 = scmp.ne.s32.totalorder %s95, %s111
    %p113 = scmp.eq.s32.totalorder %s35, 0
    %p114 = por %p112, %p113
    %s115 = ssub.s32 %s29, %s36
    %p116 = scmp.eq.s32.totalorder %s115, 0
    %s118 = sadd.s32 %s117, 1
    %s119 = scalar_select %p116, %s117, %s118
    %p122 = pneg %p116
    %p123 = scmp.eq.s32.totalorder %s29, 1
    %p124 = por %p122, %p123
    %p125 = scmp.ne.s32.totalorder %s117, %s120
    %p126 = scmp.eq.s32.totalorder %s29, 0
    %p127 = por %p125, %p126
    %p128 = scmp.ne.s32.totalorder %s117, %s120
    %p129 = scmp.eq.s32.totalorder %s34, 1
    %p130 = por %p128, %p129
    %p131 = scmp.ne.s32.totalorder %s120, %s121
    %p132 = scmp.eq.s32.totalorder %s34, 0
    %p133 = por %p131, %p132
    %p134 = scmp.ne.s32.totalorder %s120, %s121
    %p135 = scmp.eq.s32.totalorder %s35, 1
    %p136 = por %p134, %p135
    %p138 = scmp.ne.s32.totalorder %s121, %s137
    %p139 = scmp.eq.s32.totalorder %s35, 0
    %p140 = por %p138, %p139
    %s142 = sadd.s32 %s141, 1
    %p145 = scmp.eq.s32.totalorder %s29, 1
    %p146 = scmp.ne.s32.totalorder %s141, %s143
    %p147 = scmp.eq.s32.totalorder %s29, 0
    %p148 = por %p146, %p147
    %p149 = scmp.ne.s32.totalorder %s141, %s143
    %p150 = scmp.eq.s32.totalorder %s34, 1
    %p151 = por %p149, %p150
    %p152 = scmp.ne.s32.totalorder %s143, %s144
    %p153 = scmp.eq.s32.totalorder %s34, 0
    %p154 = por %p152, %p153
    %p155 = scmp.ne.s32.totalorder %s143, %s144
    %p156 = scmp.eq.s32.totalorder %s35, 1
    %p157 = por %p155, %p156
    %p159 = scmp.ne.s32.totalorder %s144, %s158
    %p160 = scmp.eq.s32.totalorder %s35, 0
    %p161 = por %p159, %p160
    %s163 = sadd.s32 %s162, 1
    %p166 = scmp.eq.s32.totalorder %s29, 1
    %p167 = scmp.ne.s32.totalorder %s162, %s164
    %p168 = scmp.eq.s32.totalorder %s29, 0
    %p169 = por %p167, %p168
    %p170 = scmp.ne.s32.totalorder %s162, %s164
    %p171 = scmp.eq.s32.totalorder %s34, 1
    %p172 = por %p170, %p171
    %p173 = scmp.ne.s32.totalorder %s164, %s165
    %p174 = scmp.eq.s32.totalorder %s34, 0
    %p175 = por %p173, %p174
    %p176 = scmp.ne.s32.totalorder %s164, %s165
    %p177 = scmp.eq.s32.totalorder %s35, 1
    %p178 = por %p176, %p177
    %p180 = scmp.ne.s32.totalorder %s165, %s179
    %p181 = scmp.eq.s32.totalorder %s35, 0
    %p182 = por %p180, %p181
    %s184 = sadd.s32 %s183, 1
    %p187 = scmp.eq.s32.totalorder %s29, 1
    %p188 = scmp.ne.s32.totalorder %s183, %s185
    %p189 = scmp.eq.s32.totalorder %s29, 0
    %p190 = por %p188, %p189
    %p191 = scmp.ne.s32.totalorder %s183, %s185
    %p192 = scmp.eq.s32.totalorder %s34, 1
    %p193 = por %p191, %p192
    %p194 = scmp.ne.s32.totalorder %s185, %s186
    %p195 = scmp.eq.s32.totalorder %s34, 0
    %p196 = por %p194, %p195
    %p197 = scmp.ne.s32.totalorder %s185, %s186
    %p198 = scmp.eq.s32.totalorder %s35, 1
    %p199 = por %p197, %p198
    %p201 = scmp.ne.s32.totalorder %s186, %s200
    %p202 = scmp.eq.s32.totalorder %s35, 0
    %p203 = por %p201, %p202
    %s205 = sadd.s32 %s204, 1
    %p208 = scmp.eq.s32.totalorder %s29, 1
    %p209 = scmp.ne.s32.totalorder %s204, %s206
    %p210 = scmp.eq.s32.totalorder %s29, 0
    %p211 = por %p209, %p210
    %p212 = scmp.ne.s32.totalorder %s204, %s206
    %p213 = scmp.eq.s32.totalorder %s34, 1
    %p214 = por %p212, %p213
    %p215 = scmp.ne.s32.totalorder %s206, %s207
    %p216 = scmp.eq.s32.totalorder %s34, 0
    %p217 = por %p215, %p216
    %p218 = scmp.ne.s32.totalorder %s206, %s207
    %p219 = scmp.eq.s32.totalorder %s35, 1
    %p220 = por %p218, %p219
    %p222 = scmp.ne.s32.totalorder %s207, %s221
    %p223 = scmp.eq.s32.totalorder %s35, 0
    %p224 = por %p222, %p223
    %s226 = sadd.s32 %s225, 1
    %p229 = scmp.eq.s32.totalorder %s29, 1
    %p230 = scmp.ne.s32.totalorder %s225, %s227
    %p231 = scmp.eq.s32.totalorder %s29, 0
    %p232 = por %p230, %p231
    %p233 = scmp.ne.s32.totalorder %s225, %s227
    %p234 = scmp.eq.s32.totalorder %s34, 1
    %p235 = por %p233, %p234
    %p236 = scmp.ne.s32.totalorder %s227, %s228
    %p237 = scmp.eq.s32.totalorder %s34, 0
    %p238 = por %p236, %p237
    %p239 = scmp.ne.s32.totalorder %s227, %s228
    %p240 = scmp.eq.s32.totalorder %s35, 1
    %p241 = por %p239, %p240
    %p243 = scmp.ne.s32.totalorder %s228, %s242
    %p244 = scmp.eq.s32.totalorder %s35, 0
    %p245 = por %p243, %p244
    %s247 = sadd.s32 %s246, 1
    %p250 = scmp.eq.s32.totalorder %s29, 1
    %p251 = scmp.ne.s32.totalorder %s246, %s248
    %p252 = scmp.eq.s32.totalorder %s29, 0
    %p253 = por %p251, %p252
    %p254 = scmp.ne.s32.totalorder %s246, %s248
    %p255 = scmp.eq.s32.totalorder %s34, 1
    %p256 = por %p254, %p255
    %p257 = scmp.ne.s32.totalorder %s248, %s249
    %p258 = scmp.eq.s32.totalorder %s34, 0
    %p259 = por %p257, %p258
    %p260 = scmp.ne.s32.totalorder %s248, %s249
    %p261 = scmp.eq.s32.totalorder %s35, 1
    %p262 = por %p260, %p261
    %p264 = scmp.ne.s32.totalorder %s249, %s263
    %p265 = scmp.eq.s32.totalorder %s35, 0
    %p266 = por %p264, %p265
    %s268 = sadd.s32 %s267, 1
    %p271 = scmp.eq.s32.totalorder %s29, 1
    %p272 = scmp.ne.s32.totalorder %s267, %s269
    %p273 = scmp.eq.s32.totalorder %s29, 0
    %p274 = por %p272, %p273
    %p275 = scmp.ne.s32.totalorder %s267, %s269
    %p276 = scmp.eq.s32.totalorder %s34, 1
    %p277 = por %p275, %p276
    %p278 = scmp.ne.s32.totalorder %s269, %s270
    %p279 = scmp.eq.s32.totalorder %s34, 0
    %p280 = por %p278, %p279
    %p281 = scmp.ne.s32.totalorder %s269, %s270
    %p282 = scmp.eq.s32.totalorder %s35, 1
    %p283 = por %p281, %p282
    %p285 = scmp.ne.s32.totalorder %s270, %s284
    %p286 = scmp.eq.s32.totalorder %s35, 0
    %p287 = por %p285, %p286
    %s289 = sadd.s32 %s288, 1
    %p292 = scmp.eq.s32.totalorder %s29, 1
    %p293 = scmp.ne.s32.totalorder %s288, %s290
    %p294 = scmp.eq.s32.totalorder %s29, 0
    %p295 = por %p293, %p294
    %p296 = scmp.ne.s32.totalorder %s288, %s290
    %p297 = scmp.eq.s32.totalorder %s34, 1
    %p298 = por %p296, %p297
    %p299 = scmp.ne.s32.totalorder %s290, %s291
    %p300 = scmp.eq.s32.totalorder %s34, 0
    %p301 = por %p299, %p300
    %p302 = scmp.ne.s32.totalorder %s290, %s291
    %p303 = scmp.eq.s32.totalorder %s35, 1
    %p304 = por %p302, %p303
    %p306 = scmp.ne.s32.totalorder %s291, %s305
    %p307 = scmp.eq.s32.totalorder %s35, 0
    %p308 = por %p306, %p307
    %s310 = sadd.s32 %s309, 1
    %p313 = scmp.eq.s32.totalorder %s29, 1
    %p314 = scmp.ne.s32.totalorder %s309, %s311
    %p315 = scmp.eq.s32.totalorder %s29, 0
    %p316 = por %p314, %p315
    %p317 = scmp.ne.s32.totalorder %s309, %s311
    %p318 = scmp.eq.s32.totalorder %s34, 1
    %p319 = por %p317, %p318
    %p320 = scmp.ne.s32.totalorder %s311, %s312
    %p321 = scmp.eq.s32.totalorder %s34, 0
    %p322 = por %p320, %p321
    %p323 = scmp.ne.s32.totalorder %s311, %s312
    %p324 = scmp.eq.s32.totalorder %s35, 1
    %p325 = por %p323, %p324
    %p327 = scmp.ne.s32.totalorder %s312, %s326
    %p328 = scmp.eq.s32.totalorder %s35, 0
    %p329 = por %p327, %p328
    %s331 = sadd.s32 %s330, 1
    %p334 = scmp.eq.s32.totalorder %s29, 1
    %p335 = scmp.ne.s32.totalorder %s330, %s332
    %p336 = scmp.eq.s32.totalorder %s29, 0
    %p337 = por %p335, %p336
    %p338 = scmp.ne.s32.totalorder %s330, %s332
    %p339 = scmp.eq.s32.totalorder %s34, 1
    %p340 = por %p338, %p339
    %p341 = scmp.ne.s32.totalorder %s332, %s333
    %p342 = scmp.eq.s32.totalorder %s34, 0
    %p343 = por %p341, %p342
    %p344 = scmp.ne.s32.totalorder %s332, %s333
    %p345 = scmp.eq.s32.totalorder %s35, 1
    %p346 = por %p344, %p345
    %p348 = scmp.ne.s32.totalorder %s333, %s347
    %p349 = scmp.eq.s32.totalorder %s35, 0
    %p350 = por %p348, %p349
    %s352 = sadd.s32 %s351, 1
    %p355 = scmp.eq.s32.totalorder %s29, 1
    %p356 = scmp.ne.s32.totalorder %s351, %s353
    %p357 = scmp.eq.s32.totalorder %s29, 0
    %p358 = por %p356, %p357
    %p359 = scmp.ne.s32.totalorder %s351, %s353
    %p360 = scmp.eq.s32.totalorder %s34, 1
    %p361 = por %p359, %p360
    %p362 = scmp.ne.s32.totalorder %s353, %s354
    %p363 = scmp.eq.s32.totalorder %s34, 0
    %p364 = por %p362, %p363
    %p365 = scmp.ne.s32.totalorder %s353, %s354
    %p366 = scmp.eq.s32.totalorder %s35, 1
    %p367 = por %p365, %p366
    %p369 = scmp.ne.s32.totalorder %s354, %s368
    %p370 = scmp.eq.s32.totalorder %s35, 0
    %p371 = por %p369, %p370
    %s373 = sadd.s32 %s372, 1
    %p376 = scmp.eq.s32.totalorder %s29, 1
    %p377 = scmp.ne.s32.totalorder %s372, %s374
    %p378 = scmp.eq.s32.totalorder %s29, 0
    %p379 = por %p377, %p378
    %p380 = scmp.ne.s32.totalorder %s372, %s374
    %p381 = scmp.eq.s32.totalorder %s34, 1
    %p382 = por %p380, %p381
    %p383 = scmp.ne.s32.totalorder %s374, %s375
    %p384 = scmp.eq.s32.totalorder %s34, 0
    %p385 = por %p383, %p384
    %p386 = scmp.ne.s32.totalorder %s374, %s375
    %p387 = scmp.eq.s32.totalorder %s35, 1
    %p388 = por %p386, %p387
    %p390 = scmp.ne.s32.totalorder %s375, %s389
    %p391 = scmp.eq.s32.totalorder %s35, 0
    %p392 = por %p390, %p391
    %s394 = sadd.s32 %s393, 1
    %p397 = scmp.eq.s32.totalorder %s29, 1
    %p398 = scmp.ne.s32.totalorder %s393, %s395
    %p399 = scmp.eq.s32.totalorder %s29, 0
    %p400 = por %p398, %p399
    %p401 = scmp.ne.s32.totalorder %s393, %s395
    %p402 = scmp.eq.s32.totalorder %s34, 1
    %p403 = por %p401, %p402
    %p404 = scmp.ne.s32.totalorder %s395, %s396
    %p405 = scmp.eq.s32.totalorder %s34, 0
    %p406 = por %p404, %p405
    %p407 = scmp.ne.s32.totalorder %s395, %s396
    %p408 = scmp.eq.s32.totalorder %s35, 1
    %p409 = por %p407, %p408
    %p411 = scmp.ne.s32.totalorder %s396, %s410
    %p412 = scmp.eq.s32.totalorder %s35, 0
    %p413 = por %p411, %p412
    %s415 = sadd.s32 %s414, 1
    %p418 = scmp.eq.s32.totalorder %s29, 1
    %p419 = scmp.ne.s32.totalorder %s414, %s416
    %p420 = scmp.eq.s32.totalorder %s29, 0
    %p421 = por %p419, %p420
    %p422 = scmp.ne.s32.totalorder %s414, %s416
    %p423 = scmp.eq.s32.totalorder %s34, 1
    %p424 = por %p422, %p423
    %p425 = scmp.ne.s32.totalorder %s416, %s417
    %p426 = scmp.eq.s32.totalorder %s34, 0
    %p427 = por %p425, %p426
    %p428 = scmp.ne.s32.totalorder %s416, %s417
    %p429 = scmp.eq.s32.totalorder %s35, 1
    %p430 = por %p428, %p429
    %p432 = scmp.ne.s32.totalorder %s417, %s431
    %p433 = scmp.eq.s32.totalorder %s35, 0
    %p434 = por %p432, %p433
    %s436 = sadd.s32 %s435, 1
    %p439 = scmp.eq.s32.totalorder %s29, 1
    %p440 = scmp.ne.s32.totalorder %s435, %s437
    %p441 = scmp.eq.s32.totalorder %s29, 0
    %p442 = por %p440, %p441
    %p443 = scmp.ne.s32.totalorder %s435, %s437
    %p444 = scmp.eq.s32.totalorder %s34, 1
    %p445 = por %p443, %p444
    %p446 = scmp.ne.s32.totalorder %s437, %s438
    %p447 = scmp.eq.s32.totalorder %s34, 0
    %p448 = por %p446, %p447
    %p449 = scmp.ne.s32.totalorder %s437, %s438
    %p450 = scmp.eq.s32.totalorder %s35, 1
    %p451 = por %p449, %p450
    %p453 = scmp.ne.s32.totalorder %s438, %s452
    %p454 = scmp.eq.s32.totalorder %s35, 0
    %p455 = por %p453, %p454
    %s457 = sadd.s32 %s456, 1
    %p460 = scmp.eq.s32.totalorder %s29, 1
    %p461 = scmp.ne.s32.totalorder %s456, %s458
    %p462 = scmp.eq.s32.totalorder %s29, 0
    %p463 = por %p461, %p462
    %p464 = scmp.ne.s32.totalorder %s456, %s458
    %p465 = scmp.eq.s32.totalorder %s34, 1
    %p466 = por %p464, %p465
    %p467 = scmp.ne.s32.totalorder %s458, %s459
    %p468 = scmp.eq.s32.totalorder %s34, 0
    %p469 = por %p467, %p468
    %p470 = scmp.ne.s32.totalorder %s458, %s459
    %p471 = scmp.eq.s32.totalorder %s35, 1
    %p472 = por %p470, %p471
    %p474 = scmp.ne.s32.totalorder %s459, %s473
    %p475 = scmp.eq.s32.totalorder %s35, 0
    %p476 = por %p474, %p475
    %s478 = sadd.s32 %s477, 1
    %p481 = scmp.eq.s32.totalorder %s29, 1
    %p482 = scmp.ne.s32.totalorder %s477, %s479
    %p483 = scmp.eq.s32.totalorder %s29, 0
    %p484 = por %p482, %p483
    %p485 = scmp.ne.s32.totalorder %s477, %s479
    %p486 = scmp.eq.s32.totalorder %s34, 1
    %p487 = por %p485, %p486
    %p488 = scmp.ne.s32.totalorder %s479, %s480
    %p489 = scmp.eq.s32.totalorder %s34, 0
    %p490 = por %p488, %p489
    %p491 = scmp.ne.s32.totalorder %s479, %s480
    %p492 = scmp.eq.s32.totalorder %s35, 1
    %p493 = por %p491, %p492
    %p495 = scmp.ne.s32.totalorder %s480, %s494
    %p496 = scmp.eq.s32.totalorder %s35, 0
    %p497 = por %p495, %p496
    %s498 = ssub.s32 %s29, %s36
    %p499 = scmp.eq.s32.totalorder %s498, 0
    %s501 = sadd.s32 %s500, 1
    %s502 = scalar_select %p499, %s500, %s501
    %p505 = pneg %p499
    %p506 = scmp.eq.s32.totalorder %s29, 1
    %p507 = por %p505, %p506
    %p508 = scmp.ne.s32.totalorder %s500, %s503
    %p509 = scmp.eq.s32.totalorder %s29, 0
    %p510 = por %p508, %p509
    %p511 = scmp.ne.s32.totalorder %s500, %s503
    %p512 = scmp.eq.s32.totalorder %s34, 1
    %p513 = por %p511, %p512
    %p514 = scmp.ne.s32.totalorder %s503, %s504
    %p515 = scmp.eq.s32.totalorder %s34, 0
    %p516 = por %p514, %p515
    %p517 = scmp.ne.s32.totalorder %s503, %s504
    %p518 = scmp.eq.s32.totalorder %s35, 1
    %p519 = por %p517, %p518
    %p521 = scmp.ne.s32.totalorder %s504, %s520
    %p522 = scmp.eq.s32.totalorder %s35, 0
    %p523 = por %p521, %p522
    %p524 = scmp.le.s32.totalorder 1, %s29
    %p525 = scmp.lt.s32.totalorder %s29, 3
    %p526 = pnand %p524, %p525
    %p527 = pneg %p526
    // Predicated region
    $region9: #{lm_relation_net_forward.1} parent=5 // pred_check
      _
    $region10: #{lm_relation_net_forward.1} parent=5 // pred_check_branch
      %529 = sbr.rel (%p526) target = $region12
    $region11: #{lm_relation_net_forward.1} parent=5 // pred_region
      %s530 = ssub.s32 %s29, 1
      // Predicated region
      $region13: #{lm_relation_net_forward.1} parent=11 // pred_check
        %p531 = pneg %p154
      $region14: #{lm_relation_net_forward.1} parent=11 // pred_check_branch
        %533 = sbr.rel (%p531) target = $region16
      $region15: #{lm_relation_net_forward.1} parent=11 // pred_region
        _
      $region16: #{lm_relation_net_forward.1} parent=11 // pred_fallthru
        _
      // Predicated region
      $region17: #{lm_relation_net_forward.1} parent=11 // pred_check
        %p534 = pneg %p175
      $region18: #{lm_relation_net_forward.1} parent=11 // pred_check_branch
        %536 = sbr.rel (%p534) target = $region20
      $region19: #{lm_relation_net_forward.1} parent=11 // pred_region
        _
      $region20: #{lm_relation_net_forward.1} parent=11 // pred_fallthru
        _
      // Predicated region
      $region21: #{lm_relation_net_forward.1} parent=11 // pred_check
        %p537 = pneg %p196
      $region22: #{lm_relation_net_forward.1} parent=11 // pred_check_branch
        %539 = sbr.rel (%p537) target = $region24
      $region23: #{lm_relation_net_forward.1} parent=11 // pred_region
        _
      $region24: #{lm_relation_net_forward.1} parent=11 // pred_fallthru
        _
      // Predicated region
      $region25: #{lm_relation_net_forward.1} parent=11 // pred_check
        %p540 = pneg %p217
      $region26: #{lm_relation_net_forward.1} parent=11 // pred_check_branch
        %542 = sbr.rel (%p540) target = $region28
      $region27: #{lm_relation_net_forward.1} parent=11 // pred_region
        _
      $region28: #{lm_relation_net_forward.1} parent=11 // pred_fallthru
        _
      // Predicated region
      $region29: #{lm_relation_net_forward.1} parent=11 // pred_check
        %p543 = pneg %p238
      $region30: #{lm_relation_net_forward.1} parent=11 // pred_check_branch
        %545 = sbr.rel (%p543) target = $region32
      $region31: #{lm_relation_net_forward.1} parent=11 // pred_region
        _
      $region32: #{lm_relation_net_forward.1} parent=11 // pred_fallthru
        _
      // Predicated region
      $region33: #{lm_relation_net_forward.1} parent=11 // pred_check
        %p546 = pneg %p259
      $region34: #{lm_relation_net_forward.1} parent=11 // pred_check_branch
        %548 = sbr.rel (%p546) target = $region36
      $region35: #{lm_relation_net_forward.1} parent=11 // pred_region
        _
      $region36: #{lm_relation_net_forward.1} parent=11 // pred_fallthru
        _
      // Predicated region
      $region37: #{lm_relation_net_forward.1} parent=11 // pred_check
        %p549 = pneg %p280
      $region38: #{lm_relation_net_forward.1} parent=11 // pred_check_branch
        %551 = sbr.rel (%p549) target = $region40
      $region39: #{lm_relation_net_forward.1} parent=11 // pred_region
        _
      $region40: #{lm_relation_net_forward.1} parent=11 // pred_fallthru
        _
      // Predicated region
      $region41: #{lm_relation_net_forward.1} parent=11 // pred_check
        %p552 = pneg %p301
      $region42: #{lm_relation_net_forward.1} parent=11 // pred_check_branch
        %554 = sbr.rel (%p552) target = $region44
      $region43: #{lm_relation_net_forward.1} parent=11 // pred_region
        _
      $region44: #{lm_relation_net_forward.1} parent=11 // pred_fallthru
        _
      // Predicated region
      $region45: #{lm_relation_net_forward.1} parent=11 // pred_check
        %p555 = pneg %p322
      $region46: #{lm_relation_net_forward.1} parent=11 // pred_check_branch
        %557 = sbr.rel (%p555) target = $region48
      $region47: #{lm_relation_net_forward.1} parent=11 // pred_region
        _
      $region48: #{lm_relation_net_forward.1} parent=11 // pred_fallthru
        _
      // Predicated region
      $region49: #{lm_relation_net_forward.1} parent=11 // pred_check
        %p558 = pneg %p343
      $region50: #{lm_relation_net_forward.1} parent=11 // pred_check_branch
        %560 = sbr.rel (%p558) target = $region52
      $region51: #{lm_relation_net_forward.1} parent=11 // pred_region
        _
      $region52: #{lm_relation_net_forward.1} parent=11 // pred_fallthru
        _
      // Predicated region
      $region53: #{lm_relation_net_forward.1} parent=11 // pred_check
        %p561 = pneg %p364
      $region54: #{lm_relation_net_forward.1} parent=11 // pred_check_branch
        %563 = sbr.rel (%p561) target = $region56
      $region55: #{lm_relation_net_forward.1} parent=11 // pred_region
        _
      $region56: #{lm_relation_net_forward.1} parent=11 // pred_fallthru
        _
      // Predicated region
      $region57: #{lm_relation_net_forward.1} parent=11 // pred_check
        %p564 = pneg %p385
      $region58: #{lm_relation_net_forward.1} parent=11 // pred_check_branch
        %566 = sbr.rel (%p564) target = $region60
      $region59: #{lm_relation_net_forward.1} parent=11 // pred_region
        _
      $region60: #{lm_relation_net_forward.1} parent=11 // pred_fallthru
        _
      // Predicated region
      $region61: #{lm_relation_net_forward.1} parent=11 // pred_check
        %p567 = pneg %p406
      $region62: #{lm_relation_net_forward.1} parent=11 // pred_check_branch
        %569 = sbr.rel (%p567) target = $region64
      $region63: #{lm_relation_net_forward.1} parent=11 // pred_region
        _
      $region64: #{lm_relation_net_forward.1} parent=11 // pred_fallthru
        _
      // Predicated region
      $region65: #{lm_relation_net_forward.1} parent=11 // pred_check
        %p570 = pneg %p427
      $region66: #{lm_relation_net_forward.1} parent=11 // pred_check_branch
        %572 = sbr.rel (%p570) target = $region68
      $region67: #{lm_relation_net_forward.1} parent=11 // pred_region
        _
      $region68: #{lm_relation_net_forward.1} parent=11 // pred_fallthru
        _
      // Predicated region
      $region69: #{lm_relation_net_forward.1} parent=11 // pred_check
        %p573 = pneg %p448
      $region70: #{lm_relation_net_forward.1} parent=11 // pred_check_branch
        %575 = sbr.rel (%p573) target = $region72
      $region71: #{lm_relation_net_forward.1} parent=11 // pred_region
        _
      $region72: #{lm_relation_net_forward.1} parent=11 // pred_fallthru
        _
      // Predicated region
      $region73: #{lm_relation_net_forward.1} parent=11 // pred_check
        %p576 = pneg %p469
      $region74: #{lm_relation_net_forward.1} parent=11 // pred_check_branch
        %578 = sbr.rel (%p576) target = $region76
      $region75: #{lm_relation_net_forward.1} parent=11 // pred_region
        _
      $region76: #{lm_relation_net_forward.1} parent=11 // pred_fallthru
        _
      // Predicated region
      $region77: #{lm_relation_net_forward.1} parent=11 // pred_check
        %p579 = pneg %p490
      $region78: #{lm_relation_net_forward.1} parent=11 // pred_check_branch
        %581 = sbr.rel (%p579) target = $region80
      $region79: #{lm_relation_net_forward.1} parent=11 // pred_region
        _
      $region80: #{lm_relation_net_forward.1} parent=11 // pred_fallthru
        _
    $region12: #{lm_relation_net_forward.1} parent=5 // pred_fallthru
      _
    %p582 = scmp.lt.s32.totalorder %s29, 2
    // Predicated region
    $region81: #{lm_relation_net_forward.1} parent=5 // pred_check
      %p583 = pneg %p582
    $region82: #{lm_relation_net_forward.1} parent=5 // pred_check_branch
      %585 = sbr.rel (%p583) target = $region84
    $region83: #{lm_relation_net_forward.1} parent=5 // pred_region
      // Predicated region
      $region85: #{lm_relation_net_forward.1} parent=83 // pred_check
        %p586 = pneg %p49
      $region86: #{lm_relation_net_forward.1} parent=83 // pred_check_branch
        %588 = sbr.rel (%p586) target = $region88
      $region87: #{lm_relation_net_forward.1} parent=83 // pred_region
        %p589 = scmp.lt.s32.totalorder %s29, 1
        %s590 = scalar_select %p589, %s29, 1
        %s591 = smul.addr %s590, 8
        %s592 = scalar_lea.vmem %s0, %s591
      $region88: #{lm_relation_net_forward.1} parent=83 // pred_fallthru
        _
      // Predicated region
      $region89: #{lm_relation_net_forward.1} parent=83 // pred_check
        %p593 = pneg %p75
      $region90: #{lm_relation_net_forward.1} parent=83 // pred_check_branch
        %595 = sbr.rel (%p593) target = $region92
      $region91: #{lm_relation_net_forward.1} parent=83 // pred_region
        %s596 = smul.u32 4, %s29
        %p597 = scmp.lt.s32.totalorder %s596, 7
        %s598 = scalar_select %p597, %s596, 7
        %s599 = smul.addr %s598, 4
        %s600 = scalar_lea.vmem %s1, %s599
        %s601 = smul.u32 4, %s29
      $region92: #{lm_relation_net_forward.1} parent=83 // pred_fallthru
        _
      // Predicated region
      $region93: #{lm_relation_net_forward.1} parent=83 // pred_check
        %p602 = pneg %p101
      $region94: #{lm_relation_net_forward.1} parent=83 // pred_check_branch
        %604 = sbr.rel (%p602) target = $region96
      $region95: #{lm_relation_net_forward.1} parent=83 // pred_region
        %s605 = smul.u32 8, %s29
        %p606 = scmp.lt.s32.totalorder %s605, 15
        %s607 = scalar_select %p606, %s605, 15
        %s608 = smul.addr %s607, 4
        %s609 = scalar_lea.vmem %s2, %s608
        %s610 = smul.u32 8, %s29
      $region96: #{lm_relation_net_forward.1} parent=83 // pred_fallthru
        _
      // Predicated region
      $region97: #{lm_relation_net_forward.1} parent=83 // pred_check
        %p611 = pneg %p127
      $region98: #{lm_relation_net_forward.1} parent=83 // pred_check_branch
        %613 = sbr.rel (%p611) target = $region100
      $region99: #{lm_relation_net_forward.1} parent=83 // pred_region
        %p614 = scmp.lt.s32.totalorder %s29, 1
        %s615 = scalar_select %p614, %s29, 1
        %s616 = smul.addr %s615, 8
        %s617 = scalar_lea.vmem %s3, %s616
      $region100: #{lm_relation_net_forward.1} parent=83 // pred_fallthru
        _
    $region84: #{lm_relation_net_forward.1} parent=5 // pred_fallthru
      _
    %p618 = scmp.le.s32.totalorder 1, %s29
    %p619 = scmp.lt.s32.totalorder %s29, 3
    %p620 = pnand %p618, %p619
    %p621 = pneg %p620
    // Predicated region
    $region101: #{lm_relation_net_forward.1} parent=5 // pred_check
      _
    $region102: #{lm_relation_net_forward.1} parent=5 // pred_check_branch
      %623 = sbr.rel (%p620) target = $region104
    $region103: #{lm_relation_net_forward.1} parent=5 // pred_region
      %s624 = ssub.s32 %s29, 1
      %p625 = scmp.lt.s32.totalorder %s34, 1
      %s626 = scalar_select %p625, %s34, 1
      %s627 = smul.addr %s626, 8
      %s628 = scalar_lea.vmem %s0, %s627
      %p629 = pneg %p55
      %p630 = pneg %p52
      %s631 = smul.u32 4, %s34
      %p632 = scmp.lt.s32.totalorder %s631, 7
      %s633 = scalar_select %p632, %s631, 7
      %s634 = smul.addr %s633, 4
      %s635 = scalar_lea.vmem %s1, %s634
      %p636 = pneg %p81
      %p637 = pneg %p78
      %s638 = smul.u32 8, %s34
      %p639 = scmp.lt.s32.totalorder %s638, 15
      %s640 = scalar_select %p639, %s638, 15
      %s641 = smul.addr %s640, 4
      %s642 = scalar_lea.vmem %s2, %s641
      %p643 = pneg %p107
      %p644 = pneg %p104
      %p645 = scmp.lt.s32.totalorder %s34, 1
      %s646 = scalar_select %p645, %s34, 1
      %s647 = smul.addr %s646, 8
      %s648 = scalar_lea.vmem %s3, %s647
      %p649 = pneg %p133
      %p650 = pneg %p130
      %p651 = pneg %p154
      %p652 = pneg %p151
      %p653 = pneg %p175
      %p654 = pneg %p172
      %p655 = pneg %p196
      %p656 = pneg %p193
      %p657 = pneg %p217
      %p658 = pneg %p214
      %p659 = pneg %p238
      %p660 = pneg %p235
      %p661 = pneg %p259
      %p662 = pneg %p256
      %p663 = pneg %p280
      %p664 = pneg %p277
      %p665 = pneg %p301
      %p666 = pneg %p298
      %p667 = pneg %p322
      %p668 = pneg %p319
      %p669 = pneg %p343
      %p670 = pneg %p340
      %p671 = pneg %p364
      %p672 = pneg %p361
      %p673 = pneg %p385
      %p674 = pneg %p382
      %p675 = pneg %p406
      %p676 = pneg %p403
      %p677 = pneg %p427
      %p678 = pneg %p424
      %p679 = pneg %p448
      %p680 = pneg %p445
      %p681 = pneg %p469
      %p682 = pneg %p466
      %p683 = pneg %p490
      %p684 = pneg %p487
      %p685 = pneg %p516
      %p686 = pneg %p513
      %p687 = scmp.lt.s32.totalorder %s34, 1
      %s688 = scalar_select %p687, %s34, 1
      %s689 = smul.addr %s688, 8
      %s690 = scalar_lea.vmem %s21, %s689
      %p691 = scmp.lt.s32.totalorder %s34, 1
      %s692 = scalar_select %p691, %s34, 1
      %s693 = smul.addr %s692, 8
      %s694 = scalar_lea.vmem %s0, %s693
      %s695 = smul.u32 4, %s34
      %p696 = scmp.lt.s32.totalorder %s695, 7
      %s697 = scalar_select %p696, %s695, 7
      %s698 = smul.addr %s697, 4
      %s699 = scalar_lea.vmem %s1, %s698
      %s700 = smul.u32 4, %s34
      %s701 = smul.u32 8, %s34
      %p702 = scmp.lt.s32.totalorder %s701, 15
      %s703 = scalar_select %p702, %s701, 15
      %s704 = smul.addr %s703, 4
      %s705 = scalar_lea.vmem %s2, %s704
      %s706 = smul.u32 8, %s34
      %p707 = scmp.lt.s32.totalorder %s34, 1
      %s708 = scalar_select %p707, %s34, 1
      %s709 = smul.addr %s708, 8
      %s710 = scalar_lea.vmem %s3, %s709
      %p711 = scmp.lt.s32.totalorder %s34, 1
      %s712 = scalar_select %p711, %s34, 1
      %s713 = smul.addr %s712, 8
      %s714 = scalar_lea.vmem %s21, %s713
      %v716 = vld [vmem:[%s694] sm:$0xff]
      %v717 = vld [vmem:[%s699] sm:$0xf]
      %v718 = vld [vmem:[%s699 + $0x4] sm:$0xf]
      %v719 = vld [vmem:[%s699 + $0x8] sm:$0xf]
      %v720 = vld [vmem:[%s699 + $0xc] sm:$0xf]
      %v721 = vld [vmem:[%s5] sm:$0xf]
      %v722 = vld [vmem:[%s5 + $0x4] sm:$0xf]
      %v723 = vld [vmem:[%s5 + $0x8] sm:$0xf]
      %v724 = vld [vmem:[%s5 + $0xc] sm:$0xf]
      %v725 = vld [vmem:[%s6] sm:$0x1]
      %v727 = vlaneseq
      %v728 = vshrl.u32 %v727, 7
      %v729 = vsub.s32 0, %v728
      %v730 = vrot.slane %v725, %v729
      %v736 = vunpack.c.l.b16 %v717
      %v737 = vunpack.c.l.b16 %v718
      %v738 = vunpack.c.l.b16 %v719
      %v739 = vunpack.c.l.b16 %v720
      %v740 = vpack.c.b16 %v737, %v736
      %v741 = vpack.c.b16 %v739, %v738
      %v746 = vunpack.c.l.b16 %v721
      %v747 = vunpack.c.l.b16 %v722
      %v748 = vunpack.c.l.b16 %v723
      %v749 = vunpack.c.l.b16 %v724
      %v750 = vpack.c.b16 %v747, %v746
      %v751 = vpack.c.b16 %v749, %v748
      %vm754 = vcmask 261120
      %v756 = vsel %vm754, %v740, 0
      %v759 = vsel %vm754, %v741, 0
      %761 = vmatprep.subr.bf16.mxu0 0
      %762 = vmatpush1.bf16.msra.mxu0 0
      %763 = vmatprep.subr.bf16.mxu0 0
      %764 = vmatpush1.bf16.msra.mxu0 0
      %765 = vmatprep.subr.bf16.mxu0 0
      %766 = vmatpush1.bf16.msra.mxu0 0
      %767 = vmatprep.subr.bf16.mxu0 0
      %768 = vmatpush1.bf16.msra.mxu0 0
      %769 = vmatprep.subr.bf16.mxu0 0
      %770 = vmatpush1.bf16.msra.mxu0 0
      %771 = vmatprep.subr.bf16.mxu0 0
      %772 = vmatpush1.bf16.msra.mxu0 0
      %773 = vmatprep.subr.bf16.mxu0 0
      %774 = vmatpush1.bf16.msra.mxu0 %v751
      %775 = vmatprep.subr.bf16.mxu0 0
      %776 = vmatpush1.bf16.msra.mxu0 %v750
      %777 = vmatprep.subr.bf16.mxu0 0
      %778 = vmatpush2.bf16.msra.mxu0 0
      %779 = vmatprep.subr.bf16.mxu0 0
      %780 = vmatpush2.bf16.msra.mxu0 0
      %781 = vmatprep.subr.bf16.mxu0 0
      %782 = vmatpush2.bf16.msra.mxu0 0
      %783 = vmatprep.subr.bf16.mxu0 0
      %784 = vmatpush2.bf16.msra.mxu0 0
      %785 = vmatprep.subr.bf16.mxu0 0
      %786 = vmatpush2.bf16.msra.mxu0 0
      %787 = vmatprep.subr.bf16.mxu0 0
      %788 = vmatpush2.bf16.msra.mxu0 0
      %789 = vmatprep.subr.bf16.mxu0 0
      %790 = vmatpush2.bf16.msra.mxu0 0
      %791 = vmatprep.subr.bf16.mxu0 0
      %792 = vmatpush2.bf16.msra.mxu0 0
      %793 = vmatprep.mubr.bf16.mxu0 0
      %794 = vmatmul.mubr.bf16.gmra.mxu0 %v756
      %v795 = vpop.f32.mrf.mxu0
      %v796 = vadd.f32 %v730, %v795
      %v797 = vpop.f32.mrf.mxu0
      %v798 = vpop.f32.mrf.mxu0
      %v799 = vadd.f32 %v730, %v798
      %v800 = vpop.f32.mrf.mxu0
      %801 = vmatprep.mubr.bf16.mxu0 0
      %802 = vmatmul.mubr.bf16.gmra.mxu0 %v759
      %v803 = vpop.f32.mrf.mxu0
      %v804 = vadd.f32 %v730, %v803
      %v805 = vpop.f32.mrf.mxu0
      %v806 = vpop.f32.mrf.mxu0
      %v807 = vadd.f32 %v730, %v806
      %v808 = vpop.f32.mrf.mxu0
      %809 = vdwg.mxu0
      %v810 = vtanh.pop %v796
      %v811 = vtanh.pop %v799
      %v812 = vtanh.pop %v804
      %v813 = vtanh.pop %v807
      %v814 = vld [vmem:[%s4] sm:$0xff]
      %v816 = vsel %vm754, %v716, 0
      %v819 = vsel %vm754, %v810, 0
      %v822 = vsel %vm754, %v811, 0
      %v825 = vsel %vm754, %v812, 0
      %v828 = vsel %vm754, %v813, 0
      %830 = vmatprep.subr.mxu0 0.0
      %831 = vmatpush1.xpose.msra.mxu0 0.0
      %832 = vmatprep.subr.mxu0 0.0
      %833 = vmatpush1.xpose.msra.mxu0 0.0
      %834 = vmatprep.subr.mxu0 0.0
      %835 = vmatpush1.xpose.msra.mxu0 0.0
      %836 = vmatprep.subr.mxu0 0.0
      %837 = vmatpush1.xpose.msra.mxu0 0.0
      %838 = vmatprep.subr.mxu0 0.0
      %839 = vmatpush1.xpose.msra.mxu0 0.0
      %840 = vmatprep.subr.mxu0 0.0
      %841 = vmatpush1.xpose.msra.mxu0 0.0
      %842 = vmatprep.subr.mxu0 0.0
      %843 = vmatpush1.xpose.msra.mxu0 0.0
      %844 = vmatprep.subr.mxu0 0.0
      %845 = vmatpush1.xpose.msra.mxu0 0.0
      %846 = vmatprep.subr.mxu0 0.0
      %847 = vmatpush1.xpose.msra.mxu0 0.0
      %848 = vmatprep.subr.mxu0 0.0
      %849 = vmatpush1.xpose.msra.mxu0 0.0
      %850 = vmatprep.subr.mxu0 0.0
      %851 = vmatpush1.xpose.msra.mxu0 0.0
      %852 = vmatprep.subr.mxu0 0.0
      %853 = vmatpush1.xpose.msra.mxu0 0.0
      %854 = vmatprep.subr.mxu0 0.0
      %855 = vmatpush1.xpose.msra.mxu0 %v828
      %856 = vmatprep.subr.mxu0 0.0
      %857 = vmatpush1.xpose.msra.mxu0 %v825
      %858 = vmatprep.subr.mxu0 0.0
      %859 = vmatpush1.xpose.msra.mxu0 %v822
      %860 = vmatprep.subr.mxu0 0.0
      %861 = vmatpush1.xpose.msra.mxu0 %v819
      %862 = vmatprep.subr.mxu0 0.0
      %863 = vmatpush2.xpose.msra.mxu0 0.0
      %864 = vmatprep.subr.mxu0 0.0
      %865 = vmatpush2.xpose.msra.mxu0 0.0
      %866 = vmatprep.subr.mxu0 0.0
      %867 = vmatpush2.xpose.msra.mxu0 0.0
      %868 = vmatprep.subr.mxu0 0.0
      %869 = vmatpush2.xpose.msra.mxu0 0.0
      %870 = vmatprep.subr.mxu0 0.0
      %871 = vmatpush2.xpose.msra.mxu0 0.0
      %872 = vmatprep.subr.mxu0 0.0
      %873 = vmatpush2.xpose.msra.mxu0 0.0
      %874 = vmatprep.subr.mxu0 0.0
      %875 = vmatpush2.xpose.msra.mxu0 0.0
      %876 = vmatprep.subr.mxu0 0.0
      %877 = vmatpush2.xpose.msra.mxu0 0.0
      %878 = vmatprep.subr.mxu0 0.0
      %879 = vmatpush2.xpose.msra.mxu0 0.0
      %880 = vmatprep.subr.mxu0 0.0
      %881 = vmatpush2.xpose.msra.mxu0 0.0
      %882 = vmatprep.subr.mxu0 0.0
      %883 = vmatpush2.xpose.msra.mxu0 0.0
      %884 = vmatprep.subr.mxu0 0.0
      %885 = vmatpush2.xpose.msra.mxu0 0.0
      %886 = vmatprep.subr.mxu0 0.0
      %887 = vmatpush2.xpose.msra.mxu0 0.0
      %888 = vmatprep.subr.mxu0 0.0
      %889 = vmatpush2.xpose.msra.mxu0 0.0
      %890 = vmatprep.subr.mxu0 0.0
      %891 = vmatpush2.xpose.msra.mxu0 0.0
      %892 = vmatprep.subr.mxu0 0.0
      %893 = vmatpush2.xpose.msra.mxu0 0.0
      %894 = vmatprep.mubr.f32.mxu0 0.0
      %895 = vmatmul.mubr.f32.gmra.mxu0 %v816
      %v896 = vpop.f32.mrf.mxu0
      %v897 = vadd.f32 %v814, %v896
      %v898 = vpop.f32.mrf.mxu0
      %899 = vdwg.mxu0
      %v900 = vsel %vm754, %v897, -inf
      %901 = vmax.xlane.f32.xlu0 %v900
      %v902 = vpop.xlane.xlu0 %901
      %v903 = vsub.f32 %v897, %v902
      %v904 = vmul.f32 %v903, 1.442695
      %v905 = vpow.pop %v904
      %v906 = vsel %vm754, %v905, 0.0
      %907 = vadd.xlane.f32.xlu0 %v906
      %v908 = vpop.xlane.xlu0 %907
      %v909 = vrcp.pop %v908
      %v910 = vmul.f32 %v905, %v909
      %v911 = vpack.c.bf16 %v910, %v910
      %v915 = vsel %vm754, %v911, 0
      %917 = vmatprep.subr.bf16.mxu0 0
      %918 = vmatpush1.bf16.msra.mxu0 0
      %919 = vmatprep.subr.bf16.mxu0 0
      %920 = vmatpush1.bf16.msra.mxu0 0
      %921 = vmatprep.subr.bf16.mxu0 0
      %922 = vmatpush1.bf16.msra.mxu0 0
      %923 = vmatprep.subr.bf16.mxu0 0
      %924 = vmatpush1.bf16.msra.mxu0 0
      %925 = vmatprep.subr.bf16.mxu0 0
      %926 = vmatpush1.bf16.msra.mxu0 0
      %927 = vmatprep.subr.bf16.mxu0 0
      %928 = vmatpush1.bf16.msra.mxu0 0
      %929 = vmatprep.subr.bf16.mxu0 0
      %930 = vmatpush1.bf16.msra.mxu0 %v741
      %931 = vmatprep.subr.bf16.mxu0 0
      %932 = vmatpush1.bf16.msra.mxu0 %v740
      %933 = vmatprep.subr.bf16.mxu0 0
      %934 = vmatpush2.bf16.msra.mxu0 0
      %935 = vmatprep.subr.bf16.mxu0 0
      %936 = vmatpush2.bf16.msra.mxu0 0
      %937 = vmatprep.subr.bf16.mxu0 0
      %938 = vmatpush2.bf16.msra.mxu0 0
      %939 = vmatprep.subr.bf16.mxu0 0
      %940 = vmatpush2.bf16.msra.mxu0 0
      %941 = vmatprep.subr.bf16.mxu0 0
      %942 = vmatpush2.bf16.msra.mxu0 0
      %943 = vmatprep.subr.bf16.mxu0 0
      %944 = vmatpush2.bf16.msra.mxu0 0
      %945 = vmatprep.subr.bf16.mxu0 0
      %946 = vmatpush2.bf16.msra.mxu0 0
      %947 = vmatprep.subr.bf16.mxu0 0
      %948 = vmatpush2.bf16.msra.mxu0 0
      %949 = vmatprep.mubr.bf16.mxu0 0
      %950 = vmatmul.mubr.bf16.gmra.mxu0 %v915
      %v951 = vpop.f32.mrf.mxu0
      %v952 = vadd.f32 0.0, %v951
      %v953 = vpop.f32.mrf.mxu0
      %v954 = vpop.f32.mrf.mxu0
      %v955 = vpop.f32.mrf.mxu0
      %956 = vdwg.mxu0
      %v957 = vld [vmem:[%s705] sm:$0xf]
      %v958 = vld [vmem:[%s705 + $0x4] sm:$0xf]
      %v959 = vld [vmem:[%s705 + $0x8] sm:$0xf]
      %v960 = vld [vmem:[%s705 + $0xc] sm:$0xf]
      %v961 = vld [vmem:[%s705 + $0x10] sm:$0xf]
      %v962 = vld [vmem:[%s705 + $0x14] sm:$0xf]
      %v963 = vld [vmem:[%s705 + $0x18] sm:$0xf]
      %v964 = vld [vmem:[%s705 + $0x1c] sm:$0xf]
      %v965 = vld [vmem:[%s7] sm:$0xf]
      %v966 = vld [vmem:[%s7 + $0x4] sm:$0xf]
      %v967 = vld [vmem:[%s7 + $0x8] sm:$0xf]
      %v968 = vld [vmem:[%s7 + $0xc] sm:$0xf]
      %v969 = vld [vmem:[%s7 + $0x10] sm:$0xf]
      %v970 = vld [vmem:[%s7 + $0x14] sm:$0xf]
      %v971 = vld [vmem:[%s8] sm:$0x1]
      %v973 = vlaneseq
      %v974 = vshrl.u32 %v973, 7
      %v975 = vsub.s32 0, %v974
      %v976 = vrot.slane %v971, %v975
      %v986 = vunpack.c.l.b16 %v957
      %v987 = vunpack.c.l.b16 %v958
      %v988 = vunpack.c.l.b16 %v959
      %v989 = vunpack.c.l.b16 %v960
      %v990 = vunpack.c.l.b16 %v961
      %v991 = vunpack.c.l.b16 %v962
      %v992 = vunpack.c.l.b16 %v963
      %v993 = vunpack.c.l.b16 %v964
      %v994 = vpack.c.b16 %v987, %v986
      %v995 = vpack.c.b16 %v989, %v988
      %v996 = vpack.c.b16 %v991, %v990
      %v997 = vpack.c.b16 %v993, %v992
      %v1004 = vunpack.c.l.b16 %v965
      %v1005 = vunpack.c.l.b16 %v966
      %v1006 = vunpack.c.l.b16 %v967
      %v1007 = vunpack.c.l.b16 %v968
      %v1008 = vunpack.c.l.b16 %v969
      %v1009 = vunpack.c.l.b16 %v970
      %v1010 = vpack.c.b16 %v1005, %v1004
      %v1011 = vpack.c.b16 %v1007, %v1006
      %v1012 = vpack.c.b16 %v1009, %v1008
      %vm1016 = vcmask 392192
      %v1018 = vsel %vm1016, %v994, 0
      %v1021 = vsel %vm1016, %v995, 0
      %v1024 = vsel %vm1016, %v996, 0
      %v1027 = vsel %vm1016, %v997, 0
      %1029 = vmatprep.subr.bf16.mxu0 0
      %1030 = vmatpush1.bf16.msra.mxu0 0
      %1031 = vmatprep.subr.bf16.mxu0 0
      %1032 = vmatpush1.bf16.msra.mxu0 0
      %1033 = vmatprep.subr.bf16.mxu0 0
      %1034 = vmatpush1.bf16.msra.mxu0 0
      %1035 = vmatprep.subr.bf16.mxu0 0
      %1036 = vmatpush1.bf16.msra.mxu0 0
      %1037 = vmatprep.subr.bf16.mxu0 0
      %1038 = vmatpush1.bf16.msra.mxu0 0
      %1039 = vmatprep.subr.bf16.mxu0 0
      %1040 = vmatpush1.bf16.msra.mxu0 %v1012
      %1041 = vmatprep.subr.bf16.mxu0 0
      %1042 = vmatpush1.bf16.msra.mxu0 %v1011
      %1043 = vmatprep.subr.bf16.mxu0 0
      %1044 = vmatpush1.bf16.msra.mxu0 %v1010
      %1045 = vmatprep.subr.bf16.mxu0 0
      %1046 = vmatpush2.bf16.msra.mxu0 0
      %1047 = vmatprep.subr.bf16.mxu0 0
      %1048 = vmatpush2.bf16.msra.mxu0 0
      %1049 = vmatprep.subr.bf16.mxu0 0
      %1050 = vmatpush2.bf16.msra.mxu0 0
      %1051 = vmatprep.subr.bf16.mxu0 0
      %1052 = vmatpush2.bf16.msra.mxu0 0
      %1053 = vmatprep.subr.bf16.mxu0 0
      %1054 = vmatpush2.bf16.msra.mxu0 0
      %1055 = vmatprep.subr.bf16.mxu0 0
      %1056 = vmatpush2.bf16.msra.mxu0 0
      %1057 = vmatprep.subr.bf16.mxu0 0
      %1058 = vmatpush2.bf16.msra.mxu0 0
      %1059 = vmatprep.subr.bf16.mxu0 0
      %1060 = vmatpush2.bf16.msra.mxu0 0
      %1061 = vmatprep.mubr.bf16.mxu0 0
      %1062 = vmatmul.mubr.bf16.gmra.mxu0 %v1018
      %v1063 = vpop.f32.mrf.mxu0
      %v1064 = vadd.f32 %v976, %v1063
      %v1065 = vpop.f32.mrf.mxu0
      %v1066 = vpop.f32.mrf.mxu0
      %v1067 = vadd.f32 %v976, %v1066
      %v1068 = vpop.f32.mrf.mxu0
      %1069 = vmatprep.mubr.bf16.mxu0 0
      %1070 = vmatmul.mubr.bf16.gmra.mxu0 %v1021
      %v1071 = vpop.f32.mrf.mxu0
      %v1072 = vadd.f32 %v976, %v1071
      %v1073 = vpop.f32.mrf.mxu0
      %v1074 = vpop.f32.mrf.mxu0
      %v1075 = vadd.f32 %v976, %v1074
      %v1076 = vpop.f32.mrf.mxu0
      %1077 = vmatprep.mubr.bf16.mxu0 0
      %1078 = vmatmul.mubr.bf16.gmra.mxu0 %v1024
      %v1079 = vpop.f32.mrf.mxu0
      %v1080 = vadd.f32 %v976, %v1079
      %v1081 = vpop.f32.mrf.mxu0
      %v1082 = vpop.f32.mrf.mxu0
      %v1083 = vadd.f32 %v976, %v1082
      %v1084 = vpop.f32.mrf.mxu0
      %1085 = vmatprep.mubr.bf16.mxu0 0
      %1086 = vmatmul.mubr.bf16.gmra.mxu0 %v1027
      %v1087 = vpop.f32.mrf.mxu0
      %v1088 = vadd.f32 %v976, %v1087
      %v1089 = vpop.f32.mrf.mxu0
      %v1090 = vpop.f32.mrf.mxu0
      %v1091 = vadd.f32 %v976, %v1090
      %v1092 = vpop.f32.mrf.mxu0
      %1093 = vdwg.mxu0
      %v1094 = vld [vmem:[%s9] sm:$0x1]
      %v1095 = vld [vmem:[%s10] sm:$0x1]
      %vm1096 = vcmask 523264
      %v1097 = vsel %vm1096, %v1064, 0.0
      %1098 = vadd.xlane.f32.xlu0 %v1097
      %v1099 = vpop.xlane.xlu0 %1098
      %v1100 = vsel %vm1096, %v1067, 0.0
      %1101 = vadd.xlane.f32.xlu0 %v1100
      %v1102 = vpop.xlane.xlu0 %1101
      %v1103 = vsel %vm1096, %v1072, 0.0
      %1104 = vadd.xlane.f32.xlu0 %v1103
      %v1105 = vpop.xlane.xlu0 %1104
      %v1106 = vsel %vm1096, %v1075, 0.0
      %1107 = vadd.xlane.f32.xlu0 %v1106
      %v1108 = vpop.xlane.xlu0 %1107
      %v1109 = vsel %vm1096, %v1080, 0.0
      %1110 = vadd.xlane.f32.xlu0 %v1109
      %v1111 = vpop.xlane.xlu0 %1110
      %v1112 = vsel %vm1096, %v1083, 0.0
      %1113 = vadd.xlane.f32.xlu0 %v1112
      %v1114 = vpop.xlane.xlu0 %1113
      %v1115 = vsel %vm1096, %v1088, 0.0
      %1116 = vadd.xlane.f32.xlu0 %v1115
      %v1117 = vpop.xlane.xlu0 %1116
      %v1118 = vsel %vm1096, %v1091, 0.0
      %1119 = vadd.xlane.f32.xlu0 %v1118
      %v1120 = vpop.xlane.xlu0 %1119
      %v1121 = vrcp.pop 64.0
      %v1122 = vmul.f32 %v1099, %v1121
      %v1123 = vmul.f32 %v1102, %v1121
      %v1124 = vmul.f32 %v1105, %v1121
      %v1125 = vmul.f32 %v1108, %v1121
      %v1126 = vmul.f32 %v1111, %v1121
      %v1127 = vmul.f32 %v1114, %v1121
      %v1128 = vmul.f32 %v1117, %v1121
      %v1129 = vmul.f32 %v1120, %v1121
      %v1130 = vmul.f32 %v1064, %v1064
      %v1131 = vmul.f32 %v1067, %v1067
      %v1132 = vmul.f32 %v1072, %v1072
      %v1133 = vmul.f32 %v1075, %v1075
      %v1134 = vmul.f32 %v1080, %v1080
      %v1135 = vmul.f32 %v1083, %v1083
      %v1136 = vmul.f32 %v1088, %v1088
      %v1137 = vmul.f32 %v1091, %v1091
      %v1138 = vsel %vm1096, %v1130, 0.0
      %1139 = vadd.xlane.f32.xlu0 %v1138
      %v1140 = vpop.xlane.xlu0 %1139
      %v1141 = vsel %vm1096, %v1131, 0.0
      %1142 = vadd.xlane.f32.xlu0 %v1141
      %v1143 = vpop.xlane.xlu0 %1142
      %v1144 = vsel %vm1096, %v1132, 0.0
      %1145 = vadd.xlane.f32.xlu0 %v1144
      %v1146 = vpop.xlane.xlu0 %1145
      %v1147 = vsel %vm1096, %v1133, 0.0
      %1148 = vadd.xlane.f32.xlu0 %v1147
      %v1149 = vpop.xlane.xlu0 %1148
      %v1150 = vsel %vm1096, %v1134, 0.0
      %1151 = vadd.xlane.f32.xlu0 %v1150
      %v1152 = vpop.xlane.xlu0 %1151
      %v1153 = vsel %vm1096, %v1135, 0.0
      %1154 = vadd.xlane.f32.xlu0 %v1153
      %v1155 = vpop.xlane.xlu0 %1154
      %v1156 = vsel %vm1096, %v1136, 0.0
      %1157 = vadd.xlane.f32.xlu0 %v1156
      %v1158 = vpop.xlane.xlu0 %1157
      %v1159 = vsel %vm1096, %v1137, 0.0
      %1160 = vadd.xlane.f32.xlu0 %v1159
      %v1161 = vpop.xlane.xlu0 %1160
      %v1162 = vmul.f32 %v1140, %v1121
      %v1163 = vmul.f32 %v1143, %v1121
      %v1164 = vmul.f32 %v1146, %v1121
      %v1165 = vmul.f32 %v1149, %v1121
      %v1166 = vmul.f32 %v1152, %v1121
      %v1167 = vmul.f32 %v1155, %v1121
      %v1168 = vmul.f32 %v1158, %v1121
      %v1169 = vmul.f32 %v1161, %v1121
      %v1170 = vmul.f32 %v1122, %v1122
      %v1171 = vmul.f32 %v1123, %v1123
      %v1172 = vmul.f32 %v1124, %v1124
      %v1173 = vmul.f32 %v1125, %v1125
      %v1174 = vmul.f32 %v1126, %v1126
      %v1175 = vmul.f32 %v1127, %v1127
      %v1176 = vmul.f32 %v1128, %v1128
      %v1177 = vmul.f32 %v1129, %v1129
      %v1178 = vsub.f32 %v1162, %v1170
      %v1179 = vsub.f32 %v1163, %v1171
      %v1180 = vsub.f32 %v1164, %v1172
      %v1181 = vsub.f32 %v1165, %v1173
      %v1182 = vsub.f32 %v1166, %v1174
      %v1183 = vsub.f32 %v1167, %v1175
      %v1184 = vsub.f32 %v1168, %v1176
      %v1185 = vsub.f32 %v1169, %v1177
      %v1186 = vmax.f32 %v1178, 0.0
      %v1187 = vmax.f32 %v1179, 0.0
      %v1188 = vmax.f32 %v1180, 0.0
      %v1189 = vmax.f32 %v1181, 0.0
      %v1190 = vmax.f32 %v1182, 0.0
      %v1191 = vmax.f32 %v1183, 0.0
      %v1192 = vmax.f32 %v1184, 0.0
      %v1193 = vmax.f32 %v1185, 0.0
      %v1194 = vsub.f32 %v1064, %v1122
      %v1195 = vsub.f32 %v1067, %v1123
      %v1196 = vsub.f32 %v1072, %v1124
      %v1197 = vsub.f32 %v1075, %v1125
      %v1198 = vsub.f32 %v1080, %v1126
      %v1199 = vsub.f32 %v1083, %v1127
      %v1200 = vsub.f32 %v1088, %v1128
      %v1201 = vsub.f32 %v1091, %v1129
      %v1202 = vadd.f32 %v1186, 1e-05
      %v1203 = vadd.f32 %v1187, 1e-05
      %v1204 = vadd.f32 %v1188, 1e-05
      %v1205 = vadd.f32 %v1189, 1e-05
      %v1206 = vadd.f32 %v1190, 1e-05
      %v1207 = vadd.f32 %v1191, 1e-05
      %v1208 = vadd.f32 %v1192, 1e-05
      %v1209 = vadd.f32 %v1193, 1e-05
      %v1210 = vrsqrt.pop %v1202
      %v1211 = vrsqrt.pop %v1203
      %v1212 = vrsqrt.pop %v1204
      %v1213 = vrsqrt.pop %v1205
      %v1214 = vrsqrt.pop %v1206
      %v1215 = vrsqrt.pop %v1207
      %v1216 = vrsqrt.pop %v1208
      %v1217 = vrsqrt.pop %v1209
      %v1218 = vmul.f32 %v1194, %v1210
      %v1219 = vmul.f32 %v1195, %v1211
      %v1220 = vmul.f32 %v1196, %v1212
      %v1221 = vmul.f32 %v1197, %v1213
      %v1222 = vmul.f32 %v1198, %v1214
      %v1223 = vmul.f32 %v1199, %v1215
      %v1224 = vmul.f32 %v1200, %v1216
      %v1225 = vmul.f32 %v1201, %v1217
      %v1227 = vlaneseq
      %v1228 = vshrl.u32 %v1227, 7
      %v1229 = vsub.s32 0, %v1228
      %v1230 = vrot.slane %v1094, %v1229
      %v1232 = vmul.f32 %v1218, %v1230
      %v1233 = vmul.f32 %v1219, %v1230
      %v1234 = vmul.f32 %v1220, %v1230
      %v1235 = vmul.f32 %v1221, %v1230
      %v1236 = vmul.f32 %v1222, %v1230
      %v1237 = vmul.f32 %v1223, %v1230
      %v1238 = vmul.f32 %v1224, %v1230
      %v1239 = vmul.f32 %v1225, %v1230
      %v1241 = vlaneseq
      %v1242 = vshrl.u32 %v1241, 7
      %v1243 = vsub.s32 0, %v1242
      %v1244 = vrot.slane %v1095, %v1243
      %v1246 = vadd.f32 %v1232, %v1244
      %v1247 = vadd.f32 %v1233, %v1244
      %v1248 = vadd.f32 %v1234, %v1244
      %v1249 = vadd.f32 %v1235, %v1244
      %v1250 = vadd.f32 %v1236, %v1244
      %v1251 = vadd.f32 %v1237, %v1244
      %v1252 = vadd.f32 %v1238, %v1244
      %v1253 = vadd.f32 %v1239, %v1244
      %v1254 = vmul.f32 %v1246, 0.5
      %v1255 = vmul.f32 %v1247, 0.5
      %v1256 = vmul.f32 %v1248, 0.5
      %v1257 = vmul.f32 %v1249, 0.5
      %v1258 = vmul.f32 %v1250, 0.5
      %v1259 = vmul.f32 %v1251, 0.5
      %v1260 = vmul.f32 %v1252, 0.5
      %v1261 = vmul.f32 %v1253, 0.5
      %v1262 = vmul.f32 %v1246, 0.044715
      %v1263 = vmul.f32 %v1247, 0.044715
      %v1264 = vmul.f32 %v1248, 0.044715
      %v1265 = vmul.f32 %v1249, 0.044715
      %v1266 = vmul.f32 %v1250, 0.044715
      %v1267 = vmul.f32 %v1251, 0.044715
      %v1268 = vmul.f32 %v1252, 0.044715
      %v1269 = vmul.f32 %v1253, 0.044715
      %v1270 = vmul.f32 %v1262, %v1246
      %v1271 = vmul.f32 %v1263, %v1247
      %v1272 = vmul.f32 %v1264, %v1248
      %v1273 = vmul.f32 %v1265, %v1249
      %v1274 = vmul.f32 %v1266, %v1250
      %v1275 = vmul.f32 %v1267, %v1251
      %v1276 = vmul.f32 %v1268, %v1252
      %v1277 = vmul.f32 %v1269, %v1253
      %v1278 = vmul.f32 %v1270, %v1246
      %v1279 = vmul.f32 %v1271, %v1247
      %v1280 = vmul.f32 %v1272, %v1248
      %v1281 = vmul.f32 %v1273, %v1249
      %v1282 = vmul.f32 %v1274, %v1250
      %v1283 = vmul.f32 %v1275, %v1251
      %v1284 = vmul.f32 %v1276, %v1252
      %v1285 = vmul.f32 %v1277, %v1253
      %v1286 = vadd.f32 %v1246, %v1278
      %v1287 = vadd.f32 %v1247, %v1279
      %v1288 = vadd.f32 %v1248, %v1280
      %v1289 = vadd.f32 %v1249, %v1281
      %v1290 = vadd.f32 %v1250, %v1282
      %v1291 = vadd.f32 %v1251, %v1283
      %v1292 = vadd.f32 %v1252, %v1284
      %v1293 = vadd.f32 %v1253, %v1285
      %v1294 = vmul.f32 %v1286, 0.7978846
      %v1295 = vmul.f32 %v1287, 0.7978846
      %v1296 = vmul.f32 %v1288, 0.7978846
      %v1297 = vmul.f32 %v1289, 0.7978846
      %v1298 = vmul.f32 %v1290, 0.7978846
      %v1299 = vmul.f32 %v1291, 0.7978846
      %v1300 = vmul.f32 %v1292, 0.7978846
      %v1301 = vmul.f32 %v1293, 0.7978846
      %v1302 = vtanh.pop %v1294
      %v1303 = vtanh.pop %v1295
      %v1304 = vtanh.pop %v1296
      %v1305 = vtanh.pop %v1297
      %v1306 = vtanh.pop %v1298
      %v1307 = vtanh.pop %v1299
      %v1308 = vtanh.pop %v1300
      %v1309 = vtanh.pop %v1301
      %v1310 = vadd.f32 %v1302, 1.0
      %v1311 = vadd.f32 %v1303, 1.0
      %v1312 = vadd.f32 %v1304, 1.0
      %v1313 = vadd.f32 %v1305, 1.0
      %v1314 = vadd.f32 %v1306, 1.0
      %v1315 = vadd.f32 %v1307, 1.0
      %v1316 = vadd.f32 %v1308, 1.0
      %v1317 = vadd.f32 %v1309, 1.0
      %v1318 = vmul.f32 %v1254, %v1310
      %v1319 = vmul.f32 %v1255, %v1311
      %v1320 = vmul.f32 %v1256, %v1312
      %v1321 = vmul.f32 %v1257, %v1313
      %v1322 = vmul.f32 %v1258, %v1314
      %v1323 = vmul.f32 %v1259, %v1315
      %v1324 = vmul.f32 %v1260, %v1316
      %v1325 = vmul.f32 %v1261, %v1317
      %v1326 = vpack.c.bf16 %v1319, %v1318
      %v1327 = vpack.c.bf16 %v1321, %v1320
      %v1328 = vpack.c.bf16 %v1323, %v1322
      %v1329 = vpack.c.bf16 %v1325, %v1324
      %v1330 = vld [vmem:[%s11] sm:$0xf]
      %v1331 = vld [vmem:[%s11 + $0x4] sm:$0xf]
      %v1332 = vld [vmem:[%s11 + $0x8] sm:$0xf]
      %v1333 = vld [vmem:[%s11 + $0xc] sm:$0xf]
      %v1334 = vld [vmem:[%s11 + $0x10] sm:$0xf]
      %v1335 = vld [vmem:[%s11 + $0x14] sm:$0xf]
      %v1336 = vld [vmem:[%s11 + $0x18] sm:$0xf]
      %v1337 = vld [vmem:[%s11 + $0x1c] sm:$0xf]
      %v1338 = vld [vmem:[%s12] sm:$0x1]
      %v1340 = vlaneseq
      %v1341 = vshrl.u32 %v1340, 7
      %v1342 = vsub.s32 0, %v1341
      %v1343 = vrot.slane %v1338, %v1342
      %v1353 = vunpack.c.l.b16 %v1330
      %v1354 = vunpack.c.l.b16 %v1331
      %v1355 = vunpack.c.l.b16 %v1332
      %v1356 = vunpack.c.l.b16 %v1333
      %v1357 = vunpack.c.l.b16 %v1334
      %v1358 = vunpack.c.l.b16 %v1335
      %v1359 = vunpack.c.l.b16 %v1336
      %v1360 = vunpack.c.l.b16 %v1337
      %v1361 = vpack.c.b16 %v1354, %v1353
      %v1362 = vpack.c.b16 %v1356, %v1355
      %v1363 = vpack.c.b16 %v1358, %v1357
      %v1364 = vpack.c.b16 %v1360, %v1359
      %v1370 = vsel %vm1096, %v1326, 0
      %v1373 = vsel %vm1096, %v1327, 0
      %v1376 = vsel %vm1096, %v1328, 0
      %v1379 = vsel %vm1096, %v1329, 0
      %1381 = vmatprep.subr.bf16.mxu0 0
      %1382 = vmatpush1.bf16.msra.mxu0 0
      %1383 = vmatprep.subr.bf16.mxu0 0
      %1384 = vmatpush1.bf16.msra.mxu0 0
      %1385 = vmatprep.subr.bf16.mxu0 0
      %1386 = vmatpush1.bf16.msra.mxu0 0
      %1387 = vmatprep.subr.bf16.mxu0 0
      %1388 = vmatpush1.bf16.msra.mxu0 0
      %1389 = vmatprep.subr.bf16.mxu0 0
      %1390 = vmatpush1.bf16.msra.mxu0 %v1364
      %1391 = vmatprep.subr.bf16.mxu0 0
      %1392 = vmatpush1.bf16.msra.mxu0 %v1363
      %1393 = vmatprep.subr.bf16.mxu0 0
      %1394 = vmatpush1.bf16.msra.mxu0 %v1362
      %1395 = vmatprep.subr.bf16.mxu0 0
      %1396 = vmatpush1.bf16.msra.mxu0 %v1361
      %1397 = vmatprep.subr.bf16.mxu0 0
      %1398 = vmatpush2.bf16.msra.mxu0 0
      %1399 = vmatprep.subr.bf16.mxu0 0
      %1400 = vmatpush2.bf16.msra.mxu0 0
      %1401 = vmatprep.subr.bf16.mxu0 0
      %1402 = vmatpush2.bf16.msra.mxu0 0
      %1403 = vmatprep.subr.bf16.mxu0 0
      %1404 = vmatpush2.bf16.msra.mxu0 0
      %1405 = vmatprep.subr.bf16.mxu0 0
      %1406 = vmatpush2.bf16.msra.mxu0 0
      %1407 = vmatprep.subr.bf16.mxu0 0
      %1408 = vmatpush2.bf16.msra.mxu0 0
      %1409 = vmatprep.subr.bf16.mxu0 0
      %1410 = vmatpush2.bf16.msra.mxu0 0
      %1411 = vmatprep.subr.bf16.mxu0 0
      %1412 = vmatpush2.bf16.msra.mxu0 0
      %1413 = vmatprep.mubr.bf16.mxu0 0
      %1414 = vmatmul.mubr.bf16.gmra.mxu0 %v1370
      %v1415 = vpop.f32.mrf.mxu0
      %v1416 = vadd.f32 %v1343, %v1415
      %v1417 = vpop.f32.mrf.mxu0
      %v1418 = vpop.f32.mrf.mxu0
      %v1419 = vadd.f32 %v1343, %v1418
      %v1420 = vpop.f32.mrf.mxu0
      %1421 = vmatprep.mubr.bf16.mxu0 0
      %1422 = vmatmul.mubr.bf16.gmra.mxu0 %v1373
      %v1423 = vpop.f32.mrf.mxu0
      %v1424 = vadd.f32 %v1343, %v1423
      %v1425 = vpop.f32.mrf.mxu0
      %v1426 = vpop.f32.mrf.mxu0
      %v1427 = vadd.f32 %v1343, %v1426
      %v1428 = vpop.f32.mrf.mxu0
      %1429 = vmatprep.mubr.bf16.mxu0 0
      %1430 = vmatmul.mubr.bf16.gmra.mxu0 %v1376
      %v1431 = vpop.f32.mrf.mxu0
      %v1432 = vadd.f32 %v1343, %v1431
      %v1433 = vpop.f32.mrf.mxu0
      %v1434 = vpop.f32.mrf.mxu0
      %v1435 = vadd.f32 %v1343, %v1434
      %v1436 = vpop.f32.mrf.mxu0
      %1437 = vmatprep.mubr.bf16.mxu0 0
      %1438 = vmatmul.mubr.bf16.gmra.mxu0 %v1379
      %v1439 = vpop.f32.mrf.mxu0
      %v1440 = vadd.f32 %v1343, %v1439
      %v1441 = vpop.f32.mrf.mxu0
      %v1442 = vpop.f32.mrf.mxu0
      %v1443 = vadd.f32 %v1343, %v1442
      %v1444 = vpop.f32.mrf.mxu0
      %1445 = vdwg.mxu0
      %v1446 = vmul.f32 %v1416, 0.5
      %v1447 = vmul.f32 %v1419, 0.5
      %v1448 = vmul.f32 %v1424, 0.5
      %v1449 = vmul.f32 %v1427, 0.5
      %v1450 = vmul.f32 %v1432, 0.5
      %v1451 = vmul.f32 %v1435, 0.5
      %v1452 = vmul.f32 %v1440, 0.5
      %v1453 = vmul.f32 %v1443, 0.5
      %v1454 = vmul.f32 %v1416, 0.044715
      %v1455 = vmul.f32 %v1419, 0.044715
      %v1456 = vmul.f32 %v1424, 0.044715
      %v1457 = vmul.f32 %v1427, 0.044715
      %v1458 = vmul.f32 %v1432, 0.044715
      %v1459 = vmul.f32 %v1435, 0.044715
      %v1460 = vmul.f32 %v1440, 0.044715
      %v1461 = vmul.f32 %v1443, 0.044715
      %v1462 = vmul.f32 %v1454, %v1416
      %v1463 = vmul.f32 %v1455, %v1419
      %v1464 = vmul.f32 %v1456, %v1424
      %v1465 = vmul.f32 %v1457, %v1427
      %v1466 = vmul.f32 %v1458, %v1432
      %v1467 = vmul.f32 %v1459, %v1435
      %v1468 = vmul.f32 %v1460, %v1440
      %v1469 = vmul.f32 %v1461, %v1443
      %v1470 = vmul.f32 %v1462, %v1416
      %v1471 = vmul.f32 %v1463, %v1419
      %v1472 = vmul.f32 %v1464, %v1424
      %v1473 = vmul.f32 %v1465, %v1427
      %v1474 = vmul.f32 %v1466, %v1432
      %v1475 = vmul.f32 %v1467, %v1435
      %v1476 = vmul.f32 %v1468, %v1440
      %v1477 = vmul.f32 %v1469, %v1443
      %v1478 = vadd.f32 %v1416, %v1470
      %v1479 = vadd.f32 %v1419, %v1471
      %v1480 = vadd.f32 %v1424, %v1472
      %v1481 = vadd.f32 %v1427, %v1473
      %v1482 = vadd.f32 %v1432, %v1474
      %v1483 = vadd.f32 %v1435, %v1475
      %v1484 = vadd.f32 %v1440, %v1476
      %v1485 = vadd.f32 %v1443, %v1477
      %v1486 = vmul.f32 %v1478, 0.7978846
      %v1487 = vmul.f32 %v1479, 0.7978846
      %v1488 = vmul.f32 %v1480, 0.7978846
      %v1489 = vmul.f32 %v1481, 0.7978846
      %v1490 = vmul.f32 %v1482, 0.7978846
      %v1491 = vmul.f32 %v1483, 0.7978846
      %v1492 = vmul.f32 %v1484, 0.7978846
      %v1493 = vmul.f32 %v1485, 0.7978846
      %v1494 = vtanh.pop %v1486
      %v1495 = vtanh.pop %v1487
      %v1496 = vtanh.pop %v1488
      %v1497 = vtanh.pop %v1489
      %v1498 = vtanh.pop %v1490
      %v1499 = vtanh.pop %v1491
      %v1500 = vtanh.pop %v1492
      %v1501 = vtanh.pop %v1493
      %v1502 = vadd.f32 %v1494, 1.0
      %v1503 = vadd.f32 %v1495, 1.0
      %v1504 = vadd.f32 %v1496, 1.0
      %v1505 = vadd.f32 %v1497, 1.0
      %v1506 = vadd.f32 %v1498, 1.0
      %v1507 = vadd.f32 %v1499, 1.0
      %v1508 = vadd.f32 %v1500, 1.0
      %v1509 = vadd.f32 %v1501, 1.0
      %v1510 = vmul.f32 %v1446, %v1502
      %v1511 = vmul.f32 %v1447, %v1503
      %v1512 = vmul.f32 %v1448, %v1504
      %v1513 = vmul.f32 %v1449, %v1505
      %v1514 = vmul.f32 %v1450, %v1506
      %v1515 = vmul.f32 %v1451, %v1507
      %v1516 = vmul.f32 %v1452, %v1508
      %v1517 = vmul.f32 %v1453, %v1509
      %v1518 = vld [vmem:[%s710] sm:$0xff]
      %v1520 = vsel %vm1096, %v1518, 0
      %1522 = vmatprep.subr.mxu0 0.0
      %1523 = vmatpush1.msra.mxu0 0.0
      %1524 = vmatprep.subr.mxu0 0.0
      %1525 = vmatpush1.msra.mxu0 0.0
      %1526 = vmatprep.subr.mxu0 0.0
      %1527 = vmatpush1.msra.mxu0 0.0
      %1528 = vmatprep.subr.mxu0 0.0
      %1529 = vmatpush1.msra.mxu0 0.0
      %1530 = vmatprep.subr.mxu0 0.0
      %1531 = vmatpush1.msra.mxu0 0.0
      %1532 = vmatprep.subr.mxu0 0.0
      %1533 = vmatpush1.msra.mxu0 0.0
      %1534 = vmatprep.subr.mxu0 0.0
      %1535 = vmatpush1.msra.mxu0 0.0
      %1536 = vmatprep.subr.mxu0 0.0
      %1537 = vmatpush1.msra.mxu0 0.0
      %1538 = vmatprep.subr.mxu0 0.0
      %1539 = vmatpush1.msra.mxu0 %v1517
      %1540 = vmatprep.subr.mxu0 0.0
      %1541 = vmatpush1.msra.mxu0 %v1516
      %1542 = vmatprep.subr.mxu0 0.0
      %1543 = vmatpush1.msra.mxu0 %v1515
      %1544 = vmatprep.subr.mxu0 0.0
      %1545 = vmatpush1.msra.mxu0 %v1514
      %1546 = vmatprep.subr.mxu0 0.0
      %1547 = vmatpush1.msra.mxu0 %v1513
      %1548 = vmatprep.subr.mxu0 0.0
      %1549 = vmatpush1.msra.mxu0 %v1512
      %1550 = vmatprep.subr.mxu0 0.0
      %1551 = vmatpush1.msra.mxu0 %v1511
      %1552 = vmatprep.subr.mxu0 0.0
      %1553 = vmatpush1.msra.mxu0 %v1510
      %1554 = vmatprep.subr.mxu0 0.0
      %1555 = vmatpush2.msra.mxu0 0.0
      %1556 = vmatprep.subr.mxu0 0.0
      %1557 = vmatpush2.msra.mxu0 0.0
      %1558 = vmatprep.subr.mxu0 0.0
      %1559 = vmatpush2.msra.mxu0 0.0
      %1560 = vmatprep.subr.mxu0 0.0
      %1561 = vmatpush2.msra.mxu0 0.0
      %1562 = vmatprep.subr.mxu0 0.0
      %1563 = vmatpush2.msra.mxu0 0.0
      %1564 = vmatprep.subr.mxu0 0.0
      %1565 = vmatpush2.msra.mxu0 0.0
      %1566 = vmatprep.subr.mxu0 0.0
      %1567 = vmatpush2.msra.mxu0 0.0
      %1568 = vmatprep.subr.mxu0 0.0
      %1569 = vmatpush2.msra.mxu0 0.0
      %1570 = vmatprep.subr.mxu0 0.0
      %1571 = vmatpush2.msra.mxu0 0.0
      %1572 = vmatprep.subr.mxu0 0.0
      %1573 = vmatpush2.msra.mxu0 0.0
      %1574 = vmatprep.subr.mxu0 0.0
      %1575 = vmatpush2.msra.mxu0 0.0
      %1576 = vmatprep.subr.mxu0 0.0
      %1577 = vmatpush2.msra.mxu0 0.0
      %1578 = vmatprep.subr.mxu0 0.0
      %1579 = vmatpush2.msra.mxu0 0.0
      %1580 = vmatprep.subr.mxu0 0.0
      %1581 = vmatpush2.msra.mxu0 0.0
      %1582 = vmatprep.subr.mxu0 0.0
      %1583 = vmatpush2.msra.mxu0 0.0
      %1584 = vmatprep.subr.mxu0 0.0
      %1585 = vmatpush2.msra.mxu0 0.0
      %1586 = vmatprep.mubr.f32.mxu0 0.0
      %1587 = vmatmul.mubr.f32.gmra.mxu0 %v1520
      %v1588 = vpop.f32.mrf.mxu0
      %v1589 = vadd.f32 0.0, %v1588
      %v1590 = vpop.f32.mrf.mxu0
      %1591 = vdwg.mxu0
      %v1592 = vpack.c.bf16 %v952, %v952
      %v1593 = vld [vmem:[%s13] sm:$0xf]
      %v1594 = vld [vmem:[%s13 + $0x4] sm:$0xf]
      %v1595 = vld [vmem:[%s13 + $0x8] sm:$0xf]
      %v1596 = vld [vmem:[%s13 + $0xc] sm:$0xf]
      %v1597 = vpack.c.bf16 %v1589, %v1589
      %v1598 = vld [vmem:[%s14] sm:$0xf]
      %v1599 = vld [vmem:[%s14 + $0x4] sm:$0xf]
      %v1600 = vld [vmem:[%s14 + $0x8] sm:$0xf]
      %v1601 = vld [vmem:[%s14 + $0xc] sm:$0xf]
      %v1606 = vunpack.c.l.b16 %v1598
      %v1607 = vunpack.c.l.b16 %v1599
      %v1608 = vunpack.c.l.b16 %v1600
      %v1609 = vunpack.c.l.b16 %v1601
      %v1610 = vpack.c.b16 %v1607, %v1606
      %v1611 = vpack.c.b16 %v1609, %v1608
      %v1615 = vsel %vm754, %v1597, 0
      %1617 = vmatprep.subr.bf16.mxu0 0
      %1618 = vmatpush1.bf16.msra.mxu0 0
      %1619 = vmatprep.subr.bf16.mxu0 0
      %1620 = vmatpush1.bf16.msra.mxu0 0
      %1621 = vmatprep.subr.bf16.mxu0 0
      %1622 = vmatpush1.bf16.msra.mxu0 0
      %1623 = vmatprep.subr.bf16.mxu0 0
      %1624 = vmatpush1.bf16.msra.mxu0 0
      %1625 = vmatprep.subr.bf16.mxu0 0
      %1626 = vmatpush1.bf16.msra.mxu0 0
      %1627 = vmatprep.subr.bf16.mxu0 0
      %1628 = vmatpush1.bf16.msra.mxu0 0
      %1629 = vmatprep.subr.bf16.mxu0 0
      %1630 = vmatpush1.bf16.msra.mxu0 %v1611
      %1631 = vmatprep.subr.bf16.mxu0 0
      %1632 = vmatpush1.bf16.msra.mxu0 %v1610
      %1633 = vmatprep.subr.bf16.mxu0 0
      %1634 = vmatpush2.bf16.msra.mxu0 0
      %1635 = vmatprep.subr.bf16.mxu0 0
      %1636 = vmatpush2.bf16.msra.mxu0 0
      %1637 = vmatprep.subr.bf16.mxu0 0
      %1638 = vmatpush2.bf16.msra.mxu0 0
      %1639 = vmatprep.subr.bf16.mxu0 0
      %1640 = vmatpush2.bf16.msra.mxu0 0
      %1641 = vmatprep.subr.bf16.mxu0 0
      %1642 = vmatpush2.bf16.msra.mxu0 0
      %1643 = vmatprep.subr.bf16.mxu0 0
      %1644 = vmatpush2.bf16.msra.mxu0 0
      %1645 = vmatprep.subr.bf16.mxu0 0
      %1646 = vmatpush2.bf16.msra.mxu0 0
      %1647 = vmatprep.subr.bf16.mxu0 0
      %1648 = vmatpush2.bf16.msra.mxu0 0
      %1649 = vmatprep.mubr.bf16.mxu0 0
      %1650 = vmatmul.mubr.bf16.gmra.mxu0 %v1615
      %v1651 = vpop.f32.mrf.mxu0
      %v1652 = vadd.f32 0.0, %v1651
      %v1653 = vpop.f32.mrf.mxu0
      %v1654 = vpop.f32.mrf.mxu0
      %v1655 = vpop.f32.mrf.mxu0
      %1656 = vdwg.mxu0
      %v1661 = vunpack.c.l.b16 %v1593
      %v1662 = vunpack.c.l.b16 %v1594
      %v1663 = vunpack.c.l.b16 %v1595
      %v1664 = vunpack.c.l.b16 %v1596
      %v1665 = vpack.c.b16 %v1662, %v1661
      %v1666 = vpack.c.b16 %v1664, %v1663
      %v1670 = vsel %vm754, %v1592, 0
      %1672 = vmatprep.subr.bf16.mxu0 0
      %1673 = vmatpush1.bf16.msra.mxu0 0
      %1674 = vmatprep.subr.bf16.mxu0 0
      %1675 = vmatpush1.bf16.msra.mxu0 0
      %1676 = vmatprep.subr.bf16.mxu0 0
      %1677 = vmatpush1.bf16.msra.mxu0 0
      %1678 = vmatprep.subr.bf16.mxu0 0
      %1679 = vmatpush1.bf16.msra.mxu0 0
      %1680 = vmatprep.subr.bf16.mxu0 0
      %1681 = vmatpush1.bf16.msra.mxu0 0
      %1682 = vmatprep.subr.bf16.mxu0 0
      %1683 = vmatpush1.bf16.msra.mxu0 0
      %1684 = vmatprep.subr.bf16.mxu0 0
      %1685 = vmatpush1.bf16.msra.mxu0 %v1666
      %1686 = vmatprep.subr.bf16.mxu0 0
      %1687 = vmatpush1.bf16.msra.mxu0 %v1665
      %1688 = vmatprep.subr.bf16.mxu0 0
      %1689 = vmatpush2.bf16.msra.mxu0 0
      %1690 = vmatprep.subr.bf16.mxu0 0
      %1691 = vmatpush2.bf16.msra.mxu0 0
      %1692 = vmatprep.subr.bf16.mxu0 0
      %1693 = vmatpush2.bf16.msra.mxu0 0
      %1694 = vmatprep.subr.bf16.mxu0 0
      %1695 = vmatpush2.bf16.msra.mxu0 0
      %1696 = vmatprep.subr.bf16.mxu0 0
      %1697 = vmatpush2.bf16.msra.mxu0 0
      %1698 = vmatprep.subr.bf16.mxu0 0
      %1699 = vmatpush2.bf16.msra.mxu0 0
      %1700 = vmatprep.subr.bf16.mxu0 0
      %1701 = vmatpush2.bf16.msra.mxu0 0
      %1702 = vmatprep.subr.bf16.mxu0 0
      %1703 = vmatpush2.bf16.msra.mxu0 0
      %1704 = vmatprep.mubr.bf16.mxu0 0
      %1705 = vmatmul.mubr.bf16.gmra.mxu0 %v1670
      %v1706 = vpop.f32.mrf.mxu0
      %v1707 = vadd.f32 %v1652, %v1706
      %v1708 = vpop.f32.mrf.mxu0
      %v1709 = vpop.f32.mrf.mxu0
      %v1710 = vpop.f32.mrf.mxu0
      %1711 = vdwg.mxu0
      %v1712 = vpack.c.bf16 %v716, %v716
      %v1713 = vld [vmem:[%s15] sm:$0xf]
      %v1714 = vld [vmem:[%s15 + $0x4] sm:$0xf]
      %v1715 = vld [vmem:[%s15 + $0x8] sm:$0xf]
      %v1716 = vld [vmem:[%s15 + $0xc] sm:$0xf]
      %v1721 = vunpack.c.l.b16 %v1713
      %v1722 = vunpack.c.l.b16 %v1714
      %v1723 = vunpack.c.l.b16 %v1715
      %v1724 = vunpack.c.l.b16 %v1716
      %v1725 = vpack.c.b16 %v1722, %v1721
      %v1726 = vpack.c.b16 %v1724, %v1723
      %v1730 = vsel %vm754, %v1712, 0
      %1732 = vmatprep.subr.bf16.mxu0 0
      %1733 = vmatpush1.bf16.msra.mxu0 0
      %1734 = vmatprep.subr.bf16.mxu0 0
      %1735 = vmatpush1.bf16.msra.mxu0 0
      %1736 = vmatprep.subr.bf16.mxu0 0
      %1737 = vmatpush1.bf16.msra.mxu0 0
      %1738 = vmatprep.subr.bf16.mxu0 0
      %1739 = vmatpush1.bf16.msra.mxu0 0
      %1740 = vmatprep.subr.bf16.mxu0 0
      %1741 = vmatpush1.bf16.msra.mxu0 0
      %1742 = vmatprep.subr.bf16.mxu0 0
      %1743 = vmatpush1.bf16.msra.mxu0 0
      %1744 = vmatprep.subr.bf16.mxu0 0
      %1745 = vmatpush1.bf16.msra.mxu0 %v1726
      %1746 = vmatprep.subr.bf16.mxu0 0
      %1747 = vmatpush1.bf16.msra.mxu0 %v1725
      %1748 = vmatprep.subr.bf16.mxu0 0
      %1749 = vmatpush2.bf16.msra.mxu0 0
      %1750 = vmatprep.subr.bf16.mxu0 0
      %1751 = vmatpush2.bf16.msra.mxu0 0
      %1752 = vmatprep.subr.bf16.mxu0 0
      %1753 = vmatpush2.bf16.msra.mxu0 0
      %1754 = vmatprep.subr.bf16.mxu0 0
      %1755 = vmatpush2.bf16.msra.mxu0 0
      %1756 = vmatprep.subr.bf16.mxu0 0
      %1757 = vmatpush2.bf16.msra.mxu0 0
      %1758 = vmatprep.subr.bf16.mxu0 0
      %1759 = vmatpush2.bf16.msra.mxu0 0
      %1760 = vmatprep.subr.bf16.mxu0 0
      %1761 = vmatpush2.bf16.msra.mxu0 0
      %1762 = vmatprep.subr.bf16.mxu0 0
      %1763 = vmatpush2.bf16.msra.mxu0 0
      %1764 = vmatprep.mubr.bf16.mxu0 0
      %1765 = vmatmul.mubr.bf16.gmra.mxu0 %v1730
      %v1766 = vpop.f32.mrf.mxu0
      %v1767 = vadd.f32 0.0, %v1766
      %v1768 = vpop.f32.mrf.mxu0
      %v1769 = vpop.f32.mrf.mxu0
      %v1770 = vpop.f32.mrf.mxu0
      %1771 = vdwg.mxu0
      %v1772 = vadd.f32 %v1707, %v1767
      %v1773 = vld [vmem:[%s16] sm:$0x1]
      %v1775 = vlaneseq
      %v1776 = vshrl.u32 %v1775, 7
      %v1777 = vsub.s32 0, %v1776
      %v1778 = vrot.slane %v1773, %v1777
      %v1780 = vadd.f32 %v1772, %v1778
      %v1781 = vld [vmem:[%s17] sm:$0x1]
      %v1782 = vld [vmem:[%s18] sm:$0x1]
      %v1783 = vsel %vm754, %v1780, 0.0
      %1784 = vadd.xlane.f32.xlu0 %v1783
      %v1785 = vpop.xlane.xlu0 %1784
      %v1786 = vrcp.pop 32.0
      %v1787 = vmul.f32 %v1785, %v1786
      %v1788 = vmul.f32 %v1780, %v1780
      %v1789 = vsel %vm754, %v1788, 0.0
      %1790 = vadd.xlane.f32.xlu0 %v1789
      %v1791 = vpop.xlane.xlu0 %1790
      %v1792 = vmul.f32 %v1791, %v1786
      %v1793 = vmul.f32 %v1787, %v1787
      %v1794 = vsub.f32 %v1792, %v1793
      %v1795 = vmax.f32 %v1794, 0.0
      %v1796 = vsub.f32 %v1780, %v1787
      %v1797 = vadd.f32 %v1795, 1e-05
      %v1798 = vrsqrt.pop %v1797
      %v1799 = vmul.f32 %v1796, %v1798
      %v1801 = vlaneseq
      %v1802 = vshrl.u32 %v1801, 7
      %v1803 = vsub.s32 0, %v1802
      %v1804 = vrot.slane %v1781, %v1803
      %v1806 = vmul.f32 %v1799, %v1804
      %v1808 = vlaneseq
      %v1809 = vshrl.u32 %v1808, 7
      %v1810 = vsub.s32 0, %v1809
      %v1811 = vrot.slane %v1782, %v1810
      %v1813 = vadd.f32 %v1806, %v1811
      %v1814 = vmul.f32 %v1813, 0.5
      %v1815 = vmul.f32 %v1813, 0.044715
      %v1816 = vmul.f32 %v1815, %v1813
      %v1817 = vmul.f32 %v1816, %v1813
      %v1818 = vadd.f32 %v1813, %v1817
      %v1819 = vmul.f32 %v1818, 0.7978846
      %v1820 = vtanh.pop %v1819
      %v1821 = vadd.f32 %v1820, 1.0
      %v1822 = vmul.f32 %v1814, %v1821
      %v1823 = vld [vmem:[%s19] sm:$0x1]
      %v1825 = vlaneseq
      %v1826 = vshrl.u32 %v1825, 7
      %v1827 = vsub.s32 0, %v1826
      %v1828 = vrot.slane %v1823, %v1827
      %v1830 = vmul.f32 %v1822, %v1828
      %v1831 = vsel %vm754, %v1830, 0.0
      %1832 = vadd.xlane.f32.xlu0 %v1831
      %v1833 = vpop.xlane.xlu0 %1832
      %v1834 = vld [vmem:[#allocation2] sm:$0x1]
      %v1836 = vlaneseq
      %v1837 = vshrl.u32 %v1836, 7
      %v1838 = vsub.s32 0, %v1837
      %v1839 = vrot.slane %v1834, %v1838
      %v1841 = vadd.f32 %v1833, %v1839
      %1843 = vset.pattern.permute.xlu0 0
      %1844 = vperm.xlu0 %1843, %v1841
      %v1845 = vpop.permute.xlu0 %1844
      %1847 = vst [vmem:[%s714] sm:$0xff] %v1845
      %p1848 = scmp.lt.s32.totalorder %s34, 1
      %s1849 = scalar_select %p1848, %s34, 1
      %s1850 = smul.addr %s1849, 8
      %s1851 = scalar_lea.vmem %s21, %s1850
      // Predicated region
      $region105: #{lm_relation_net_forward.1} parent=103 // pred_check
        %p1852 = pneg %p513
      $region106: #{lm_relation_net_forward.1} parent=103 // pred_check_branch
        %1854 = sbr.rel (%p1852) target = $region108
      $region107: #{lm_relation_net_forward.1} parent=103 // pred_region
        _
      $region108: #{lm_relation_net_forward.1} parent=103 // pred_fallthru
        _
    $region104: #{lm_relation_net_forward.1} parent=5 // pred_fallthru
      _
    %p1855 = scmp.le.s32.totalorder 2, %s29
    // Predicated region
    $region109: #{lm_relation_net_forward.1} parent=5 // pred_check
      %p1856 = pneg %p1855
    $region110: #{lm_relation_net_forward.1} parent=5 // pred_check_branch
      %1858 = sbr.rel (%p1856) target = $region112
    $region111: #{lm_relation_net_forward.1} parent=5 // pred_region
      %s1859 = ssub.s32 %s29, 2
      // Predicated region
      $region113: #{lm_relation_net_forward.1} parent=111 // pred_check
        %p1860 = pneg %p519
      $region114: #{lm_relation_net_forward.1} parent=111 // pred_check_branch
        %1862 = sbr.rel (%p1860) target = $region116
      $region115: #{lm_relation_net_forward.1} parent=111 // pred_region
        %p1863 = scmp.lt.s32.totalorder %s35, 1
        %s1864 = scalar_select %p1863, %s35, 1
        %s1865 = smul.addr %s1864, 8
        %s1866 = scalar_lea.vmem %s21, %s1865
      $region116: #{lm_relation_net_forward.1} parent=111 // pred_fallthru
        _
    $region112: #{lm_relation_net_forward.1} parent=5 // pred_fallthru
      _
  $region6: #{lm_relation_net_forward.1} parent=0 // loop_footer
    %s33 = sadd.s32 1, %s29
  $region7: #{lm_relation_net_forward.1} parent=0 // loop_footer_branch
    %28 = sbr.rel target = $region3
  $region8: #{lm_relation_net_forward.1} parent=0 // loop_exit
    _

// kernel: lm_relation_net_forward.1
$region0: #{lm_relation_net_forward.1}
  #allocation0 [shape = 'u32[]', space=smem, size = 0x4, offset = 0x4, fixed_abs, tag = 'smem constant byte address 0x4 - core index']
  #allocation1 [shape = 'u32[144,128]{1,0:T(1,128)}', space=vmem, size = 0x12000, scoped, tag = 'internal scratch']
  #allocation2 [shape = 'f32[1,1]{1,0:T(1,128)S(1)}', space=vmem, size = 0x200, scoped, tag = 'scoped memory for lm_relation_net_forward.1']
  %s0 = inlined_call_operand.vmem [shape: f32[16,32], index: 0, kind: input, shape index: {}]
  %s1 = inlined_call_operand.vmem [shape: bf16[64,32], index: 1, kind: input, shape index: {}]
  %s2 = inlined_call_operand.vmem [shape: bf16[128,48], index: 2, kind: input, shape index: {}]
  %s3 = inlined_call_operand.vmem [shape: f32[16,64], index: 3, kind: input, shape index: {}]
  %s4 = inlined_call_operand.vmem [shape: f32[8,32], index: 4, kind: input, shape index: {}]
  %s5 = inlined_call_operand.vmem [shape: bf16[32,32], index: 5, kind: input, shape index: {}]
  %s6 = inlined_call_operand.vmem [shape: f32[1,32], index: 6, kind: input, shape index: {}]
  %s7 = inlined_call_operand.vmem [shape: bf16[48,64], index: 7, kind: input, shape index: {}]
  %s8 = inlined_call_operand.vmem [shape: f32[1,64], index: 8, kind: input, shape index: {}]
  %s9 = inlined_call_operand.vmem [shape: f32[1,64], index: 9, kind: input, shape index: {}]
  %s10 = inlined_call_operand.vmem [shape: f32[1,64], index: 10, kind: input, shape index: {}]
  %s11 = inlined_call_operand.vmem [shape: bf16[64,32], index: 11, kind: input, shape index: {}]
  %s12 = inlined_call_operand.vmem [shape: f32[1,32], index: 12, kind: input, shape index: {}]
  %s13 = inlined_call_operand.vmem [shape: bf16[32,32], index: 13, kind: input, shape index: {}]
  %s14 = inlined_call_operand.vmem [shape: bf16[32,32], index: 14, kind: input, shape index: {}]
  %s15 = inlined_call_operand.vmem [shape: bf16[32,32], index: 15, kind: input, shape index: {}]
  %s16 = inlined_call_operand.vmem [shape: f32[1,32], index: 16, kind: input, shape index: {}]
  %s17 = inlined_call_operand.vmem [shape: f32[1,32], index: 17, kind: input, shape index: {}]
  %s18 = inlined_call_operand.vmem [shape: f32[1,32], index: 18, kind: input, shape index: {}]
  %s19 = inlined_call_operand.vmem [shape: f32[1,32], index: 19, kind: input, shape index: {}]
  %s20 = inlined_call_operand.<no memory space> [shape: f32[1,1], index: 20, kind: input, shape index: {}]
  %s21 = inlined_call_operand.vmem [shape: f32[16,128], index: 21, kind: output, shape index: {}]
  %s22 = sld [smem:[#allocation0]]
  $region117: #{lm_relation_net_forward.1} parent=0
    _
  %s24 = ssub.s32 1, %s22
  %s25 = scalar_select 0, %s24, %s22
  %v26 = vstv %s20
  %27 = vst [vmem:[#allocation2] sm:$0x1] %v26
  loop: start=0, step=1, limit=4
  $region2: #{lm_relation_net_forward.1} parent=0 // loop_pre_header
    _
  $region3: #{lm_relation_net_forward.1} parent=0 // loop_header
    %s29 = sphi 0, %s33
    %p30 = scmp.ge.s32.totalorder %s29, 4
    %s39 = sphi 0, %s41
    %s42 = sphi 0, %s39
    %s43 = sphi 0, %s42
    %s59 = sphi 0, %s43
    %s65 = sphi 0, %s67
    %s68 = sphi 0, %s65
    %s69 = sphi 0, %s68
    %s85 = sphi 0, %s69
    %s91 = sphi 0, %s93
    %s94 = sphi 0, %s91
    %s95 = sphi 0, %s94
    %s111 = sphi 0, %s95
    %s117 = sphi 0, %s119
    %s120 = sphi 0, %s117
    %s121 = sphi 0, %s120
    %s137 = sphi 0, %s121
    %s141 = sphi 0, %s141
    %s143 = sphi 0, %s141
    %s144 = sphi 0, %s143
    %s158 = sphi 0, %s144
    %s162 = sphi 0, %s162
    %s164 = sphi 0, %s162
    %s165 = sphi 0, %s164
    %s179 = sphi 0, %s165
    %s183 = sphi 0, %s183
    %s185 = sphi 0, %s183
    %s186 = sphi 0, %s185
    %s200 = sphi 0, %s186
    %s204 = sphi 0, %s204
    %s206 = sphi 0, %s204
    %s207 = sphi 0, %s206
    %s221 = sphi 0, %s207
    %s225 = sphi 0, %s225
    %s227 = sphi 0, %s225
    %s228 = sphi 0, %s227
    %s242 = sphi 0, %s228
    %s246 = sphi 0, %s246
    %s248 = sphi 0, %s246
    %s249 = sphi 0, %s248
    %s263 = sphi 0, %s249
    %s267 = sphi 0, %s267
    %s269 = sphi 0, %s267
    %s270 = sphi 0, %s269
    %s284 = sphi 0, %s270
    %s288 = sphi 0, %s288
    %s290 = sphi 0, %s288
    %s291 = sphi 0, %s290
    %s305 = sphi 0, %s291
    %s309 = sphi 0, %s309
    %s311 = sphi 0, %s309
    %s312 = sphi 0, %s311
    %s326 = sphi 0, %s312
    %s330 = sphi 0, %s330
    %s332 = sphi 0, %s330
    %s333 = sphi 0, %s332
    %s347 = sphi 0, %s333
    %s351 = sphi 0, %s351
    %s353 = sphi 0, %s351
    %s354 = sphi 0, %s353
    %s368 = sphi 0, %s354
    %s372 = sphi 0, %s372
    %s374 = sphi 0, %s372
    %s375 = sphi 0, %s374
    %s389 = sphi 0, %s375
    %s393 = sphi 0, %s393
    %s395 = sphi 0, %s393
    %s396 = sphi 0, %s395
    %s410 = sphi 0, %s396
    %s414 = sphi 0, %s414
    %s416 = sphi 0, %s414
    %s417 = sphi 0, %s416
    %s431 = sphi 0, %s417
    %s435 = sphi 0, %s435
    %s437 = sphi 0, %s435
    %s438 = sphi 0, %s437
    %s452 = sphi 0, %s438
    %s456 = sphi 0, %s456
    %s458 = sphi 0, %s456
    %s459 = sphi 0, %s458
    %s473 = sphi 0, %s459
    %s477 = sphi 0, %s477
    %s479 = sphi 0, %s477
    %s480 = sphi 0, %s479
    %s494 = sphi 0, %s480
    %s500 = sphi 0, %s502
    %s503 = sphi 0, %s500
    %s504 = sphi 0, %s503
    %s520 = sphi 0, %s504
  $region4: #{lm_relation_net_forward.1} parent=0 // loop_header_branch
    %32 = sbr.rel (%p30) target = $region8
  $region5: #{lm_relation_net_forward.1} parent=0 // loop_body
    %s34 = ssub.s32 %s29, 1
    %s35 = ssub.s32 %s29, 2
    %s36 = sadd.s32 %s29, 1
    %s37 = ssub.s32 %s29, %s36
    %p38 = scmp.eq.s32.totalorder %s37, 0
    %s40 = sadd.s32 %s39, 1
    %s41 = scalar_select %p38, %s39, %s40
    %p44 = pneg %p38
    %p45 = scmp.eq.s32.totalorder %s29, 1
    %p46 = por %p44, %p45
    %p47 = scmp.ne.s32.totalorder %s39, %s42
    %p48 = scmp.eq.s32.totalorder %s29, 0
    %p49 = por %p47, %p48
    %p50 = scmp.ne.s32.totalorder %s39, %s42
    %p51 = scmp.eq.s32.totalorder %s34, 1
    %p52 = por %p50, %p51
    %p53 = scmp.ne.s32.totalorder %s42, %s43
    %p54 = scmp.eq.s32.totalorder %s34, 0
    %p55 = por %p53, %p54
    %p56 = scmp.ne.s32.totalorder %s42, %s43
    %p57 = scmp.eq.s32.totalorder %s35, 1
    %p58 = por %p56, %p57
    %p60 = scmp.ne.s32.totalorder %s43, %s59
    %p61 = scmp.eq.s32.totalorder %s35, 0
    %p62 = por %p60, %p61
    %s63 = ssub.s32 %s29, %s36
    %p64 = scmp.eq.s32.totalorder %s63, 0
    %s66 = sadd.s32 %s65, 1
    %s67 = scalar_select %p64, %s65, %s66
    %p70 = pneg %p64
    %p71 = scmp.eq.s32.totalorder %s29, 1
    %p72 = por %p70, %p71
    %p73 = scmp.ne.s32.totalorder %s65, %s68
    %p74 = scmp.eq.s32.totalorder %s29, 0
    %p75 = por %p73, %p74
    %p76 = scmp.ne.s32.totalorder %s65, %s68
    %p77 = scmp.eq.s32.totalorder %s34, 1
    %p78 = por %p76, %p77
    %p79 = scmp.ne.s32.totalorder %s68, %s69
    %p80 = scmp.eq.s32.totalorder %s34, 0
    %p81 = por %p79, %p80
    %p82 = scmp.ne.s32.totalorder %s68, %s69
    %p83 = scmp.eq.s32.totalorder %s35, 1
    %p84 = por %p82, %p83
    %p86 = scmp.ne.s32.totalorder %s69, %s85
    %p87 = scmp.eq.s32.totalorder %s35, 0
    %p88 = por %p86, %p87
    %s89 = ssub.s32 %s29, %s36
    %p90 = scmp.eq.s32.totalorder %s89, 0
    %s92 = sadd.s32 %s91, 1
    %s93 = scalar_select %p90, %s91, %s92
    %p96 = pneg %p90
    %p97 = scmp.eq.s32.totalorder %s29, 1
    %p98 = por %p96, %p97
    %p99 = scmp.ne.s32.totalorder %s91, %s94
    %p100 = scmp.eq.s32.totalorder %s29, 0
    %p101 = por %p99, %p100
    %p102 = scmp.ne.s32.totalorder %s91, %s94
    %p103 = scmp.eq.s32.totalorder %s34, 1
    %p104 = por %p102, %p103
    %p105 = scmp.ne.s32.totalorder %s94, %s95
    %p106 = scmp.eq.s32.totalorder %s34, 0
    %p107 = por %p105, %p106
    %p108 = scmp.ne.s32.totalorder %s94, %s95
    %p109 = scmp.eq.s32.totalorder %s35, 1
    %p110 = por %p108, %p109
    %p112 = scmp.ne.s32.totalorder %s95, %s111
    %p113 = scmp.eq.s32.totalorder %s35, 0
    %p114 = por %p112, %p113
    %s115 = ssub.s32 %s29, %s36
    %p116 = scmp.eq.s32.totalorder %s115, 0
    %s118 = sadd.s32 %s117, 1
    %s119 = scalar_select %p116, %s117, %s118
    %p122 = pneg %p116
    %p123 = scmp.eq.s32.totalorder %s29, 1
    %p124 = por %p122, %p123
    %p125 = scmp.ne.s32.totalorder %s117, %s120
    %p126 = scmp.eq.s32.totalorder %s29, 0
    %p127 = por %p125, %p126
    %p128 = scmp.ne.s32.totalorder %s117, %s120
    %p129 = scmp.eq.s32.totalorder %s34, 1
    %p130 = por %p128, %p129
    %p131 = scmp.ne.s32.totalorder %s120, %s121
    %p132 = scmp.eq.s32.totalorder %s34, 0
    %p133 = por %p131, %p132
    %p134 = scmp.ne.s32.totalorder %s120, %s121
    %p135 = scmp.eq.s32.totalorder %s35, 1
    %p136 = por %p134, %p135
    %p138 = scmp.ne.s32.totalorder %s121, %s137
    %p139 = scmp.eq.s32.totalorder %s35, 0
    %p140 = por %p138, %p139
    %s142 = sadd.s32 %s141, 1
    %p145 = scmp.eq.s32.totalorder %s29, 1
    %p146 = scmp.ne.s32.totalorder %s141, %s143
    %p147 = scmp.eq.s32.totalorder %s29, 0
    %p148 = por %p146, %p147
    %p149 = scmp.ne.s32.totalorder %s141, %s143
    %p150 = scmp.eq.s32.totalorder %s34, 1
    %p151 = por %p149, %p150
    %p152 = scmp.ne.s32.totalorder %s143, %s144
    %p153 = scmp.eq.s32.totalorder %s34, 0
    %p154 = por %p152, %p153
    %p155 = scmp.ne.s32.totalorder %s143, %s144
    %p156 = scmp.eq.s32.totalorder %s35, 1
    %p157 = por %p155, %p156
    %p159 = scmp.ne.s32.totalorder %s144, %s158
    %p160 = scmp.eq.s32.totalorder %s35, 0
    %p161 = por %p159, %p160
    %s163 = sadd.s32 %s162, 1
    %p166 = scmp.eq.s32.totalorder %s29, 1
    %p167 = scmp.ne.s32.totalorder %s162, %s164
    %p168 = scmp.eq.s32.totalorder %s29, 0
    %p169 = por %p167, %p168
    %p170 = scmp.ne.s32.totalorder %s162, %s164
    %p171 = scmp.eq.s32.totalorder %s34, 1
    %p172 = por %p170, %p171
    %p173 = scmp.ne.s32.totalorder %s164, %s165
    %p174 = scmp.eq.s32.totalorder %s34, 0
    %p175 = por %p173, %p174
    %p176 = scmp.ne.s32.totalorder %s164, %s165
    %p177 = scmp.eq.s32.totalorder %s35, 1
    %p178 = por %p176, %p177
    %p180 = scmp.ne.s32.totalorder %s165, %s179
    %p181 = scmp.eq.s32.totalorder %s35, 0
    %p182 = por %p180, %p181
    %s184 = sadd.s32 %s183, 1
    %p187 = scmp.eq.s32.totalorder %s29, 1
    %p188 = scmp.ne.s32.totalorder %s183, %s185
    %p189 = scmp.eq.s32.totalorder %s29, 0
    %p190 = por %p188, %p189
    %p191 = scmp.ne.s32.totalorder %s183, %s185
    %p192 = scmp.eq.s32.totalorder %s34, 1
    %p193 = por %p191, %p192
    %p194 = scmp.ne.s32.totalorder %s185, %s186
    %p195 = scmp.eq.s32.totalorder %s34, 0
    %p196 = por %p194, %p195
    %p197 = scmp.ne.s32.totalorder %s185, %s186
    %p198 = scmp.eq.s32.totalorder %s35, 1
    %p199 = por %p197, %p198
    %p201 = scmp.ne.s32.totalorder %s186, %s200
    %p202 = scmp.eq.s32.totalorder %s35, 0
    %p203 = por %p201, %p202
    %s205 = sadd.s32 %s204, 1
    %p208 = scmp.eq.s32.totalorder %s29, 1
    %p209 = scmp.ne.s32.totalorder %s204, %s206
    %p210 = scmp.eq.s32.totalorder %s29, 0
    %p211 = por %p209, %p210
    %p212 = scmp.ne.s32.totalorder %s204, %s206
    %p213 = scmp.eq.s32.totalorder %s34, 1
    %p214 = por %p212, %p213
    %p215 = scmp.ne.s32.totalorder %s206, %s207
    %p216 = scmp.eq.s32.totalorder %s34, 0
    %p217 = por %p215, %p216
    %p218 = scmp.ne.s32.totalorder %s206, %s207
    %p219 = scmp.eq.s32.totalorder %s35, 1
    %p220 = por %p218, %p219
    %p222 = scmp.ne.s32.totalorder %s207, %s221
    %p223 = scmp.eq.s32.totalorder %s35, 0
    %p224 = por %p222, %p223
    %s226 = sadd.s32 %s225, 1
    %p229 = scmp.eq.s32.totalorder %s29, 1
    %p230 = scmp.ne.s32.totalorder %s225, %s227
    %p231 = scmp.eq.s32.totalorder %s29, 0
    %p232 = por %p230, %p231
    %p233 = scmp.ne.s32.totalorder %s225, %s227
    %p234 = scmp.eq.s32.totalorder %s34, 1
    %p235 = por %p233, %p234
    %p236 = scmp.ne.s32.totalorder %s227, %s228
    %p237 = scmp.eq.s32.totalorder %s34, 0
    %p238 = por %p236, %p237
    %p239 = scmp.ne.s32.totalorder %s227, %s228
    %p240 = scmp.eq.s32.totalorder %s35, 1
    %p241 = por %p239, %p240
    %p243 = scmp.ne.s32.totalorder %s228, %s242
    %p244 = scmp.eq.s32.totalorder %s35, 0
    %p245 = por %p243, %p244
    %s247 = sadd.s32 %s246, 1
    %p250 = scmp.eq.s32.totalorder %s29, 1
    %p251 = scmp.ne.s32.totalorder %s246, %s248
    %p252 = scmp.eq.s32.totalorder %s29, 0
    %p253 = por %p251, %p252
    %p254 = scmp.ne.s32.totalorder %s246, %s248
    %p255 = scmp.eq.s32.totalorder %s34, 1
    %p256 = por %p254, %p255
    %p257 = scmp.ne.s32.totalorder %s248, %s249
    %p258 = scmp.eq.s32.totalorder %s34, 0
    %p259 = por %p257, %p258
    %p260 = scmp.ne.s32.totalorder %s248, %s249
    %p261 = scmp.eq.s32.totalorder %s35, 1
    %p262 = por %p260, %p261
    %p264 = scmp.ne.s32.totalorder %s249, %s263
    %p265 = scmp.eq.s32.totalorder %s35, 0
    %p266 = por %p264, %p265
    %s268 = sadd.s32 %s267, 1
    %p271 = scmp.eq.s32.totalorder %s29, 1
    %p272 = scmp.ne.s32.totalorder %s267, %s269
    %p273 = scmp.eq.s32.totalorder %s29, 0
    %p274 = por %p272, %p273
    %p275 = scmp.ne.s32.totalorder %s267, %s269
    %p276 = scmp.eq.s32.totalorder %s34, 1
    %p277 = por %p275, %p276
    %p278 = scmp.ne.s32.totalorder %s269, %s270
    %p279 = scmp.eq.s32.totalorder %s34, 0
    %p280 = por %p278, %p279
    %p281 = scmp.ne.s32.totalorder %s269, %s270
    %p282 = scmp.eq.s32.totalorder %s35, 1
    %p283 = por %p281, %p282
    %p285 = scmp.ne.s32.totalorder %s270, %s284
    %p286 = scmp.eq.s32.totalorder %s35, 0
    %p287 = por %p285, %p286
    %s289 = sadd.s32 %s288, 1
    %p292 = scmp.eq.s32.totalorder %s29, 1
    %p293 = scmp.ne.s32.totalorder %s288, %s290
    %p294 = scmp.eq.s32.totalorder %s29, 0
    %p295 = por %p293, %p294
    %p296 = scmp.ne.s32.totalorder %s288, %s290
    %p297 = scmp.eq.s32.totalorder %s34, 1
    %p298 = por %p296, %p297
    %p299 = scmp.ne.s32.totalorder %s290, %s291
    %p300 = scmp.eq.s32.totalorder %s34, 0
    %p301 = por %p299, %p300
    %p302 = scmp.ne.s32.totalorder %s290, %s291
    %p303 = scmp.eq.s32.totalorder %s35, 1
    %p304 = por %p302, %p303
    %p306 = scmp.ne.s32.totalorder %s291, %s305
    %p307 = scmp.eq.s32.totalorder %s35, 0
    %p308 = por %p306, %p307
    %s310 = sadd.s32 %s309, 1
    %p313 = scmp.eq.s32.totalorder %s29, 1
    %p314 = scmp.ne.s32.totalorder %s309, %s311
    %p315 = scmp.eq.s32.totalorder %s29, 0
    %p316 = por %p314, %p315
    %p317 = scmp.ne.s32.totalorder %s309, %s311
    %p318 = scmp.eq.s32.totalorder %s34, 1
    %p319 = por %p317, %p318
    %p320 = scmp.ne.s32.totalorder %s311, %s312
    %p321 = scmp.eq.s32.totalorder %s34, 0
    %p322 = por %p320, %p321
    %p323 = scmp.ne.s32.totalorder %s311, %s312
    %p324 = scmp.eq.s32.totalorder %s35, 1
    %p325 = por %p323, %p324
    %p327 = scmp.ne.s32.totalorder %s312, %s326
    %p328 = scmp.eq.s32.totalorder %s35, 0
    %p329 = por %p327, %p328
    %s331 = sadd.s32 %s330, 1
    %p334 = scmp.eq.s32.totalorder %s29, 1
    %p335 = scmp.ne.s32.totalorder %s330, %s332
    %p336 = scmp.eq.s32.totalorder %s29, 0
    %p337 = por %p335, %p336
    %p338 = scmp.ne.s32.totalorder %s330, %s332
    %p339 = scmp.eq.s32.totalorder %s34, 1
    %p340 = por %p338, %p339
    %p341 = scmp.ne.s32.totalorder %s332, %s333
    %p342 = scmp.eq.s32.totalorder %s34, 0
    %p343 = por %p341, %p342
    %p344 = scmp.ne.s32.totalorder %s332, %s333
    %p345 = scmp.eq.s32.totalorder %s35, 1
    %p346 = por %p344, %p345
    %p348 = scmp.ne.s32.totalorder %s333, %s347
    %p349 = scmp.eq.s32.totalorder %s35, 0
    %p350 = por %p348, %p349
    %s352 = sadd.s32 %s351, 1
    %p355 = scmp.eq.s32.totalorder %s29, 1
    %p356 = scmp.ne.s32.totalorder %s351, %s353
    %p357 = scmp.eq.s32.totalorder %s29, 0
    %p358 = por %p356, %p357
    %p359 = scmp.ne.s32.totalorder %s351, %s353
    %p360 = scmp.eq.s32.totalorder %s34, 1
    %p361 = por %p359, %p360
    %p362 = scmp.ne.s32.totalorder %s353, %s354
    %p363 = scmp.eq.s32.totalorder %s34, 0
    %p364 = por %p362, %p363
    %p365 = scmp.ne.s32.totalorder %s353, %s354
    %p366 = scmp.eq.s32.totalorder %s35, 1
    %p367 = por %p365, %p366
    %p369 = scmp.ne.s32.totalorder %s354, %s368
    %p370 = scmp.eq.s32.totalorder %s35, 0
    %p371 = por %p369, %p370
    %s373 = sadd.s32 %s372, 1
    %p376 = scmp.eq.s32.totalorder %s29, 1
    %p377 = scmp.ne.s32.totalorder %s372, %s374
    %p378 = scmp.eq.s32.totalorder %s29, 0
    %p379 = por %p377, %p378
    %p380 = scmp.ne.s32.totalorder %s372, %s374
    %p381 = scmp.eq.s32.totalorder %s34, 1
    %p382 = por %p380, %p381
    %p383 = scmp.ne.s32.totalorder %s374, %s375
    %p384 = scmp.eq.s32.totalorder %s34, 0
    %p385 = por %p383, %p384
    %p386 = scmp.ne.s32.totalorder %s374, %s375
    %p387 = scmp.eq.s32.totalorder %s35, 1
    %p388 = por %p386, %p387
    %p390 = scmp.ne.s32.totalorder %s375, %s389
    %p391 = scmp.eq.s32.totalorder %s35, 0
    %p392 = por %p390, %p391
    %s394 = sadd.s32 %s393, 1
    %p397 = scmp.eq.s32.totalorder %s29, 1
    %p398 = scmp.ne.s32.totalorder %s393, %s395
    %p399 = scmp.eq.s32.totalorder %s29, 0
    %p400 = por %p398, %p399
    %p401 = scmp.ne.s32.totalorder %s393, %s395
    %p402 = scmp.eq.s32.totalorder %s34, 1
    %p403 = por %p401, %p402
    %p404 = scmp.ne.s32.totalorder %s395, %s396
    %p405 = scmp.eq.s32.totalorder %s34, 0
    %p406 = por %p404, %p405
    %p407 = scmp.ne.s32.totalorder %s395, %s396
    %p408 = scmp.eq.s32.totalorder %s35, 1
    %p409 = por %p407, %p408
    %p411 = scmp.ne.s32.totalorder %s396, %s410
    %p412 = scmp.eq.s32.totalorder %s35, 0
    %p413 = por %p411, %p412
    %s415 = sadd.s32 %s414, 1
    %p418 = scmp.eq.s32.totalorder %s29, 1
    %p419 = scmp.ne.s32.totalorder %s414, %s416
    %p420 = scmp.eq.s32.totalorder %s29, 0
    %p421 = por %p419, %p420
    %p422 = scmp.ne.s32.totalorder %s414, %s416
    %p423 = scmp.eq.s32.totalorder %s34, 1
    %p424 = por %p422, %p423
    %p425 = scmp.ne.s32.totalorder %s416, %s417
    %p426 = scmp.eq.s32.totalorder %s34, 0
    %p427 = por %p425, %p426
    %p428 = scmp.ne.s32.totalorder %s416, %s417
    %p429 = scmp.eq.s32.totalorder %s35, 1
    %p430 = por %p428, %p429
    %p432 = scmp.ne.s32.totalorder %s417, %s431
    %p433 = scmp.eq.s32.totalorder %s35, 0
    %p434 = por %p432, %p433
    %s436 = sadd.s32 %s435, 1
    %p439 = scmp.eq.s32.totalorder %s29, 1
    %p440 = scmp.ne.s32.totalorder %s435, %s437
    %p441 = scmp.eq.s32.totalorder %s29, 0
    %p442 = por %p440, %p441
    %p443 = scmp.ne.s32.totalorder %s435, %s437
    %p444 = scmp.eq.s32.totalorder %s34, 1
    %p445 = por %p443, %p444
    %p446 = scmp.ne.s32.totalorder %s437, %s438
    %p447 = scmp.eq.s32.totalorder %s34, 0
    %p448 = por %p446, %p447
    %p449 = scmp.ne.s32.totalorder %s437, %s438
    %p450 = scmp.eq.s32.totalorder %s35, 1
    %p451 = por %p449, %p450
    %p453 = scmp.ne.s32.totalorder %s438, %s452
    %p454 = scmp.eq.s32.totalorder %s35, 0
    %p455 = por %p453, %p454
    %s457 = sadd.s32 %s456, 1
    %p460 = scmp.eq.s32.totalorder %s29, 1
    %p461 = scmp.ne.s32.totalorder %s456, %s458
    %p462 = scmp.eq.s32.totalorder %s29, 0
    %p463 = por %p461, %p462
    %p464 = scmp.ne.s32.totalorder %s456, %s458
    %p465 = scmp.eq.s32.totalorder %s34, 1
    %p466 = por %p464, %p465
    %p467 = scmp.ne.s32.totalorder %s458, %s459
    %p468 = scmp.eq.s32.totalorder %s34, 0
    %p469 = por %p467, %p468
    %p470 = scmp.ne.s32.totalorder %s458, %s459
    %p471 = scmp.eq.s32.totalorder %s35, 1
    %p472 = por %p470, %p471
    %p474 = scmp.ne.s32.totalorder %s459, %s473
    %p475 = scmp.eq.s32.totalorder %s35, 0
    %p476 = por %p474, %p475
    %s478 = sadd.s32 %s477, 1
    %p481 = scmp.eq.s32.totalorder %s29, 1
    %p482 = scmp.ne.s32.totalorder %s477, %s479
    %p483 = scmp.eq.s32.totalorder %s29, 0
    %p484 = por %p482, %p483
    %p485 = scmp.ne.s32.totalorder %s477, %s479
    %p486 = scmp.eq.s32.totalorder %s34, 1
    %p487 = por %p485, %p486
    %p488 = scmp.ne.s32.totalorder %s479, %s480
    %p489 = scmp.eq.s32.totalorder %s34, 0
    %p490 = por %p488, %p489
    %p491 = scmp.ne.s32.totalorder %s479, %s480
    %p492 = scmp.eq.s32.totalorder %s35, 1
    %p493 = por %p491, %p492
    %p495 = scmp.ne.s32.totalorder %s480, %s494
    %p496 = scmp.eq.s32.totalorder %s35, 0
    %p497 = por %p495, %p496
    %s498 = ssub.s32 %s29, %s36
    %p499 = scmp.eq.s32.totalorder %s498, 0
    %s501 = sadd.s32 %s500, 1
    %s502 = scalar_select %p499, %s500, %s501
    %p505 = pneg %p499
    %p506 = scmp.eq.s32.totalorder %s29, 1
    %p507 = por %p505, %p506
    %p508 = scmp.ne.s32.totalorder %s500, %s503
    %p509 = scmp.eq.s32.totalorder %s29, 0
    %p510 = por %p508, %p509
    %p511 = scmp.ne.s32.totalorder %s500, %s503
    %p512 = scmp.eq.s32.totalorder %s34, 1
    %p513 = por %p511, %p512
    %p514 = scmp.ne.s32.totalorder %s503, %s504
    %p515 = scmp.eq.s32.totalorder %s34, 0
    %p516 = por %p514, %p515
    %p517 = scmp.ne.s32.totalorder %s503, %s504
    %p518 = scmp.eq.s32.totalorder %s35, 1
    %p519 = por %p517, %p518
    %p521 = scmp.ne.s32.totalorder %s504, %s520
    %p522 = scmp.eq.s32.totalorder %s35, 0
    %p523 = por %p521, %p522
    %p524 = scmp.le.s32.totalorder 1, %s29
    %p525 = scmp.lt.s32.totalorder %s29, 3
    %p526 = pnand %p524, %p525
    %p527 = pneg %p526
    // Predicated region
    $region9: #{lm_relation_net_forward.1} parent=5 // pred_check
      _
    $region10: #{lm_relation_net_forward.1} parent=5 // pred_check_branch
      %529 = sbr.rel (%p526) target = $region12
    $region11: #{lm_relation_net_forward.1} parent=5 // pred_region
      %s530 = ssub.s32 %s29, 1
      // Predicated region
      $region13: #{lm_relation_net_forward.1} parent=11 // pred_check
        %p531 = pneg %p154
      $region14: #{lm_relation_net_forward.1} parent=11 // pred_check_branch
        %533 = sbr.rel (%p531) target = $region16
      $region15: #{lm_relation_net_forward.1} parent=11 // pred_region
        _
      $region16: #{lm_relation_net_forward.1} parent=11 // pred_fallthru
        _
      // Predicated region
      $region17: #{lm_relation_net_forward.1} parent=11 // pred_check
        %p534 = pneg %p175
      $region18: #{lm_relation_net_forward.1} parent=11 // pred_check_branch
        %536 = sbr.rel (%p534) target = $region20
      $region19: #{lm_relation_net_forward.1} parent=11 // pred_region
        _
      $region20: #{lm_relation_net_forward.1} parent=11 // pred_fallthru
        _
      // Predicated region
      $region21: #{lm_relation_net_forward.1} parent=11 // pred_check
        %p537 = pneg %p196
      $region22: #{lm_relation_net_forward.1} parent=11 // pred_check_branch
        %539 = sbr.rel (%p537) target = $region24
      $region23: #{lm_relation_net_forward.1} parent=11 // pred_region
        _
      $region24: #{lm_relation_net_forward.1} parent=11 // pred_fallthru
        _
      // Predicated region
      $region25: #{lm_relation_net_forward.1} parent=11 // pred_check
        %p540 = pneg %p217
      $region26: #{lm_relation_net_forward.1} parent=11 // pred_check_branch
        %542 = sbr.rel (%p540) target = $region28
      $region27: #{lm_relation_net_forward.1} parent=11 // pred_region
        _
      $region28: #{lm_relation_net_forward.1} parent=11 // pred_fallthru
        _
      // Predicated region
      $region29: #{lm_relation_net_forward.1} parent=11 // pred_check
        %p543 = pneg %p238
      $region30: #{lm_relation_net_forward.1} parent=11 // pred_check_branch
        %545 = sbr.rel (%p543) target = $region32
      $region31: #{lm_relation_net_forward.1} parent=11 // pred_region
        _
      $region32: #{lm_relation_net_forward.1} parent=11 // pred_fallthru
        _
      // Predicated region
      $region33: #{lm_relation_net_forward.1} parent=11 // pred_check
        %p546 = pneg %p259
      $region34: #{lm_relation_net_forward.1} parent=11 // pred_check_branch
        %548 = sbr.rel (%p546) target = $region36
      $region35: #{lm_relation_net_forward.1} parent=11 // pred_region
        _
      $region36: #{lm_relation_net_forward.1} parent=11 // pred_fallthru
        _
      // Predicated region
      $region37: #{lm_relation_net_forward.1} parent=11 // pred_check
        %p549 = pneg %p280
      $region38: #{lm_relation_net_forward.1} parent=11 // pred_check_branch
        %551 = sbr.rel (%p549) target = $region40
      $region39: #{lm_relation_net_forward.1} parent=11 // pred_region
        _
      $region40: #{lm_relation_net_forward.1} parent=11 // pred_fallthru
        _
      // Predicated region
      $region41: #{lm_relation_net_forward.1} parent=11 // pred_check
        %p552 = pneg %p301
      $region42: #{lm_relation_net_forward.1} parent=11 // pred_check_branch
        %554 = sbr.rel (%p552) target = $region44
      $region43: #{lm_relation_net_forward.1} parent=11 // pred_region
        _
      $region44: #{lm_relation_net_forward.1} parent=11 // pred_fallthru
        _
      // Predicated region
      $region45: #{lm_relation_net_forward.1} parent=11 // pred_check
        %p555 = pneg %p322
      $region46: #{lm_relation_net_forward.1} parent=11 // pred_check_branch
        %557 = sbr.rel (%p555) target = $region48
      $region47: #{lm_relation_net_forward.1} parent=11 // pred_region
        _
      $region48: #{lm_relation_net_forward.1} parent=11 // pred_fallthru
        _
      // Predicated region
      $region49: #{lm_relation_net_forward.1} parent=11 // pred_check
        %p558 = pneg %p343
      $region50: #{lm_relation_net_forward.1} parent=11 // pred_check_branch
        %560 = sbr.rel (%p558) target = $region52
      $region51: #{lm_relation_net_forward.1} parent=11 // pred_region
        _
      $region52: #{lm_relation_net_forward.1} parent=11 // pred_fallthru
        _
      // Predicated region
      $region53: #{lm_relation_net_forward.1} parent=11 // pred_check
        %p561 = pneg %p364
      $region54: #{lm_relation_net_forward.1} parent=11 // pred_check_branch
        %563 = sbr.rel (%p561) target = $region56
      $region55: #{lm_relation_net_forward.1} parent=11 // pred_region
        _
      $region56: #{lm_relation_net_forward.1} parent=11 // pred_fallthru
        _
      // Predicated region
      $region57: #{lm_relation_net_forward.1} parent=11 // pred_check
        %p564 = pneg %p385
      $region58: #{lm_relation_net_forward.1} parent=11 // pred_check_branch
        %566 = sbr.rel (%p564) target = $region60
      $region59: #{lm_relation_net_forward.1} parent=11 // pred_region
        _
      $region60: #{lm_relation_net_forward.1} parent=11 // pred_fallthru
        _
      // Predicated region
      $region61: #{lm_relation_net_forward.1} parent=11 // pred_check
        %p567 = pneg %p406
      $region62: #{lm_relation_net_forward.1} parent=11 // pred_check_branch
        %569 = sbr.rel (%p567) target = $region64
      $region63: #{lm_relation_net_forward.1} parent=11 // pred_region
        _
      $region64: #{lm_relation_net_forward.1} parent=11 // pred_fallthru
        _
      // Predicated region
      $region65: #{lm_relation_net_forward.1} parent=11 // pred_check
        %p570 = pneg %p427
      $region66: #{lm_relation_net_forward.1} parent=11 // pred_check_branch
        %572 = sbr.rel (%p570) target = $region68
      $region67: #{lm_relation_net_forward.1} parent=11 // pred_region
        _
      $region68: #{lm_relation_net_forward.1} parent=11 // pred_fallthru
        _
      // Predicated region
      $region69: #{lm_relation_net_forward.1} parent=11 // pred_check
        %p573 = pneg %p448
      $region70: #{lm_relation_net_forward.1} parent=11 // pred_check_branch
        %575 = sbr.rel (%p573) target = $region72
      $region71: #{lm_relation_net_forward.1} parent=11 // pred_region
        _
      $region72: #{lm_relation_net_forward.1} parent=11 // pred_fallthru
        _
      // Predicated region
      $region73: #{lm_relation_net_forward.1} parent=11 // pred_check
        %p576 = pneg %p469
      $region74: #{lm_relation_net_forward.1} parent=11 // pred_check_branch
        %578 = sbr.rel (%p576) target = $region76
      $region75: #{lm_relation_net_forward.1} parent=11 // pred_region
        _
      $region76: #{lm_relation_net_forward.1} parent=11 // pred_fallthru
        _
      // Predicated region
      $region77: #{lm_relation_net_forward.1} parent=11 // pred_check
        %p579 = pneg %p490
      $region78: #{lm_relation_net_forward.1} parent=11 // pred_check_branch
        %581 = sbr.rel (%p579) target = $region80
      $region79: #{lm_relation_net_forward.1} parent=11 // pred_region
        _
      $region80: #{lm_relation_net_forward.1} parent=11 // pred_fallthru
        _
    $region12: #{lm_relation_net_forward.1} parent=5 // pred_fallthru
      _
    %p582 = scmp.lt.s32.totalorder %s29, 2
    // Predicated region
    $region81: #{lm_relation_net_forward.1} parent=5 // pred_check
      %p583 = pneg %p582
    $region82: #{lm_relation_net_forward.1} parent=5 // pred_check_branch
      %585 = sbr.rel (%p583) target = $region84
    $region83: #{lm_relation_net_forward.1} parent=5 // pred_region
      // Predicated region
      $region85: #{lm_relation_net_forward.1} parent=83 // pred_check
        %p586 = pneg %p49
      $region86: #{lm_relation_net_forward.1} parent=83 // pred_check_branch
        %588 = sbr.rel (%p586) target = $region88
      $region87: #{lm_relation_net_forward.1} parent=83 // pred_region
        %p589 = scmp.lt.s32.totalorder %s29, 1
        %s590 = scalar_select %p589, %s29, 1
        %s591 = smul.addr %s590, 8
        %s592 = scalar_lea.vmem %s0, %s591
      $region88: #{lm_relation_net_forward.1} parent=83 // pred_fallthru
        _
      // Predicated region
      $region89: #{lm_relation_net_forward.1} parent=83 // pred_check
        %p593 = pneg %p75
      $region90: #{lm_relation_net_forward.1} parent=83 // pred_check_branch
        %595 = sbr.rel (%p593) target = $region92
      $region91: #{lm_relation_net_forward.1} parent=83 // pred_region
        %s596 = smul.u32 4, %s29
        %p597 = scmp.lt.s32.totalorder %s596, 7
        %s598 = scalar_select %p597, %s596, 7
        %s599 = smul.addr %s598, 4
        %s600 = scalar_lea.vmem %s1, %s599
        %s601 = smul.u32 4, %s29
      $region92: #{lm_relation_net_forward.1} parent=83 // pred_fallthru
        _
      // Predicated region
      $region93: #{lm_relation_net_forward.1} parent=83 // pred_check
        %p602 = pneg %p101
      $region94: #{lm_relation_net_forward.1} parent=83 // pred_check_branch
        %604 = sbr.rel (%p602) target = $region96
      $region95: #{lm_relation_net_forward.1} parent=83 // pred_region
        %s605 = smul.u32 8, %s29
        %p606 = scmp.lt.s32.totalorder %s605, 15
        %s607 = scalar_select %p606, %s605, 15
        %s608 = smul.addr %s607, 4
        %s609 = scalar_lea.vmem %s2, %s608
        %s610 = smul.u32 8, %s29
      $region96: #{lm_relation_net_forward.1} parent=83 // pred_fallthru
        _
      // Predicated region
      $region97: #{lm_relation_net_forward.1} parent=83 // pred_check
        %p611 = pneg %p127
      $region98: #{lm_relation_net_forward.1} parent=83 // pred_check_branch
        %613 = sbr.rel (%p611) target = $region100
      $region99: #{lm_relation_net_forward.1} parent=83 // pred_region
        %p614 = scmp.lt.s32.totalorder %s29, 1
        %s615 = scalar_select %p614, %s29, 1
        %s616 = smul.addr %s615, 8
        %s617 = scalar_lea.vmem %s3, %s616
      $region100: #{lm_relation_net_forward.1} parent=83 // pred_fallthru
        _
    $region84: #{lm_relation_net_forward.1} parent=5 // pred_fallthru
      _
    %p618 = scmp.le.s32.totalorder 1, %s29
    %p619 = scmp.lt.s32.totalorder %s29, 3
    %p620 = pnand %p618, %p619
    %p621 = pneg %p620
    // Predicated region
    $region101: #{lm_relation_net_forward.1} parent=5 // pred_check
      _
    $region102: #{lm_relation_net_forward.1} parent=5 // pred_check_branch
      %623 = sbr.rel (%p620) target = $region104
    $region103: #{lm_relation_net_forward.1} parent=5 // pred_region
      %s624 = ssub.s32 %s29, 1
      %p625 = scmp.lt.s32.totalorder %s34, 1
      %s626 = scalar_select %p625, %s34, 1
      %s627 = smul.addr %s626, 8
      %s628 = scalar_lea.vmem %s0, %s627
      %p629 = pneg %p55
      %p630 = pneg %p52
      %s631 = smul.u32 4, %s34
      %p632 = scmp.lt.s32.totalorder %s631, 7
      %s633 = scalar_select %p632, %s631, 7
      %s634 = smul.addr %s633, 4
      %s635 = scalar_lea.vmem %s1, %s634
      %p636 = pneg %p81
      %p637 = pneg %p78
      %s638 = smul.u32 8, %s34
      %p639 = scmp.lt.s32.totalorder %s638, 15
      %s640 = scalar_select %p639, %s638, 15
      %s641 = smul.addr %s640, 4
      %s642 = scalar_lea.vmem %s2, %s641
      %p643 = pneg %p107
      %p644 = pneg %p104
      %p645 = scmp.lt.s32.totalorder %s34, 1
      %s646 = scalar_select %p645, %s34, 1
      %s647 = smul.addr %s646, 8
      %s648 = scalar_lea.vmem %s3, %s647
      %p649 = pneg %p133
      %p650 = pneg %p130
      %p651 = pneg %p154
      %p652 = pneg %p151
      %p653 = pneg %p175
      %p654 = pneg %p172
      %p655 = pneg %p196
      %p656 = pneg %p193
      %p657 = pneg %p217
      %p658 = pneg %p214
      %p659 = pneg %p238
      %p660 = pneg %p235
      %p661 = pneg %p259
      %p662 = pneg %p256
      %p663 = pneg %p280
      %p664 = pneg %p277
      %p665 = pneg %p301
      %p666 = pneg %p298
      %p667 = pneg %p322
      %p668 = pneg %p319
      %p669 = pneg %p343
      %p670 = pneg %p340
      %p671 = pneg %p364
      %p672 = pneg %p361
      %p673 = pneg %p385
      %p674 = pneg %p382
      %p675 = pneg %p406
      %p676 = pneg %p403
      %p677 = pneg %p427
      %p678 = pneg %p424
      %p679 = pneg %p448
      %p680 = pneg %p445
      %p681 = pneg %p469
      %p682 = pneg %p466
      %p683 = pneg %p490
      %p684 = pneg %p487
      %p685 = pneg %p516
      %p686 = pneg %p513
      %p687 = scmp.lt.s32.totalorder %s34, 1
      %s688 = scalar_select %p687, %s34, 1
      %s689 = smul.addr %s688, 8
      %s690 = scalar_lea.vmem %s21, %s689
      %p691 = scmp.lt.s32.totalorder %s34, 1
      %s692 = scalar_select %p691, %s34, 1
      %s693 = smul.addr %s692, 8
      %s694 = scalar_lea.vmem %s0, %s693
      %s695 = smul.u32 4, %s34
      %p696 = scmp.lt.s32.totalorder %s695, 7
      %s697 = scalar_select %p696, %s695, 7
      %s698 = smul.addr %s697, 4
      %s699 = scalar_lea.vmem %s1, %s698
      %s700 = smul.u32 4, %s34
      %s701 = smul.u32 8, %s34
      %p702 = scmp.lt.s32.totalorder %s701, 15
      %s703 = scalar_select %p702, %s701, 15
      %s704 = smul.addr %s703, 4
      %s705 = scalar_lea.vmem %s2, %s704
      %s706 = smul.u32 8, %s34
      %p707 = scmp.lt.s32.totalorder %s34, 1
      %s708 = scalar_select %p707, %s34, 1
      %s709 = smul.addr %s708, 8
      %s710 = scalar_lea.vmem %s3, %s709
      %p711 = scmp.lt.s32.totalorder %s34, 1
      %s712 = scalar_select %p711, %s34, 1
      %s713 = smul.addr %s712, 8
      %s714 = scalar_lea.vmem %s21, %s713
      %v716 = vld [vmem:[%s694] sm:$0xff]
      %v717 = vld [vmem:[%s699] sm:$0xf]
      %v718 = vld [vmem:[%s699 + $0x4] sm:$0xf]
      %v719 = vld [vmem:[%s699 + $0x8] sm:$0xf]
      %v720 = vld [vmem:[%s699 + $0xc] sm:$0xf]
      %v721 = vld [vmem:[%s5] sm:$0xf]
      %v722 = vld [vmem:[%s5 + $0x4] sm:$0xf]
      %v723 = vld [vmem:[%s5 + $0x8] sm:$0xf]
      %v724 = vld [vmem:[%s5 + $0xc] sm:$0xf]
      %v725 = vld [vmem:[%s6] sm:$0x1]
      %v727 = vlaneseq
      %v728 = vshrl.u32 %v727, 7
      %v729 = vsub.s32 0, %v728
      %v730 = vrot.slane %v725, %v729
      %v736 = vunpack.c.l.b16 %v717
      %v737 = vunpack.c.l.b16 %v718
      %v738 = vunpack.c.l.b16 %v719
      %v739 = vunpack.c.l.b16 %v720
      %v740 = vpack.c.b16 %v737, %v736
      %v741 = vpack.c.b16 %v739, %v738
      %v746 = vunpack.c.l.b16 %v721
      %v747 = vunpack.c.l.b16 %v722
      %v748 = vunpack.c.l.b16 %v723
      %v749 = vunpack.c.l.b16 %v724
      %v750 = vpack.c.b16 %v747, %v746
      %v751 = vpack.c.b16 %v749, %v748
      %vm754 = vcmask 261120
      %v756 = vsel %vm754, %v740, 0
      %v759 = vsel %vm754, %v741, 0
      %761 = vmatprep.subr.bf16.mxu0 0
      %762 = vmatpush1.bf16.msra.mxu0 0
      %763 = vmatprep.subr.bf16.mxu0 0
      %764 = vmatpush1.bf16.msra.mxu0 0
      %765 = vmatprep.subr.bf16.mxu0 0
      %766 = vmatpush1.bf16.msra.mxu0 0
      %767 = vmatprep.subr.bf16.mxu0 0
      %768 = vmatpush1.bf16.msra.mxu0 0
      %769 = vmatprep.subr.bf16.mxu0 0
      %770 = vmatpush1.bf16.msra.mxu0 0
      %771 = vmatprep.subr.bf16.mxu0 0
      %772 = vmatpush1.bf16.msra.mxu0 0
      %773 = vmatprep.subr.bf16.mxu0 0
      %774 = vmatpush1.bf16.msra.mxu0 %v751
      %775 = vmatprep.subr.bf16.mxu0 0
      %776 = vmatpush1.bf16.msra.mxu0 %v750
      %777 = vmatprep.subr.bf16.mxu0 0
      %778 = vmatpush2.bf16.msra.mxu0 0
      %779 = vmatprep.subr.bf16.mxu0 0
      %780 = vmatpush2.bf16.msra.mxu0 0
      %781 = vmatprep.subr.bf16.mxu0 0
      %782 = vmatpush2.bf16.msra.mxu0 0
      %783 = vmatprep.subr.bf16.mxu0 0
      %784 = vmatpush2.bf16.msra.mxu0 0
      %785 = vmatprep.subr.bf16.mxu0 0
      %786 = vmatpush2.bf16.msra.mxu0 0
      %787 = vmatprep.subr.bf16.mxu0 0
      %788 = vmatpush2.bf16.msra.mxu0 0
      %789 = vmatprep.subr.bf16.mxu0 0
      %790 = vmatpush2.bf16.msra.mxu0 0
      %791 = vmatprep.subr.bf16.mxu0 0
      %792 = vmatpush2.bf16.msra.mxu0 0
      %793 = vmatprep.mubr.bf16.mxu0 0
      %794 = vmatmul.mubr.bf16.gmra.mxu0 %v756
      %v795 = vpop.f32.mrf.mxu0
      %v796 = vadd.f32 %v730, %v795
      %v797 = vpop.f32.mrf.mxu0
      %v798 = vpop.f32.mrf.mxu0
      %v799 = vadd.f32 %v730, %v798
      %v800 = vpop.f32.mrf.mxu0
      %801 = vmatprep.mubr.bf16.mxu0 0
      %802 = vmatmul.mubr.bf16.gmra.mxu0 %v759
      %v803 = vpop.f32.mrf.mxu0
      %v804 = vadd.f32 %v730, %v803
      %v805 = vpop.f32.mrf.mxu0
      %v806 = vpop.f32.mrf.mxu0
      %v807 = vadd.f32 %v730, %v806
      %v808 = vpop.f32.mrf.mxu0
      %809 = vdwg.mxu0
      %v810 = vtanh.pop %v796
      %v811 = vtanh.pop %v799
      %v812 = vtanh.pop %v804
      %v813 = vtanh.pop %v807
      %v814 = vld [vmem:[%s4] sm:$0xff]
      %v816 = vsel %vm754, %v716, 0
      %v819 = vsel %vm754, %v810, 0
      %v822 = vsel %vm754, %v811, 0
      %v825 = vsel %vm754, %v812, 0
      %v828 = vsel %vm754, %v813, 0
      %830 = vmatprep.subr.mxu0 0.0
      %831 = vmatpush1.xpose.msra.mxu0 0.0
      %832 = vmatprep.subr.mxu0 0.0
      %833 = vmatpush1.xpose.msra.mxu0 0.0
      %834 = vmatprep.subr.mxu0 0.0
      %835 = vmatpush1.xpose.msra.mxu0 0.0
      %836 = vmatprep.subr.mxu0 0.0
      %837 = vmatpush1.xpose.msra.mxu0 0.0
      %838 = vmatprep.subr.mxu0 0.0
      %839 = vmatpush1.xpose.msra.mxu0 0.0
      %840 = vmatprep.subr.mxu0 0.0
      %841 = vmatpush1.xpose.msra.mxu0 0.0
      %842 = vmatprep.subr.mxu0 0.0
      %843 = vmatpush1.xpose.msra.mxu0 0.0
      %844 = vmatprep.subr.mxu0 0.0
      %845 = vmatpush1.xpose.msra.mxu0 0.0
      %846 = vmatprep.subr.mxu0 0.0
      %847 = vmatpush1.xpose.msra.mxu0 0.0
      %848 = vmatprep.subr.mxu0 0.0
      %849 = vmatpush1.xpose.msra.mxu0 0.0
      %850 = vmatprep.subr.mxu0 0.0
      %851 = vmatpush1.xpose.msra.mxu0 0.0
      %852 = vmatprep.subr.mxu0 0.0
      %853 = vmatpush1.xpose.msra.mxu0 0.0
      %854 = vmatprep.subr.mxu0 0.0
      %855 = vmatpush1.xpose.msra.mxu0 %v828
      %856 = vmatprep.subr.mxu0 0.0
      %857 = vmatpush1.xpose.msra.mxu0 %v825
      %858 = vmatprep.subr.mxu0 0.0
      %859 = vmatpush1.xpose.msra.mxu0 %v822
      %860 = vmatprep.subr.mxu0 0.0
      %861 = vmatpush1.xpose.msra.mxu0 %v819
      %862 = vmatprep.subr.mxu0 0.0
      %863 = vmatpush2.xpose.msra.mxu0 0.0
      %864 = vmatprep.subr.mxu0 0.0
      %865 = vmatpush2.xpose.msra.mxu0 0.0
      %866 = vmatprep.subr.mxu0 0.0
      %867 = vmatpush2.xpose.msra.mxu0 0.0
      %868 = vmatprep.subr.mxu0 0.0
      %869 = vmatpush2.xpose.msra.mxu0 0.0
      %870 = vmatprep.subr.mxu0 0.0
      %871 = vmatpush2.xpose.msra.mxu0 0.0
      %872 = vmatprep.subr.mxu0 0.0
      %873 = vmatpush2.xpose.msra.mxu0 0.0
      %874 = vmatprep.subr.mxu0 0.0
      %875 = vmatpush2.xpose.msra.mxu0 0.0
      %876 = vmatprep.subr.mxu0 0.0
      %877 = vmatpush2.xpose.msra.mxu0 0.0
      %878 = vmatprep.subr.mxu0 0.0
      %879 = vmatpush2.xpose.msra.mxu0 0.0
      %880 = vmatprep.subr.mxu0 0.0
      %881 = vmatpush2.xpose.msra.mxu0 0.0
      %882 = vmatprep.subr.mxu0 0.0
      %883 = vmatpush2.xpose.msra.mxu0 0.0
      %884 = vmatprep.subr.mxu0 0.0
      %885 = vmatpush2.xpose.msra.mxu0 0.0
      %886 = vmatprep.subr.mxu0 0.0
      %887 = vmatpush2.xpose.msra.mxu0 0.0
      %888 = vmatprep.subr.mxu0 0.0
      %889 = vmatpush2.xpose.msra.mxu0 0.0
      %890 = vmatprep.subr.mxu0 0.0
      %891 = vmatpush2.xpose.msra.mxu0 0.0
      %892 = vmatprep.subr.mxu0 0.0
      %893 = vmatpush2.xpose.msra.mxu0 0.0
      %894 = vmatprep.mubr.f32.mxu0 0.0
      %895 = vmatmul.mubr.f32.gmra.mxu0 %v816
      %v896 = vpop.f32.mrf.mxu0
      %v897 = vadd.f32 %v814, %v896
      %v898 = vpop.f32.mrf.mxu0
      %899 = vdwg.mxu0
      %v900 = vsel %vm754, %v897, -inf
      %901 = vmax.xlane.f32.xlu0 %v900
      %v902 = vpop.xlane.xlu0 %901
      %v903 = vsub.f32 %v897, %v902
      %v904 = vmul.f32 %v903, 1.442695
      %v905 = vpow.pop %v904
      %v906 = vsel %vm754, %v905, 0.0
      %907 = vadd.xlane.f32.xlu0 %v906
      %v908 = vpop.xlane.xlu0 %907
      %v909 = vrcp.pop %v908
      %v910 = vmul.f32 %v905, %v909
      %v911 = vpack.c.bf16 %v910, %v910
      %v915 = vsel %vm754, %v911, 0
      %917 = vmatprep.subr.bf16.mxu0 0
      %918 = vmatpush1.bf16.msra.mxu0 0
      %919 = vmatprep.subr.bf16.mxu0 0
      %920 = vmatpush1.bf16.msra.mxu0 0
      %921 = vmatprep.subr.bf16.mxu0 0
      %922 = vmatpush1.bf16.msra.mxu0 0
      %923 = vmatprep.subr.bf16.mxu0 0
      %924 = vmatpush1.bf16.msra.mxu0 0
      %925 = vmatprep.subr.bf16.mxu0 0
      %926 = vmatpush1.bf16.msra.mxu0 0
      %927 = vmatprep.subr.bf16.mxu0 0
      %928 = vmatpush1.bf16.msra.mxu0 0
      %929 = vmatprep.subr.bf16.mxu0 0
      %930 = vmatpush1.bf16.msra.mxu0 %v741
      %931 = vmatprep.subr.bf16.mxu0 0
      %932 = vmatpush1.bf16.msra.mxu0 %v740
      %933 = vmatprep.subr.bf16.mxu0 0
      %934 = vmatpush2.bf16.msra.mxu0 0
      %935 = vmatprep.subr.bf16.mxu0 0
      %936 = vmatpush2.bf16.msra.mxu0 0
      %937 = vmatprep.subr.bf16.mxu0 0
      %938 = vmatpush2.bf16.msra.mxu0 0
      %939 = vmatprep.subr.bf16.mxu0 0
      %940 = vmatpush2.bf16.msra.mxu0 0
      %941 = vmatprep.subr.bf16.mxu0 0
      %942 = vmatpush2.bf16.msra.mxu0 0
      %943 = vmatprep.subr.bf16.mxu0 0
      %944 = vmatpush2.bf16.msra.mxu0 0
      %945 = vmatprep.subr.bf16.mxu0 0
      %946 = vmatpush2.bf16.msra.mxu0 0
      %947 = vmatprep.subr.bf16.mxu0 0
      %948 = vmatpush2.bf16.msra.mxu0 0
      %949 = vmatprep.mubr.bf16.mxu0 0
      %950 = vmatmul.mubr.bf16.gmra.mxu0 %v915
      %v951 = vpop.f32.mrf.mxu0
      %v952 = vadd.f32 0.0, %v951
      %v953 = vpop.f32.mrf.mxu0
      %v954 = vpop.f32.mrf.mxu0
      %v955 = vpop.f32.mrf.mxu0
      %956 = vdwg.mxu0
      %v957 = vld [vmem:[%s705] sm:$0xf]
      %v958 = vld [vmem:[%s705 + $0x4] sm:$0xf]
      %v959 = vld [vmem:[%s705 + $0x8] sm:$0xf]
      %v960 = vld [vmem:[%s705 + $0xc] sm:$0xf]
      %v961 = vld [vmem:[%s705 + $0x10] sm:$0xf]
      %v962 = vld [vmem:[%s705 + $0x14] sm:$0xf]
      %v963 = vld [vmem:[%s705 + $0x18] sm:$0xf]
      %v964 = vld [vmem:[%s705 + $0x1c] sm:$0xf]
      %v965 = vld [vmem:[%s7] sm:$0xf]
      %v966 = vld [vmem:[%s7 + $0x4] sm:$0xf]
      %v967 = vld [vmem:[%s7 + $0x8] sm:$0xf]
      %v968 = vld [vmem:[%s7 + $0xc] sm:$0xf]
      %v969 = vld [vmem:[%s7 + $0x10] sm:$0xf]
      %v970 = vld [vmem:[%s7 + $0x14] sm:$0xf]
      %v971 = vld [vmem:[%s8] sm:$0x1]
      %v973 = vlaneseq
      %v974 = vshrl.u32 %v973, 7
      %v975 = vsub.s32 0, %v974
      %v976 = vrot.slane %v971, %v975
      %v986 = vunpack.c.l.b16 %v957
      %v987 = vunpack.c.l.b16 %v958
      %v988 = vunpack.c.l.b16 %v959
      %v989 = vunpack.c.l.b16 %v960
      %v990 = vunpack.c.l.b16 %v961
      %v991 = vunpack.c.l.b16 %v962
      %v992 = vunpack.c.l.b16 %v963
      %v993 = vunpack.c.l.b16 %v964
      %v994 = vpack.c.b16 %v987, %v986
      %v995 = vpack.c.b16 %v989, %v988
      %v996 = vpack.c.b16 %v991, %v990
      %v997 = vpack.c.b16 %v993, %v992
      %v1004 = vunpack.c.l.b16 %v965
      %v1005 = vunpack.c.l.b16 %v966
      %v1006 = vunpack.c.l.b16 %v967
      %v1007 = vunpack.c.l.b16 %v968
      %v1008 = vunpack.c.l.b16 %v969
      %v1009 = vunpack.c.l.b16 %v970
      %v1010 = vpack.c.b16 %v1005, %v1004
      %v1011 = vpack.c.b16 %v1007, %v1006
      %v1012 = vpack.c.b16 %v1009, %v1008
      %vm1016 = vcmask 392192
      %v1018 = vsel %vm1016, %v994, 0
      %v1021 = vsel %vm1016, %v995, 0
      %v1024 = vsel %vm1016, %v996, 0
      %v1027 = vsel %vm1016, %v997, 0
      %1029 = vmatprep.subr.bf16.mxu0 0
      %1030 = vmatpush1.bf16.msra.mxu0 0
      %1031 = vmatprep.subr.bf16.mxu0 0
      %1032 = vmatpush1.bf16.msra.mxu0 0
      %1033 = vmatprep.subr.bf16.mxu0 0
      %1034 = vmatpush1.bf16.msra.mxu0 0
      %1035 = vmatprep.subr.bf16.mxu0 0
      %1036 = vmatpush1.bf16.msra.mxu0 0
      %1037 = vmatprep.subr.bf16.mxu0 0
      %1038 = vmatpush1.bf16.msra.mxu0 0
      %1039 = vmatprep.subr.bf16.mxu0 0
      %1040 = vmatpush1.bf16.msra.mxu0 %v1012
      %1041 = vmatprep.subr.bf16.mxu0 0
      %1042 = vmatpush1.bf16.msra.mxu0 %v1011
      %1043 = vmatprep.subr.bf16.mxu0 0
      %1044 = vmatpush1.bf16.msra.mxu0 %v1010
      %1045 = vmatprep.subr.bf16.mxu0 0
      %1046 = vmatpush2.bf16.msra.mxu0 0
      %1047 = vmatprep.subr.bf16.mxu0 0
      %1048 = vmatpush2.bf16.msra.mxu0 0
      %1049 = vmatprep.subr.bf16.mxu0 0
      %1050 = vmatpush2.bf16.msra.mxu0 0
      %1051 = vmatprep.subr.bf16.mxu0 0
      %1052 = vmatpush2.bf16.msra.mxu0 0
      %1053 = vmatprep.subr.bf16.mxu0 0
      %1054 = vmatpush2.bf16.msra.mxu0 0
      %1055 = vmatprep.subr.bf16.mxu0 0
      %1056 = vmatpush2.bf16.msra.mxu0 0
      %1057 = vmatprep.subr.bf16.mxu0 0
      %1058 = vmatpush2.bf16.msra.mxu0 0
      %1059 = vmatprep.subr.bf16.mxu0 0
      %1060 = vmatpush2.bf16.msra.mxu0 0
      %1061 = vmatprep.mubr.bf16.mxu0 0
      %1062 = vmatmul.mubr.bf16.gmra.mxu0 %v1018
      %v1063 = vpop.f32.mrf.mxu0
      %v1064 = vadd.f32 %v976, %v1063
      %v1065 = vpop.f32.mrf.mxu0
      %v1066 = vpop.f32.mrf.mxu0
      %v1067 = vadd.f32 %v976, %v1066
      %v1068 = vpop.f32.mrf.mxu0
      %1069 = vmatprep.mubr.bf16.mxu0 0
      %1070 = vmatmul.mubr.bf16.gmra.mxu0 %v1021
      %v1071 = vpop.f32.mrf.mxu0
      %v1072 = vadd.f32 %v976, %v1071
      %v1073 = vpop.f32.mrf.mxu0
      %v1074 = vpop.f32.mrf.mxu0
      %v1075 = vadd.f32 %v976, %v1074
      %v1076 = vpop.f32.mrf.mxu0
      %1077 = vmatprep.mubr.bf16.mxu0 0
      %1078 = vmatmul.mubr.bf16.gmra.mxu0 %v1024
      %v1079 = vpop.f32.mrf.mxu0
      %v1080 = vadd.f32 %v976, %v1079
      %v1081 = vpop.f32.mrf.mxu0
      %v1082 = vpop.f32.mrf.mxu0
      %v1083 = vadd.f32 %v976, %v1082
      %v1084 = vpop.f32.mrf.mxu0
      %1085 = vmatprep.mubr.bf16.mxu0 0
      %1086 = vmatmul.mubr.bf16.gmra.mxu0 %v1027
      %v1087 = vpop.f32.mrf.mxu0
      %v1088 = vadd.f32 %v976, %v1087
      %v1089 = vpop.f32.mrf.mxu0
      %v1090 = vpop.f32.mrf.mxu0
      %v1091 = vadd.f32 %v976, %v1090
      %v1092 = vpop.f32.mrf.mxu0
      %1093 = vdwg.mxu0
      %v1094 = vld [vmem:[%s9] sm:$0x1]
      %v1095 = vld [vmem:[%s10] sm:$0x1]
      %vm1096 = vcmask 523264
      %v1097 = vsel %vm1096, %v1064, 0.0
      %1098 = vadd.xlane.f32.xlu0 %v1097
      %v1099 = vpop.xlane.xlu0 %1098
      %v1100 = vsel %vm1096, %v1067, 0.0
      %1101 = vadd.xlane.f32.xlu0 %v1100
      %v1102 = vpop.xlane.xlu0 %1101
      %v1103 = vsel %vm1096, %v1072, 0.0
      %1104 = vadd.xlane.f32.xlu0 %v1103
      %v1105 = vpop.xlane.xlu0 %1104
      %v1106 = vsel %vm1096, %v1075, 0.0
      %1107 = vadd.xlane.f32.xlu0 %v1106
      %v1108 = vpop.xlane.xlu0 %1107
      %v1109 = vsel %vm1096, %v1080, 0.0
      %1110 = vadd.xlane.f32.xlu0 %v1109
      %v1111 = vpop.xlane.xlu0 %1110
      %v1112 = vsel %vm1096, %v1083, 0.0
      %1113 = vadd.xlane.f32.xlu0 %v1112
      %v1114 = vpop.xlane.xlu0 %1113
      %v1115 = vsel %vm1096, %v1088, 0.0
      %1116 = vadd.xlane.f32.xlu0 %v1115
      %v1117 = vpop.xlane.xlu0 %1116
      %v1118 = vsel %vm1096, %v1091, 0.0
      %1119 = vadd.xlane.f32.xlu0 %v1118
      %v1120 = vpop.xlane.xlu0 %1119
      %v1121 = vrcp.pop 64.0
      %v1122 = vmul.f32 %v1099, %v1121
      %v1123 = vmul.f32 %v1102, %v1121
      %v1124 = vmul.f32 %v1105, %v1121
      %v1125 = vmul.f32 %v1108, %v1121
      %v1126 = vmul.f32 %v1111, %v1121
      %v1127 = vmul.f32 %v1114, %v1121
      %v1128 = vmul.f32 %v1117, %v1121
      %v1129 = vmul.f32 %v1120, %v1121
      %v1130 = vmul.f32 %v1064, %v1064
      %v1131 = vmul.f32 %v1067, %v1067
      %v1132 = vmul.f32 %v1072, %v1072
      %v1133 = vmul.f32 %v1075, %v1075
      %v1134 = vmul.f32 %v1080, %v1080
      %v1135 = vmul.f32 %v1083, %v1083
      %v1136 = vmul.f32 %v1088, %v1088
      %v1137 = vmul.f32 %v1091, %v1091
      %v1138 = vsel %vm1096, %v1130, 0.0
      %1139 = vadd.xlane.f32.xlu0 %v1138
      %v1140 = vpop.xlane.xlu0 %1139
      %v1141 = vsel %vm1096, %v1131, 0.0
      %1142 = vadd.xlane.f32.xlu0 %v1141
      %v1143 = vpop.xlane.xlu0 %1142
      %v1144 = vsel %vm1096, %v1132, 0.0
      %1145 = vadd.xlane.f32.xlu0 %v1144
      %v1146 = vpop.xlane.xlu0 %1145
      %v1147 = vsel %vm1096, %v1133, 0.0
      %1148 = vadd.xlane.f32.xlu0 %v1147
      %v1149 = vpop.xlane.xlu0 %1148
      %v1150 = vsel %vm1096, %v1134, 0.0
      %1151 = vadd.xlane.f32.xlu0 %v1150
      %v1152 = vpop.xlane.xlu0 %1151
      %v1153 = vsel %vm1096, %v1135, 0.0
      %1154 = vadd.xlane.f32.xlu0 %v1153
      %v1155 = vpop.xlane.xlu0 %1154
      %v1156 = vsel %vm1096, %v1136, 0.0
      %1157 = vadd.xlane.f32.xlu0 %v1156
      %v1158 = vpop.xlane.xlu0 %1157
      %v1159 = vsel %vm1096, %v1137, 0.0
      %1160 = vadd.xlane.f32.xlu0 %v1159
      %v1161 = vpop.xlane.xlu0 %1160
      %v1162 = vmul.f32 %v1140, %v1121
      %v1163 = vmul.f32 %v1143, %v1121
      %v1164 = vmul.f32 %v1146, %v1121
      %v1165 = vmul.f32 %v1149, %v1121
      %v1166 = vmul.f32 %v1152, %v1121
      %v1167 = vmul.f32 %v1155, %v1121
      %v1168 = vmul.f32 %v1158, %v1121
      %v1169 = vmul.f32 %v1161, %v1121
      %v1170 = vmul.f32 %v1122, %v1122
      %v1171 = vmul.f32 %v1123, %v1123
      %v1172 = vmul.f32 %v1124, %v1124
      %v1173 = vmul.f32 %v1125, %v1125
      %v1174 = vmul.f32 %v1126, %v1126
      %v1175 = vmul.f32 %v1127, %v1127
      %v1176 = vmul.f32 %v1128, %v1128
      %v1177 = vmul.f32 %v1129, %v1129
      %v1178 = vsub.f32 %v1162, %v1170
      %v1179 = vsub.f32 %v1163, %v1171
      %v1180 = vsub.f32 %v1164, %v1172
      %v1181 = vsub.f32 %v1165, %v1173
      %v1182 = vsub.f32 %v1166, %v1174
      %v1183 = vsub.f32 %v1167, %v1175
      %v1184 = vsub.f32 %v1168, %v1176
      %v1185 = vsub.f32 %v1169, %v1177
      %v1186 = vmax.f32 %v1178, 0.0
      %v1187 = vmax.f32 %v1179, 0.0
      %v1188 = vmax.f32 %v1180, 0.0
      %v1189 = vmax.f32 %v1181, 0.0
      %v1190 = vmax.f32 %v1182, 0.0
      %v1191 = vmax.f32 %v1183, 0.0
      %v1192 = vmax.f32 %v1184, 0.0
      %v1193 = vmax.f32 %v1185, 0.0
      %v1194 = vsub.f32 %v1064, %v1122
      %v1195 = vsub.f32 %v1067, %v1123
      %v1196 = vsub.f32 %v1072, %v1124
      %v1197 = vsub.f32 %v1075, %v1125
      %v1198 = vsub.f32 %v1080, %v1126
      %v1199 = vsub.f32 %v1083, %v1127
      %v1200 = vsub.f32 %v1088, %v1128
      %v1201 = vsub.f32 %v1091, %v1129
      %v1202 = vadd.f32 %v1186, 1e-05
      %v1203 = vadd.f32 %v1187, 1e-05
      %v1204 = vadd.f32 %v1188, 1e-05
      %v1205 = vadd.f32 %v1189, 1e-05
      %v1206 = vadd.f32 %v1190, 1e-05
      %v1207 = vadd.f32 %v1191, 1e-05
      %v1208 = vadd.f32 %v1192, 1e-05
      %v1209 = vadd.f32 %v1193, 1e-05
      %v1210 = vrsqrt.pop %v1202
      %v1211 = vrsqrt.pop %v1203
      %v1212 = vrsqrt.pop %v1204
      %v1213 = vrsqrt.pop %v1205
      %v1214 = vrsqrt.pop %v1206
      %v1215 = vrsqrt.pop %v1207
      %v1216 = vrsqrt.pop %v1208
      %v1217 = vrsqrt.pop %v1209
      %v1218 = vmul.f32 %v1194, %v1210
      %v1219 = vmul.f32 %v1195, %v1211
      %v1220 = vmul.f32 %v1196, %v1212
      %v1221 = vmul.f32 %v1197, %v1213
      %v1222 = vmul.f32 %v1198, %v1214
      %v1223 = vmul.f32 %v1199, %v1215
      %v1224 = vmul.f32 %v1200, %v1216
      %v1225 = vmul.f32 %v1201, %v1217
      %v1227 = vlaneseq
      %v1228 = vshrl.u32 %v1227, 7
      %v1229 = vsub.s32 0, %v1228
      %v1230 = vrot.slane %v1094, %v1229
      %v1232 = vmul.f32 %v1218, %v1230
      %v1233 = vmul.f32 %v1219, %v1230
      %v1234 = vmul.f32 %v1220, %v1230
      %v1235 = vmul.f32 %v1221, %v1230
      %v1236 = vmul.f32 %v1222, %v1230
      %v1237 = vmul.f32 %v1223, %v1230
      %v1238 = vmul.f32 %v1224, %v1230
      %v1239 = vmul.f32 %v1225, %v1230
      %v1241 = vlaneseq
      %v1242 = vshrl.u32 %v1241, 7
      %v1243 = vsub.s32 0, %v1242
      %v1244 = vrot.slane %v1095, %v1243
      %v1246 = vadd.f32 %v1232, %v1244
      %v1247 = vadd.f32 %v1233, %v1244
      %v1248 = vadd.f32 %v1234, %v1244
      %v1249 = vadd.f32 %v1235, %v1244
      %v1250 = vadd.f32 %v1236, %v1244
      %v1251 = vadd.f32 %v1237, %v1244
      %v1252 = vadd.f32 %v1238, %v1244
      %v1253 = vadd.f32 %v1239, %v1244
      %v1254 = vmul.f32 %v1246, 0.5
      %v1255 = vmul.f32 %v1247, 0.5
      %v1256 = vmul.f32 %v1248, 0.5
      %v1257 = vmul.f32 %v1249, 0.5
      %v1258 = vmul.f32 %v1250, 0.5
      %v1259 = vmul.f32 %v1251, 0.5
      %v1260 = vmul.f32 %v1252, 0.5
      %v1261 = vmul.f32 %v1253, 0.5
      %v1262 = vmul.f32 %v1246, 0.044715
      %v1263 = vmul.f32 %v1247, 0.044715
      %v1264 = vmul.f32 %v1248, 0.044715
      %v1265 = vmul.f32 %v1249, 0.044715
      %v1266 = vmul.f32 %v1250, 0.044715
      %v1267 = vmul.f32 %v1251, 0.044715
      %v1268 = vmul.f32 %v1252, 0.044715
      %v1269 = vmul.f32 %v1253, 0.044715
      %v1270 = vmul.f32 %v1262, %v1246
      %v1271 = vmul.f32 %v1263, %v1247
      %v1272 = vmul.f32 %v1264, %v1248
      %v1273 = vmul.f32 %v1265, %v1249
      %v1274 = vmul.f32 %v1266, %v1250
      %v1275 = vmul.f32 %v1267, %v1251
      %v1276 = vmul.f32 %v1268, %v1252
      %v1277 = vmul.f32 %v1269, %v1253
      %v1278 = vmul.f32 %v1270, %v1246
      %v1279 = vmul.f32 %v1271, %v1247
      %v1280 = vmul.f32 %v1272, %v1248
      %v1281 = vmul.f32 %v1273, %v1249
      %v1282 = vmul.f32 %v1274, %v1250
      %v1283 = vmul.f32 %v1275, %v1251
      %v1284 = vmul.f32 %v1276, %v1252
      %v1285 = vmul.f32 %v1277, %v1253
      %v1286 = vadd.f32 %v1246, %v1278
      %v1287 = vadd.f32 %v1247, %v1279
      %v1288 = vadd.f32 %v1248, %v1280
      %v1289 = vadd.f32 %v1249, %v1281
      %v1290 = vadd.f32 %v1250, %v1282
      %v1291 = vadd.f32 %v1251, %v1283
      %v1292 = vadd.f32 %v1252, %v1284
      %v1293 = vadd.f32 %v1253, %v1285
      %v1294 = vmul.f32 %v1286, 0.7978846
      %v1295 = vmul.f32 %v1287, 0.7978846
      %v1296 = vmul.f32 %v1288, 0.7978846
      %v1297 = vmul.f32 %v1289, 0.7978846
      %v1298 = vmul.f32 %v1290, 0.7978846
      %v1299 = vmul.f32 %v1291, 0.7978846
      %v1300 = vmul.f32 %v1292, 0.7978846
      %v1301 = vmul.f32 %v1293, 0.7978846
      %v1302 = vtanh.pop %v1294
      %v1303 = vtanh.pop %v1295
      %v1304 = vtanh.pop %v1296
      %v1305 = vtanh.pop %v1297
      %v1306 = vtanh.pop %v1298
      %v1307 = vtanh.pop %v1299
      %v1308 = vtanh.pop %v1300
      %v1309 = vtanh.pop %v1301
      %v1310 = vadd.f32 %v1302, 1.0
      %v1311 = vadd.f32 %v1303, 1.0
      %v1312 = vadd.f32 %v1304, 1.0
      %v1313 = vadd.f32 %v1305, 1.0
      %v1314 = vadd.f32 %v1306, 1.0
      %v1315 = vadd.f32 %v1307, 1.0
      %v1316 = vadd.f32 %v1308, 1.0
      %v1317 = vadd.f32 %v1309, 1.0
      %v1318 = vmul.f32 %v1254, %v1310
      %v1319 = vmul.f32 %v1255, %v1311
      %v1320 = vmul.f32 %v1256, %v1312
      %v1321 = vmul.f32 %v1257, %v1313
      %v1322 = vmul.f32 %v1258, %v1314
      %v1323 = vmul.f32 %v1259, %v1315
      %v1324 = vmul.f32 %v1260, %v1316
      %v1325 = vmul.f32 %v1261, %v1317
      %v1326 = vpack.c.bf16 %v1319, %v1318
      %v1327 = vpack.c.bf16 %v1321, %v1320
      %v1328 = vpack.c.bf16 %v1323, %v1322
      %v1329 = vpack.c.bf16 %v1325, %v1324
      %v1330 = vld [vmem:[%s11] sm:$0xf]
      %v1331 = vld [vmem:[%s11 + $0x4] sm:$0xf]
      %v1332 = vld [vmem:[%s11 + $0x8] sm:$0xf]
      %v1333 = vld [vmem:[%s11 + $0xc] sm:$0xf]
      %v1334 = vld [vmem:[%s11 + $0x10] sm:$0xf]
      %v1335 = vld [vmem:[%s11 + $0x14] sm:$0xf]
      %v1336 = vld [vmem:[%s11 + $0x18] sm:$0xf]
      %v1337 = vld [vmem:[%s11 + $0x1c] sm:$0xf]
      %v1338 = vld [vmem:[%s12] sm:$0x1]
      %v1340 = vlaneseq
      %v1341 = vshrl.u32 %v1340, 7
      %v1342 = vsub.s32 0, %v1341
      %v1343 = vrot.slane %v1338, %v1342
      %v1353 = vunpack.c.l.b16 %v1330
      %v1354 = vunpack.c.l.b16 %v1331
      %v1355 = vunpack.c.l.b16 %v1332
      %v1356 = vunpack.c.l.b16 %v1333
      %v1357 = vunpack.c.l.b16 %v1334
      %v1358 = vunpack.c.l.b16 %v1335
      %v1359 = vunpack.c.l.b16 %v1336
      %v1360 = vunpack.c.l.b16 %v1337
      %v1361 = vpack.c.b16 %v1354, %v1353
      %v1362 = vpack.c.b16 %v1356, %v1355
      %v1363 = vpack.c.b16 %v1358, %v1357
      %v1364 = vpack.c.b16 %v1360, %v1359
      %v1370 = vsel %vm1096, %v1326, 0
      %v1373 = vsel %vm1096, %v1327, 0
      %v1376 = vsel %vm1096, %v1328, 0
      %v1379 = vsel %vm1096, %v1329, 0
      %1381 = vmatprep.subr.bf16.mxu0 0
      %1382 = vmatpush1.bf16.msra.mxu0 0
      %1383 = vmatprep.subr.bf16.mxu0 0
      %1384 = vmatpush1.bf16.msra.mxu0 0
      %1385 = vmatprep.subr.bf16.mxu0 0
      %1386 = vmatpush1.bf16.msra.mxu0 0
      %1387 = vmatprep.subr.bf16.mxu0 0
      %1388 = vmatpush1.bf16.msra.mxu0 0
      %1389 = vmatprep.subr.bf16.mxu0 0
      %1390 = vmatpush1.bf16.msra.mxu0 %v1364
      %1391 = vmatprep.subr.bf16.mxu0 0
      %1392 = vmatpush1.bf16.msra.mxu0 %v1363
      %1393 = vmatprep.subr.bf16.mxu0 0
      %1394 = vmatpush1.bf16.msra.mxu0 %v1362
      %1395 = vmatprep.subr.bf16.mxu0 0
      %1396 = vmatpush1.bf16.msra.mxu0 %v1361
      %1397 = vmatprep.subr.bf16.mxu0 0
      %1398 = vmatpush2.bf16.msra.mxu0 0
      %1399 = vmatprep.subr.bf16.mxu0 0
      %1400 = vmatpush2.bf16.msra.mxu0 0
      %1401 = vmatprep.subr.bf16.mxu0 0
      %1402 = vmatpush2.bf16.msra.mxu0 0
      %1403 = vmatprep.subr.bf16.mxu0 0
      %1404 = vmatpush2.bf16.msra.mxu0 0
      %1405 = vmatprep.subr.bf16.mxu0 0
      %1406 = vmatpush2.bf16.msra.mxu0 0
      %1407 = vmatprep.subr.bf16.mxu0 0
      %1408 = vmatpush2.bf16.msra.mxu0 0
      %1409 = vmatprep.subr.bf16.mxu0 0
      %1410 = vmatpush2.bf16.msra.mxu0 0
      %1411 = vmatprep.subr.bf16.mxu0 0
      %1412 = vmatpush2.bf16.msra.mxu0 0
      %1413 = vmatprep.mubr.bf16.mxu0 0
      %1414 = vmatmul.mubr.bf16.gmra.mxu0 %v1370
      %v1415 = vpop.f32.mrf.mxu0
      %v1416 = vadd.f32 %v1343, %v1415
      %v1417 = vpop.f32.mrf.mxu0
      %v1418 = vpop.f32.mrf.mxu0
      %v1419 = vadd.f32 %v1343, %v1418
      %v1420 = vpop.f32.mrf.mxu0
      %1421 = vmatprep.mubr.bf16.mxu0 0
      %1422 = vmatmul.mubr.bf16.gmra.mxu0 %v1373
      %v1423 = vpop.f32.mrf.mxu0
      %v1424 = vadd.f32 %v1343, %v1423
      %v1425 = vpop.f32.mrf.mxu0
      %v1426 = vpop.f32.mrf.mxu0
      %v1427 = vadd.f32 %v1343, %v1426
      %v1428 = vpop.f32.mrf.mxu0
      %1429 = vmatprep.mubr.bf16.mxu0 0
      %1430 = vmatmul.mubr.bf16.gmra.mxu0 %v1376
      %v1431 = vpop.f32.mrf.mxu0
      %v1432 = vadd.f32 %v1343, %v1431
      %v1433 = vpop.f32.mrf.mxu0
      %v1434 = vpop.f32.mrf.mxu0
      %v1435 = vadd.f32 %v1343, %v1434
      %v1436 = vpop.f32.mrf.mxu0
      %1437 = vmatprep.mubr.bf16.mxu0 0
      %1438 = vmatmul.mubr.bf16.gmra.mxu0 %v1379
      %v1439 = vpop.f32.mrf.mxu0
      %v1440 = vadd.f32 %v1343, %v1439
      %v1441 = vpop.f32.mrf.mxu0
      %v1442 = vpop.f32.mrf.mxu0
      %v1443 = vadd.f32 %v1343, %v1442
      %v1444 = vpop.f32.mrf.mxu0
      %1445 = vdwg.mxu0
      %v1446 = vmul.f32 %v1416, 0.5
      %v1447 = vmul.f32 %v1419, 0.5
      %v1448 = vmul.f32 %v1424, 0.5
      %v1449 = vmul.f32 %v1427, 0.5
      %v1450 = vmul.f32 %v1432, 0.5
      %v1451 = vmul.f32 %v1435, 0.5
      %v1452 = vmul.f32 %v1440, 0.5
      %v1453 = vmul.f32 %v1443, 0.5
      %v1454 = vmul.f32 %v1416, 0.044715
      %v1455 = vmul.f32 %v1419, 0.044715
      %v1456 = vmul.f32 %v1424, 0.044715
      %v1457 = vmul.f32 %v1427, 0.044715
      %v1458 = vmul.f32 %v1432, 0.044715
      %v1459 = vmul.f32 %v1435, 0.044715
      %v1460 = vmul.f32 %v1440, 0.044715
      %v1461 = vmul.f32 %v1443, 0.044715
      %v1462 = vmul.f32 %v1454, %v1416
      %v1463 = vmul.f32 %v1455, %v1419
      %v1464 = vmul.f32 %v1456, %v1424
      %v1465 = vmul.f32 %v1457, %v1427
      %v1466 = vmul.f32 %v1458, %v1432
      %v1467 = vmul.f32 %v1459, %v1435
      %v1468 = vmul.f32 %v1460, %v1440
      %v1469 = vmul.f32 %v1461, %v1443
      %v1470 = vmul.f32 %v1462, %v1416
      %v1471 = vmul.f32 %v1463, %v1419
      %v1472 = vmul.f32 %v1464, %v1424
      %v1473 = vmul.f32 %v1465, %v1427
      %v1474 = vmul.f32 %v1466, %v1432
      %v1475 = vmul.f32 %v1467, %v1435
      %v1476 = vmul.f32 %v1468, %v1440
      %v1477 = vmul.f32 %v1469, %v1443
      %v1478 = vadd.f32 %v1416, %v1470
      %v1479 = vadd.f32 %v1419, %v1471
      %v1480 = vadd.f32 %v1424, %v1472
      %v1481 = vadd.f32 %v1427, %v1473
      %v1482 = vadd.f32 %v1432, %v1474
      %v1483 = vadd.f32 %v1435, %v1475
      %v1484 = vadd.f32 %v1440, %v1476
      %v1485 = vadd.f32 %v1443, %v1477
      %v1486 = vmul.f32 %v1478, 0.7978846
      %v1487 = vmul.f32 %v1479, 0.7978846
      %v1488 = vmul.f32 %v1480, 0.7978846
      %v1489 = vmul.f32 %v1481, 0.7978846
      %v1490 = vmul.f32 %v1482, 0.7978846
      %v1491 = vmul.f32 %v1483, 0.7978846
      %v1492 = vmul.f32 %v1484, 0.7978846
      %v1493 = vmul.f32 %v1485, 0.7978846
      %v1494 = vtanh.pop %v1486
      %v1495 = vtanh.pop %v1487
      %v1496 = vtanh.pop %v1488
      %v1497 = vtanh.pop %v1489
      %v1498 = vtanh.pop %v1490
      %v1499 = vtanh.pop %v1491
      %v1500 = vtanh.pop %v1492
      %v1501 = vtanh.pop %v1493
      %v1502 = vadd.f32 %v1494, 1.0
      %v1503 = vadd.f32 %v1495, 1.0
      %v1504 = vadd.f32 %v1496, 1.0
      %v1505 = vadd.f32 %v1497, 1.0
      %v1506 = vadd.f32 %v1498, 1.0
      %v1507 = vadd.f32 %v1499, 1.0
      %v1508 = vadd.f32 %v1500, 1.0
      %v1509 = vadd.f32 %v1501, 1.0
      %v1510 = vmul.f32 %v1446, %v1502
      %v1511 = vmul.f32 %v1447, %v1503
      %v1512 = vmul.f32 %v1448, %v1504
      %v1513 = vmul.f32 %v1449, %v1505
      %v1514 = vmul.f32 %v1450, %v1506
      %v1515 = vmul.f32 %v1451, %v1507
      %v1516 = vmul.f32 %v1452, %v1508
      %v1517 = vmul.f32 %v1453, %v1509
      %v1518 = vld [vmem:[%s710] sm:$0xff]
      %v1520 = vsel %vm1096, %v1518, 0
      %1522 = vmatprep.subr.mxu0 0.0
      %1523 = vmatpush1.msra.mxu0 0.0
      %1524 = vmatprep.subr.mxu0 0.0
      %1525 = vmatpush1.msra.mxu0 0.0
      %1526 = vmatprep.subr.mxu0 0.0
      %1527 = vmatpush1.msra.mxu0 0.0
      %1528 = vmatprep.subr.mxu0 0.0
      %1529 = vmatpush1.msra.mxu0 0.0
      %1530 = vmatprep.subr.mxu0 0.0
      %1531 = vmatpush1.msra.mxu0 0.0
      %1532 = vmatprep.subr.mxu0 0.0
      %1533 = vmatpush1.msra.mxu0 0.0
      %1534 = vmatprep.subr.mxu0 0.0
      %1535 = vmatpush1.msra.mxu0 0.0
      %1536 = vmatprep.subr.mxu0 0.0
      %1537 = vmatpush1.msra.mxu0 0.0
      %1538 = vmatprep.subr.mxu0 0.0
      %1539 = vmatpush1.msra.mxu0 %v1517
      %1540 = vmatprep.subr.mxu0 0.0
      %1541 = vmatpush1.msra.mxu0 %v1516
      %1542 = vmatprep.subr.mxu0 0.0
      %1543 = vmatpush1.msra.mxu0 %v1515
      %1544 = vmatprep.subr.mxu0 0.0
      %1545 = vmatpush1.msra.mxu0 %v1514
      %1546 = vmatprep.subr.mxu0 0.0
      %1547 = vmatpush1.msra.mxu0 %v1513
      %1548 = vmatprep.subr.mxu0 0.0
      %1549 = vmatpush1.msra.mxu0 %v1512
      %1550 = vmatprep.subr.mxu0 0.0
      %1551 = vmatpush1.msra.mxu0 %v1511
      %1552 = vmatprep.subr.mxu0 0.0
      %1553 = vmatpush1.msra.mxu0 %v1510
      %1554 = vmatprep.subr.mxu0 0.0
      %1555 = vmatpush2.msra.mxu0 0.0
      %1556 = vmatprep.subr.mxu0 0.0
      %1557 = vmatpush2.msra.mxu0 0.0
      %1558 = vmatprep.subr.mxu0 0.0
      %1559 = vmatpush2.msra.mxu0 0.0
      %1560 = vmatprep.subr.mxu0 0.0
      %1561 = vmatpush2.msra.mxu0 0.0
      %1562 = vmatprep.subr.mxu0 0.0
      %1563 = vmatpush2.msra.mxu0 0.0
      %1564 = vmatprep.subr.mxu0 0.0
      %1565 = vmatpush2.msra.mxu0 0.0
      %1566 = vmatprep.subr.mxu0 0.0
      %1567 = vmatpush2.msra.mxu0 0.0
      %1568 = vmatprep.subr.mxu0 0.0
      %1569 = vmatpush2.msra.mxu0 0.0
      %1570 = vmatprep.subr.mxu0 0.0
      %1571 = vmatpush2.msra.mxu0 0.0
      %1572 = vmatprep.subr.mxu0 0.0
      %1573 = vmatpush2.msra.mxu0 0.0
      %1574 = vmatprep.subr.mxu0 0.0
      %1575 = vmatpush2.msra.mxu0 0.0
      %1576 = vmatprep.subr.mxu0 0.0
      %1577 = vmatpush2.msra.mxu0 0.0
      %1578 = vmatprep.subr.mxu0 0.0
      %1579 = vmatpush2.msra.mxu0 0.0
      %1580 = vmatprep.subr.mxu0 0.0
      %1581 = vmatpush2.msra.mxu0 0.0
      %1582 = vmatprep.subr.mxu0 0.0
      %1583 = vmatpush2.msra.mxu0 0.0
      %1584 = vmatprep.subr.mxu0 0.0
      %1585 = vmatpush2.msra.mxu0 0.0
      %1586 = vmatprep.mubr.f32.mxu0 0.0
      %1587 = vmatmul.mubr.f32.gmra.mxu0 %v1520
      %v1588 = vpop.f32.mrf.mxu0
      %v1589 = vadd.f32 0.0, %v1588
      %v1590 = vpop.f32.mrf.mxu0
      %1591 = vdwg.mxu0
      %v1592 = vpack.c.bf16 %v952, %v952
      %v1593 = vld [vmem:[%s13] sm:$0xf]
      %v1594 = vld [vmem:[%s13 + $0x4] sm:$0xf]
      %v1595 = vld [vmem:[%s13 + $0x8] sm:$0xf]
      %v1596 = vld [vmem:[%s13 + $0xc] sm:$0xf]
      %v1597 = vpack.c.bf16 %v1589, %v1589
      %v1598 = vld [vmem:[%s14] sm:$0xf]
      %v1599 = vld [vmem:[%s14 + $0x4] sm:$0xf]
      %v1600 = vld [vmem:[%s14 + $0x8] sm:$0xf]
      %v1601 = vld [vmem:[%s14 + $0xc] sm:$0xf]
      %v1606 = vunpack.c.l.b16 %v1598
      %v1607 = vunpack.c.l.b16 %v1599
      %v1608 = vunpack.c.l.b16 %v1600
      %v1609 = vunpack.c.l.b16 %v1601
      %v1610 = vpack.c.b16 %v1607, %v1606
      %v1611 = vpack.c.b16 %v1609, %v1608
      %v1615 = vsel %vm754, %v1597, 0
      %1617 = vmatprep.subr.bf16.mxu0 0
      %1618 = vmatpush1.bf16.msra.mxu0 0
      %1619 = vmatprep.subr.bf16.mxu0 0
      %1620 = vmatpush1.bf16.msra.mxu0 0
      %1621 = vmatprep.subr.bf16.mxu0 0
      %1622 = vmatpush1.bf16.msra.mxu0 0
      %1623 = vmatprep.subr.bf16.mxu0 0
      %1624 = vmatpush1.bf16.msra.mxu0 0
      %1625 = vmatprep.subr.bf16.mxu0 0
      %1626 = vmatpush1.bf16.msra.mxu0 0
      %1627 = vmatprep.subr.bf16.mxu0 0
      %1628 = vmatpush1.bf16.msra.mxu0 0
      %1629 = vmatprep.subr.bf16.mxu0 0
      %1630 = vmatpush1.bf16.msra.mxu0 %v1611
      %1631 = vmatprep.subr.bf16.mxu0 0
      %1632 = vmatpush1.bf16.msra.mxu0 %v1610
      %1633 = vmatprep.subr.bf16.mxu0 0
      %1634 = vmatpush2.bf16.msra.mxu0 0
      %1635 = vmatprep.subr.bf16.mxu0 0
      %1636 = vmatpush2.bf16.msra.mxu0 0
      %1637 = vmatprep.subr.bf16.mxu0 0
      %1638 = vmatpush2.bf16.msra.mxu0 0
      %1639 = vmatprep.subr.bf16.mxu0 0
      %1640 = vmatpush2.bf16.msra.mxu0 0
      %1641 = vmatprep.subr.bf16.mxu0 0
      %1642 = vmatpush2.bf16.msra.mxu0 0
      %1643 = vmatprep.subr.bf16.mxu0 0
      %1644 = vmatpush2.bf16.msra.mxu0 0
      %1645 = vmatprep.subr.bf16.mxu0 0
      %1646 = vmatpush2.bf16.msra.mxu0 0
      %1647 = vmatprep.subr.bf16.mxu0 0
      %1648 = vmatpush2.bf16.msra.mxu0 0
      %1649 = vmatprep.mubr.bf16.mxu0 0
      %1650 = vmatmul.mubr.bf16.gmra.mxu0 %v1615
      %v1651 = vpop.f32.mrf.mxu0
      %v1652 = vadd.f32 0.0, %v1651
      %v1653 = vpop.f32.mrf.mxu0
      %v1654 = vpop.f32.mrf.mxu0
      %v1655 = vpop.f32.mrf.mxu0
      %1656 = vdwg.mxu0
      %v1661 = vunpack.c.l.b16 %v1593
      %v1662 = vunpack.c.l.b16 %v1594
      %v1663 = vunpack.c.l.b16 %v1595
      %v1664 = vunpack.c.l.b16 %v1596
      %v1665 = vpack.c.b16 %v1662, %v1661
      %v1666 = vpack.c.b16 %v1664, %v1663
      %v1670 = vsel %vm754, %v1592, 0
      %1672 = vmatprep.subr.bf16.mxu0 0
      %1673 = vmatpush1.bf16.msra.mxu0 0
      %1674 = vmatprep.subr.bf16.mxu0 0
      %1675 = vmatpush1.bf16.msra.mxu0 0
      %1676 = vmatprep.subr.bf16.mxu0 0
      %1677 = vmatpush1.bf16.msra.mxu0 0
      %1678 = vmatprep.subr.bf16.mxu0 0
      %1679 = vmatpush1.bf16.msra.mxu0 0
      %1680 = vmatprep.subr.bf16.mxu0 0
      %1681 = vmatpush1.bf16.msra.mxu0 0
      %1682 = vmatprep.subr.bf16.mxu0 0
      %1683 = vmatpush1.bf16.msra.mxu0 0
      %1684 = vmatprep.subr.bf16.mxu0 0
      %1685 = vmatpush1.bf16.msra.mxu0 %v1666
      %1686 = vmatprep.subr.bf16.mxu0 0
      %1687 = vmatpush1.bf16.msra.mxu0 %v1665
      %1688 = vmatprep.subr.bf16.mxu0 0
      %1689 = vmatpush2.bf16.msra.mxu0 0
      %1690 = vmatprep.subr.bf16.mxu0 0
      %1691 = vmatpush2.bf16.msra.mxu0 0
      %1692 = vmatprep.subr.bf16.mxu0 0
      %1693 = vmatpush2.bf16.msra.mxu0 0
      %1694 = vmatprep.subr.bf16.mxu0 0
      %1695 = vmatpush2.bf16.msra.mxu0 0
      %1696 = vmatprep.subr.bf16.mxu0 0
      %1697 = vmatpush2.bf16.msra.mxu0 0
      %1698 = vmatprep.subr.bf16.mxu0 0
      %1699 = vmatpush2.bf16.msra.mxu0 0
      %1700 = vmatprep.subr.bf16.mxu0 0
      %1701 = vmatpush2.bf16.msra.mxu0 0
      %1702 = vmatprep.subr.bf16.mxu0 0
      %1703 = vmatpush2.bf16.msra.mxu0 0
      %1704 = vmatprep.mubr.bf16.mxu0 0
      %1705 = vmatmul.mubr.bf16.gmra.mxu0 %v1670
      %v1706 = vpop.f32.mrf.mxu0
      %v1707 = vadd.f32 %v1652, %v1706
      %v1708 = vpop.f32.mrf.mxu0
      %v1709 = vpop.f32.mrf.mxu0
      %v1710 = vpop.f32.mrf.mxu0
      %1711 = vdwg.mxu0
      %v1712 = vpack.c.bf16 %v716, %v716
      %v1713 = vld [vmem:[%s15] sm:$0xf]
      %v1714 = vld [vmem:[%s15 + $0x4] sm:$0xf]
      %v1715 = vld [vmem:[%s15 + $0x8] sm:$0xf]
      %v1716 = vld [vmem:[%s15 + $0xc] sm:$0xf]
      %v1721 = vunpack.c.l.b16 %v1713
      %v1722 = vunpack.c.l.b16 %v1714
      %v1723 = vunpack.c.l.b16 %v1715
      %v1724 = vunpack.c.l.b16 %v1716
      %v1725 = vpack.c.b16 %v1722, %v1721
      %v1726 = vpack.c.b16 %v1724, %v1723
      %v1730 = vsel %vm754, %v1712, 0
      %1732 = vmatprep.subr.bf16.mxu0 0
      %1733 = vmatpush1.bf16.msra.mxu0 0
      %1734 = vmatprep.subr.bf16.mxu0 0
      %1735 = vmatpush1.bf16.msra.mxu0 0
      %1736 = vmatprep.subr.bf16.mxu0 0
      %1737 = vmatpush1.bf16.msra.mxu0 0
      %1738 = vmatprep.subr.bf16.mxu0 0
      %1739 = vmatpush1.bf16.msra.mxu0 0
      %1740 = vmatprep.subr.bf16.mxu0 0
      %1741 = vmatpush1.bf16.msra.mxu0 0
      %1742 = vmatprep.subr.bf16.mxu0 0
      %1743 = vmatpush1.bf16.msra.mxu0 0
      %1744 = vmatprep.subr.bf16.mxu0 0
      %1745 = vmatpush1.bf16.msra.mxu0 %v1726
      %1746 = vmatprep.subr.bf16.mxu0 0
      %1747 = vmatpush1.bf16.msra.mxu0 %v1725
      %1748 = vmatprep.subr.bf16.mxu0 0
      %1749 = vmatpush2.bf16.msra.mxu0 0
      %1750 = vmatprep.subr.bf16.mxu0 0
      %1751 = vmatpush2.bf16.msra.mxu0 0
      %1752 = vmatprep.subr.bf16.mxu0 0
      %1753 = vmatpush2.bf16.msra.mxu0 0
      %1754 = vmatprep.subr.bf16.mxu0 0
      %1755 = vmatpush2.bf16.msra.mxu0 0
      %1756 = vmatprep.subr.bf16.mxu0 0
      %1757 = vmatpush2.bf16.msra.mxu0 0
      %1758 = vmatprep.subr.bf16.mxu0 0
      %1759 = vmatpush2.bf16.msra.mxu0 0
      %1760 = vmatprep.subr.bf16.mxu0 0
      %1761 = vmatpush2.bf16.msra.mxu0 0
      %1762 = vmatprep.subr.bf16.mxu0 0
      %1763 = vmatpush2.bf16.msra.mxu0 0
      %1764 = vmatprep.mubr.bf16.mxu0 0
      %1765 = vmatmul.mubr.bf16.gmra.mxu0 %v1730
      %v1766 = vpop.f32.mrf.mxu0
      %v1767 = vadd.f32 0.0, %v1766
      %v1768 = vpop.f32.mrf.mxu0
      %v1769 = vpop.f32.mrf.mxu0
      %v1770 = vpop.f32.mrf.mxu0
      %1771 = vdwg.mxu0
      %v1772 = vadd.f32 %v1707, %v1767
      %v1773 = vld [vmem:[%s16] sm:$0x1]
      %v1775 = vlaneseq
      %v1776 = vshrl.u32 %v1775, 7
      %v1777 = vsub.s32 0, %v1776
      %v1778 = vrot.slane %v1773, %v1777
      %v1780 = vadd.f32 %v1772, %v1778
      %v1781 = vld [vmem:[%s17] sm:$0x1]
      %v1782 = vld [vmem:[%s18] sm:$0x1]
      %v1783 = vsel %vm754, %v1780, 0.0
      %1784 = vadd.xlane.f32.xlu0 %v1783
      %v1785 = vpop.xlane.xlu0 %1784
      %v1786 = vrcp.pop 32.0
      %v1787 = vmul.f32 %v1785, %v1786
      %v1788 = vmul.f32 %v1780, %v1780
      %v1789 = vsel %vm754, %v1788, 0.0
      %1790 = vadd.xlane.f32.xlu0 %v1789
      %v1791 = vpop.xlane.xlu0 %1790
      %v1792 = vmul.f32 %v1791, %v1786
      %v1793 = vmul.f32 %v1787, %v1787
      %v1794 = vsub.f32 %v1792, %v1793
      %v1795 = vmax.f32 %v1794, 0.0
      %v1796 = vsub.f32 %v1780, %v1787
      %v1797 = vadd.f32 %v1795, 1e-05
      %v1798 = vrsqrt.pop %v1797
      %v1799 = vmul.f32 %v1796, %v1798
      %v1801 = vlaneseq
      %v1802 = vshrl.u32 %v1801, 7
      %v1803 = vsub.s32 0, %v1802
      %v1804 = vrot.slane %v1781, %v1803
      %v1806 = vmul.f32 %v1799, %v1804
      %v1808 = vlaneseq
      %v1809 = vshrl.u32 %v1808, 7
      %v1810 = vsub.s32 0, %v1809
      %v1811 = vrot.slane %v1782, %v1810
      %v1813 = vadd.f32 %v1806, %v1811
      %v1814 = vmul.f32 %v1813, 0.5
      %v1815 = vmul.f32 %v1813, 0.044715
      %v1816 = vmul.f32 %v1815, %v1813
      %v1817 = vmul.f32 %v1816, %v1813
      %v1818 = vadd.f32 %v1813, %v1817
      %v1819 = vmul.f32 %v1818, 0.7978846
      %v1820 = vtanh.pop %v1819
      %v1821 = vadd.f32 %v1820, 1.0
      %v1822 = vmul.f32 %v1814, %v1821
      %v1823 = vld [vmem:[%s19] sm:$0x1]
      %v1825 = vlaneseq
      %v1826 = vshrl.u32 %v1825, 7
      %v1827 = vsub.s32 0, %v1826
      %v1828 = vrot.slane %v1823, %v1827
      %v1830 = vmul.f32 %v1822, %v1828
      %v1831 = vsel %vm754, %v1830, 0.0
      %1832 = vadd.xlane.f32.xlu0 %v1831
      %v1833 = vpop.xlane.xlu0 %1832
      %v1834 = vld [vmem:[#allocation2] sm:$0x1]
      %v1836 = vlaneseq
      %v1837 = vshrl.u32 %v1836, 7
      %v1838 = vsub.s32 0, %v1837
      %v1839 = vrot.slane %v1834, %v1838
      %v1841 = vadd.f32 %v1833, %v1839
      %1843 = vset.pattern.permute.xlu0 0
      %1844 = vperm.xlu0 %1843, %v1841
      %v1845 = vpop.permute.xlu0 %1844
      %1847 = vst [vmem:[%s714] sm:$0xff] %v1845
      %p1848 = scmp.lt.s32.totalorder %s34, 1
      %s1849 = scalar_select %p1848, %s34, 1
      %s1850 = smul.addr %s1849, 8
      %s1851 = scalar_lea.vmem %s21, %s1850
      // Predicated region
      $region105: #{lm_relation_net_forward.1} parent=103 // pred_check
        %p1852 = pneg %p513
      $region106: #{lm_relation_net_forward.1} parent=103 // pred_check_branch
        %1854 = sbr.rel (%p1852) target = $region108
      $region107: #{lm_relation_net_forward.1} parent=103 // pred_region
        _
      $region108: #{lm_relation_net_forward.1} parent=103 // pred_fallthru
        _
    $region104: #{lm_relation_net_forward.1} parent=5 // pred_fallthru
      _
    %p1855 = scmp.le.s32.totalorder 2, %s29
    // Predicated region
    $region109: #{lm_relation_net_forward.1} parent=5 // pred_check
      %p1856 = pneg %p1855
    $region110: #{lm_relation_net_forward.1} parent=5 // pred_check_branch
      %1858 = sbr.rel (%p1856) target = $region112
    $region111: #{lm_relation_net_forward.1} parent=5 // pred_region
      %s1859 = ssub.s32 %s29, 2
      // Predicated region
      $region113: #{lm_relation_net_forward.1} parent=111 // pred_check
        %p1860 = pneg %p519
      $region114: #{lm_relation_net_forward.1} parent=111 // pred_check_branch
        %1862 = sbr.rel (%p1860) target = $region116
      $region115: #{lm_relation_net_forward.1} parent=111 // pred_region
        %p1863 = scmp.lt.s32.totalorder %s35, 1
        %s1864 = scalar_select %p1863, %s35, 1
        %s1865 = smul.addr %s1864, 8
        %s1866 = scalar_lea.vmem %s21, %s1865
      $region116: #{lm_relation_net_forward.1} parent=111 // pred_fallthru
        _
    $region112: #{lm_relation_net_forward.1} parent=5 // pred_fallthru
      _
  $region6: #{lm_relation_net_forward.1} parent=0 // loop_footer
    %s33 = sadd.s32 1, %s29
  $region7: #{lm_relation_net_forward.1} parent=0 // loop_footer_branch
    %28 = sbr.rel target = $region3
  $region8: #{lm_relation_net_forward.1} parent=0 // loop_exit
    _

</llo_original>
